<compile_context>
chip_gen: v5e
topology: v5e:2x2
jax: 0.10.0
libtpu: 0.0.40
codegen_flags: <defaults>
</compile_context>

<pallas_src>
import numpy as np
import jax
import jax.numpy as jnp
from jax import lax
from jax.experimental import pallas as pl
from jax.experimental.pallas import tpu as pltpu

EPS = 1e-5      # BatchNorm2d default eps
SLOPE = 0.02    # LeakyReLU negative slope


# --------------------------- SpectralNorm glue -------------------------------

def l2normalize(v, eps=1e-12):
    return v / (jnp.linalg.norm(v) + eps)


def spectral_norm_weight(w_bar, u, v, power_iterations=1):
    """Reproduces SpectralNorm._update_u_v: weight = w_bar / sigma."""
    oc = w_bar.shape[0]
    w_mat = w_bar.reshape(oc, -1)
    for _ in range(power_iterations):
        v = l2normalize(w_mat.T @ u)
        u = l2normalize(w_mat @ v)
    sigma = jnp.dot(u, w_mat @ v)
    return w_bar / sigma


# ------------------------------ helpers ---------------------------------------

def _full_spec(shape):
    shape = tuple(shape)
    return pl.BlockSpec(shape, lambda i: (0,) * len(shape))


def _phase_major_bookkeeping(oh1, ow1, n):
    """Row bookkeeping for the layer-1 output: rows grouped by parity phase
    (p, q) = (h1 & 1, w1 & 1); within a phase ordered (i, j, n) with
    h1 = 2i + p, w1 = 2j + q.  Makes layer-2's stride-2 taps contiguous."""
    hp = ((oh1 + 1) // 2, oh1 // 2)
    wq = ((ow1 + 1) // 2, ow1 // 2)
    base, off = {}, 0
    for p in range(2):
        for q in range(2):
            base[(p, q)] = off
            off += hp[p] * wq[q] * n
    return hp, wq, base


def _p1_gather_indices(H, W, N, oh1, ow1, hp, wq):
    """(m1, 9) int32 row indices into x rows ordered (h, w, n): the layer-1
    im2col patch rows in phase-major order -- one gather op in the wrapper."""
    blocks = []
    kh = np.arange(3).reshape(1, 1, 1, 3, 1)
    kw = np.arange(3).reshape(1, 1, 1, 1, 3)
    for p in range(2):
        for q in range(2):
            i = np.arange(hp[p]).reshape(-1, 1, 1, 1, 1)
            j = np.arange(wq[q]).reshape(1, -1, 1, 1, 1)
            n = np.arange(N).reshape(1, 1, -1, 1, 1)
            h = 2 * (2 * i + p) + kh            # input h = 2*h1 + kh
            w = 2 * (2 * j + q) + kw            # input w = 2*w1 + kw
            idx = (h * W + w) * N + n           # rows of x ordered (h, w, n)
            blocks.append(idx.reshape(-1, 9))
    return np.concatenate(blocks, axis=0).astype(np.int32)


# ------------------------------ fused forward ---------------------------------

def _generator_z_forward_impl(x_nchw, params):
    N, ch, H, W = x_nchw.shape
    c1 = params["c1"]["w_bar"].shape[0]
    c2 = params["c2"]["w_bar"].shape[0]
    c3 = params["c3"]["w_bar"].shape[0]
    c4 = params["c4"]["w_bar"].shape[0]
    c5 = params["c5"]["w"].shape[0]

    # spatial sizes: 3x3 VALID convs; layers 1-2 stride 2, layers 3-5 stride 1
    oh1, ow1 = (H - 3) // 2 + 1, (W - 3) // 2 + 1
    oh2, ow2 = (oh1 - 3) // 2 + 1, (ow1 - 3) // 2 + 1
    oh3, ow3 = oh2 - 2, ow2 - 2
    oh4, ow4 = oh3 - 2, ow3 - 2
    oh5, ow5 = oh4 - 2, ow4 - 2
    m1 = oh1 * ow1 * N
    m2 = oh2 * ow2 * N
    m3 = oh3 * ow3 * N
    m4 = oh4 * ow4 * N
    m5 = oh5 * ow5 * N

    hp, wq, base = _phase_major_bookkeeping(oh1, ow1, N)

    # ---------------- parameter prep (plain JAX glue, under jit) -------------
    def cat_taps(w_pt):   # (OC, IC, 3, 3) -> (9*IC, OC), row order (kh, kw, ic)
        oc, ic = w_pt.shape[0], w_pt.shape[1]
        return jnp.transpose(w_pt, (2, 3, 1, 0)).reshape(9 * ic, oc)

    def sn(p):
        return spectral_norm_weight(p["w_bar"], p["u"], p["v"])

    w1 = cat_taps(sn(params["c1"])).astype(jnp.float32)
    w2 = cat_taps(sn(params["c2"])).astype(jnp.float32)
    w3 = cat_taps(sn(params["c3"])).astype(jnp.float32)
    w4 = cat_taps(sn(params["c4"])).astype(jnp.float32)
    w5 = cat_taps(params["c5"]["w"]).astype(jnp.float32)

    cmax = max(c1, c2, c3, c4, c5)

    def padv(v):
        return jnp.pad(v.astype(jnp.float32), (0, cmax - v.shape[0]))

    # rows: g1,t1,g2,t2,g3,t3,g4,t4,b5.  NOTE: conv biases of layers 1-4 are
    # intentionally dropped -- they cancel exactly under the training-mode
    # BatchNorm mean subtraction.
    aux_host = jnp.stack(
        [padv(params["bn1"]["gamma"]), padv(params["bn1"]["beta"]),
         padv(params["bn2"]["gamma"]), padv(params["bn2"]["beta"]),
         padv(params["bn3"]["gamma"]), padv(params["bn3"]["beta"]),
         padv(params["bn4"]["gamma"]), padv(params["bn4"]["beta"]),
         padv(params["c5"]["b"])], axis=0)                       # (9, cmax)

    # ---- layer-1 im2col patch: ONE gather with a constant index table -------
    x_rows = jnp.transpose(x_nchw, (2, 3, 0, 1)).reshape(H * W * N, ch)
    x_rows = x_rows.astype(jnp.float32)
    idx = _p1_gather_indices(H, W, N, oh1, ow1, hp, wq)   # trace-time constant
    p1 = x_rows[idx].reshape(m1, 9 * ch)                  # (m1, 9*ch)

    # ------------------------------ the kernel --------------------------------
    def kernel(p1_ref, w1_ref, w2_ref, w3_ref, w4_ref, w5_ref, aux_ref,
               o_ref, a1_ref, a2_ref, a3_ref, a4_ref,
               p2_ref, p3_ref, p4_ref, p5_ref):
        aux = aux_ref[...]

        def bn_lrelu(y, count, gamma, beta):
            # training-mode BN folded to scale/shift (one-pass stats, all f32)
            inv = 1.0 / count
            s = jnp.sum(y, axis=0, keepdims=True)
            ss = jnp.sum(y * y, axis=0, keepdims=True)
            mean = s * inv
            var = jnp.maximum(ss * inv - mean * mean, 0.0)
            scale = gamma * lax.rsqrt(var + EPS)
            shift = beta - mean * scale
            z = y * scale + shift
            return jnp.maximum(z, SLOPE * z)               # LeakyReLU(0.02)

        # ----- layer 1: single MXU matmul over the prebuilt patch ------------
        y1 = jnp.dot(p1_ref[...], w1_ref[...],
                     preferred_element_type=jnp.float32)
        a1_ref[...] = bn_lrelu(y1, float(m1), aux[0:1, :c1], aux[1:2, :c1])

        # ----- layer 2: stride-2 im2col gather (phase-major rows) + matmul ---
        blk2 = ow2 * N
        for oh in range(oh2):
            for kh in range(3):
                p, dh = kh & 1, kh >> 1
                for kw in range(3):
                    q, dw = kw & 1, kw >> 1
                    lo = base[(p, q)] + ((oh + dh) * wq[q] + dw) * N
                    k = kh * 3 + kw
                    p2_ref[oh * blk2:(oh + 1) * blk2,
                           k * c1:(k + 1) * c1] = a1_ref[lo:lo + blk2, :]
        y2 = jnp.dot(p2_ref[...], w2_ref[...],
                     preferred_element_type=jnp.float32)
        a2_ref[...] = bn_lrelu(y2, float(m2), aux[2:3, :c2], aux[3:4, :c2])

        # ----- stride-1 im2col gather: 1 span load + 3 col stores per (oh,kh)
        def gather_s1(src_ref, dst_ref, oh_out, ow_in, cin):
            blk = (ow_in - 2) * N
            for oh in range(oh_out):
                for kh in range(3):
                    span = src_ref[(oh + kh) * ow_in * N:
                                   (oh + kh + 1) * ow_in * N, :]
                    for kw in range(3):
                        k = kh * 3 + kw
                        dst_ref[oh * blk:(oh + 1) * blk,
                                k * cin:(k + 1) * cin] = \
                            span[kw * N:kw * N + blk, :]

        # ----- layers 3-4: gather + one matmul + BN + LeakyReLU ---------------
        gather_s1(a2_ref, p3_ref, oh3, ow2, c2)
        y3 = jnp.dot(p3_ref[...], w3_ref[...],
                     preferred_element_type=jnp.float32)
        a3_ref[...] = bn_lrelu(y3, float(m3), aux[4:5, :c3], aux[5:6, :c3])

        gather_s1(a3_ref, p4_ref, oh4, ow3, c3)
        y4 = jnp.dot(p4_ref[...], w4_ref[...],
                     preferred_element_type=jnp.float32)
        a4_ref[...] = bn_lrelu(y4, float(m4), aux[6:7, :c4], aux[7:8, :c4])

        # ----- layer 5: gather + matmul + bias (no BN / activation) -----------
        gather_s1(a4_ref, p5_ref, oh5, ow4, c4)
        y5 = jnp.dot(p5_ref[...], w5_ref[...],
                     preferred_element_type=jnp.float32)
        o_ref[...] = y5 + aux[8:9, :c5]

    operands = (p1, w1, w2, w3, w4, w5, aux_host)

    out2d = pl.pallas_call(
        kernel,
        out_shape=jax.ShapeDtypeStruct((m5, c5), jnp.float32),
        grid=(1,),
        in_specs=[_full_spec(op.shape) for op in operands],
        out_specs=_full_spec((m5, c5)),
        scratch_shapes=[
            pltpu.VMEM((m1, c1), jnp.float32),       # layer-1 act (phase-major)
            pltpu.VMEM((m2, c2), jnp.float32),       # layer-2 act
            pltpu.VMEM((m3, c3), jnp.float32),       # layer-3 act
            pltpu.VMEM((m4, c4), jnp.float32),       # layer-4 act
            pltpu.VMEM((m2, 9 * c1), jnp.float32),   # layer-2 im2col patch
            pltpu.VMEM((m3, 9 * c2), jnp.float32),   # layer-3 im2col patch
            pltpu.VMEM((m4, 9 * c3), jnp.float32),   # layer-4 im2col patch
            pltpu.VMEM((m5, 9 * c4), jnp.float32),   # layer-5 im2col patch
        ],
        compiler_params=pltpu.CompilerParams(
            dimension_semantics=("arbitrary",)),
    )(*operands)

    out = out2d.reshape(oh5, ow5, N, c5)        # rows were ordered (h5, w5, n)
    return jnp.transpose(out, (2, 3, 0, 1))     # -> NCHW


generator_z_forward = jax.jit(_generator_z_forward_impl)


# ------------------------------ parameters -----------------------------------

def make_params(key, zd=32, ch=1):
    chans = [ch, zd // 8, zd // 4, zd // 2, zd, zd * 2]
    params = {}
    keys = jax.random.split(key, 40)
    ki = 0

    # c1..c4 : spectral-normed convs + BN params (non-trivial gamma/beta so the
    # affine path of the kernel is actually exercised)
    for idx in range(1, 5):
        ic, oc = chans[idx - 1], chans[idx]
        w_bar = 0.1 * jax.random.normal(keys[ki], (oc, ic, 3, 3), jnp.float32); ki += 1
        b = 0.05 * jax.random.normal(keys[ki], (oc,), jnp.float32); ki += 1
        u = l2normalize(jax.random.normal(keys[ki], (oc,), jnp.float32)); ki += 1
        v = l2normalize(jax.random.normal(keys[ki], (ic * 9,), jnp.float32)); ki += 1
        params[f"c{idx}"] = dict(w_bar=w_bar, b=b, u=u, v=v)
        gamma = 1.0 + 0.1 * jax.random.normal(keys[ki], (oc,), jnp.float32); ki += 1
        beta = 0.1 * jax.random.normal(keys[ki], (oc,), jnp.float32); ki += 1
        params[f"bn{idx}"] = dict(gamma=gamma, beta=beta)

    # c5 : plain Conv2d(zd, zd*2, 3, 1) (reassigned in __init__, no spectral norm)
    ic, oc = chans[4], chans[5]
    w5 = 0.1 * jax.random.normal(keys[ki], (oc, ic, 3, 3), jnp.float32); ki += 1
    b5 = 0.05 * jax.random.normal(keys[ki], (oc,), jnp.float32); ki += 1
    params["c5"] = dict(w=w5, b=b5)
    return params


# ------------------------------ pure-JAX reference ----------------------------

def _ref_forward(x_nchw, params):
    x = jnp.transpose(x_nchw, (0, 2, 3, 1))
    strides = {1: 2, 2: 2, 3: 1, 4: 1}

    def conv(x, w_pt, b, s):
        w_hwio = jnp.transpose(w_pt, (2, 3, 1, 0))
        y = lax.conv_general_dilated(x, w_hwio, (s, s), "VALID",
                                     dimension_numbers=("NHWC", "HWIO", "NHWC"))
        return y + b

    for idx in range(1, 5):
        p = params[f"c{idx}"]
        w = spectral_norm_weight(p["w_bar"], p["u"], p["v"])
        bn = params[f"bn{idx}"]
        y = conv(x, w, p["b"], strides[idx])
        mean = jnp.mean(y, axis=(0, 1, 2), keepdims=True)
        var = jnp.mean(jnp.square(y - mean), axis=(0, 1, 2), keepdims=True)
        y = (y - mean) * lax.rsqrt(var + EPS)
        y = y * bn["gamma"] + bn["beta"]
        x = jnp.where(y >= 0, y, SLOPE * y)
    p = params["c5"]
    x = conv(x, p["w"], p["b"], 1)
    return jnp.transpose(x, (0, 3, 1, 2))


# ----------------------------------- main --------------------------------------

if __name__ == "__main__":
    zd, ch = 32, 1            # small zd (module default is 128)
    N, H, W = 2, 35, 35       # spatial: 35 -> 17 -> 8 -> 6 -> 4 -> 2

    key = jax.random.PRNGKey(0)
    kx, kp = jax.random.split(key)
    x = jax.random.normal(kx, (N, ch, H, W), jnp.float32)   # NCHW, like PyTorch
    params = make_params(kp, zd=zd, ch=ch)

    out = jax.block_until_ready(generator_z_forward(x, params))
    ref = jax.block_until_ready(_ref_forward(x, params))

    assert out.shape == (N, 2 * zd, 2, 2), out.shape
    max_err = float(jnp.max(jnp.abs(out - ref)))
    assert jnp.allclose(out, ref, atol=3e-4, rtol=3e-4), max_err
    print("KERNEL_OK")
</pallas_src>

<mosaic_0001>
module attributes {stable_mosaic.version = 11 : i64} {
  func.func @kernel(%arg0: i32, %arg1: memref<578x9xf32, #tpu.memory_space<vmem>>, %arg2: memref<9x4xf32, #tpu.memory_space<vmem>>, %arg3: memref<36x8xf32, #tpu.memory_space<vmem>>, %arg4: memref<72x16xf32, #tpu.memory_space<vmem>>, %arg5: memref<144x32xf32, #tpu.memory_space<vmem>>, %arg6: memref<288x64xf32, #tpu.memory_space<vmem>>, %arg7: memref<9x64xf32, #tpu.memory_space<vmem>>, %arg8: memref<8x64xf32, #tpu.memory_space<vmem>>, %arg9: memref<578x4xf32, #tpu.memory_space<vmem>>, %arg10: memref<128x8xf32, #tpu.memory_space<vmem>>, %arg11: memref<72x16xf32, #tpu.memory_space<vmem>>, %arg12: memref<32x32xf32, #tpu.memory_space<vmem>>, %arg13: memref<128x36xf32, #tpu.memory_space<vmem>>, %arg14: memref<72x72xf32, #tpu.memory_space<vmem>>, %arg15: memref<32x144xf32, #tpu.memory_space<vmem>>, %arg16: memref<8x288xf32, #tpu.memory_space<vmem>>) attributes {dimension_semantics = [#tpu.dimension_semantics<arbitrary>], iteration_bounds = array<i64: 1>, scalar_prefetch = 0 : i64, scratch_operands = 8 : i64, tpu.core_type = #tpu.core_type<tc>, window_params = [{pipeline_mode = #tpu.pipeline_mode<synchronous>, transform_indices = @transform_0, window_bounds = array<i64: 578, 9>}, {pipeline_mode = #tpu.pipeline_mode<synchronous>, transform_indices = @transform_1, window_bounds = array<i64: 9, 4>}, {pipeline_mode = #tpu.pipeline_mode<synchronous>, transform_indices = @transform_2, window_bounds = array<i64: 36, 8>}, {pipeline_mode = #tpu.pipeline_mode<synchronous>, transform_indices = @transform_3, window_bounds = array<i64: 72, 16>}, {pipeline_mode = #tpu.pipeline_mode<synchronous>, transform_indices = @transform_4, window_bounds = array<i64: 144, 32>}, {pipeline_mode = #tpu.pipeline_mode<synchronous>, transform_indices = @transform_5, window_bounds = array<i64: 288, 64>}, {pipeline_mode = #tpu.pipeline_mode<synchronous>, transform_indices = @transform_6, window_bounds = array<i64: 9, 64>}, {pipeline_mode = #tpu.pipeline_mode<synchronous>, transform_indices = @transform_7, window_bounds = array<i64: 8, 64>}]} {
    %c0 = arith.constant 0 : index
    %c0_0 = arith.constant 0 : index
    %0 = vector.load %arg7[%c0, %c0_0] : memref<9x64xf32, #tpu.memory_space<vmem>>, vector<9x64xf32>
    %c0_1 = arith.constant 0 : index
    %c0_2 = arith.constant 0 : index
    %1 = vector.load %arg1[%c0_1, %c0_2] : memref<578x9xf32, #tpu.memory_space<vmem>>, vector<578x9xf32>
    %c0_3 = arith.constant 0 : index
    %c0_4 = arith.constant 0 : index
    %2 = vector.load %arg2[%c0_3, %c0_4] : memref<9x4xf32, #tpu.memory_space<vmem>>, vector<9x4xf32>
    %cst = arith.constant dense<0.000000e+00> : vector<578x4xf32>
    %3 = tpu.matmul %1, %2, %cst {dimension_numbers = #tpu.dot_dimension_numbers<[1], [0], [0], [1], [0, 0, 1, 1], [], []>} : vector<578x9xf32>, vector<9x4xf32>, vector<578x4xf32> -> vector<578x4xf32>
    %4 = vector.extract_strided_slice %0 {offsets = [0, 0], sizes = [1, 4], strides = [1, 1]} : vector<9x64xf32> to vector<1x4xf32>
    %5 = vector.extract_strided_slice %0 {offsets = [1, 0], sizes = [1, 4], strides = [1, 1]} : vector<9x64xf32> to vector<1x4xf32>
    %cst_5 = arith.constant dense<0.000000e+00> : vector<4xf32>
    %6 = vector.multi_reduction <add>, %3, %cst_5 [0] : vector<578x4xf32> to vector<4xf32>
    %7 = vector.shape_cast %6 : vector<4xf32> to vector<1x4xf32>
    %8 = arith.mulf %3, %3 : vector<578x4xf32>
    %cst_6 = arith.constant dense<0.000000e+00> : vector<4xf32>
    %9 = vector.multi_reduction <add>, %8, %cst_6 [0] : vector<578x4xf32> to vector<4xf32>
    %10 = vector.shape_cast %9 : vector<4xf32> to vector<1x4xf32>
    %cst_7 = arith.constant 0.00173010386 : f32
    %11 = vector.broadcast %cst_7 : f32 to vector<1x4xf32>
    %12 = arith.mulf %7, %11 : vector<1x4xf32>
    %cst_8 = arith.constant 0.00173010386 : f32
    %13 = vector.broadcast %cst_8 : f32 to vector<1x4xf32>
    %14 = arith.mulf %10, %13 : vector<1x4xf32>
    %15 = arith.mulf %12, %12 : vector<1x4xf32>
    %16 = arith.subf %14, %15 : vector<1x4xf32>
    %cst_9 = arith.constant 0.000000e+00 : f32
    %17 = vector.broadcast %cst_9 : f32 to vector<1x4xf32>
    %18 = arith.maximumf %16, %17 : vector<1x4xf32>
    %cst_10 = arith.constant 9.99999974E-6 : f32
    %19 = vector.broadcast %cst_10 : f32 to vector<1x4xf32>
    %20 = arith.addf %18, %19 : vector<1x4xf32>
    %21 = math.rsqrt %20 : vector<1x4xf32>
    %22 = arith.mulf %4, %21 : vector<1x4xf32>
    %23 = arith.mulf %12, %22 : vector<1x4xf32>
    %24 = arith.subf %5, %23 : vector<1x4xf32>
    %25 = vector.broadcast %22 : vector<1x4xf32> to vector<578x4xf32>
    %26 = arith.mulf %3, %25 : vector<578x4xf32>
    %27 = vector.broadcast %24 : vector<1x4xf32> to vector<578x4xf32>
    %28 = arith.addf %26, %27 : vector<578x4xf32>
    %cst_11 = arith.constant 2.000000e-02 : f32
    %29 = vector.broadcast %cst_11 : f32 to vector<578x4xf32>
    %30 = arith.mulf %29, %28 : vector<578x4xf32>
    %31 = arith.maximumf %28, %30 : vector<578x4xf32>
    %c0_12 = arith.constant 0 : index
    %c0_13 = arith.constant 0 : index
    %32 = vector.load %arg9[%c0_12, %c0_13] : memref<578x4xf32, #tpu.memory_space<vmem>>, vector<578x4xf32>
    tpu.vector_store %arg9[%c0_12, %c0_13], %31 {strides = array<i32>} : memref<578x4xf32, #tpu.memory_space<vmem>>, vector<578x4xf32>,
    %c0_14 = arith.constant 0 : index
    %c0_15 = arith.constant 0 : index
    %33 = vector.load %arg9[%c0_14, %c0_15] : memref<578x4xf32, #tpu.memory_space<vmem>>, vector<16x4xf32>
    %c0_16 = arith.constant 0 : index
    %c0_17 = arith.constant 0 : index
    %34 = vector.load %arg13[%c0_16, %c0_17] : memref<128x36xf32, #tpu.memory_space<vmem>>, vector<16x4xf32>
    tpu.vector_store %arg13[%c0_16, %c0_17], %33 {strides = array<i32>} : memref<128x36xf32, #tpu.memory_space<vmem>>, vector<16x4xf32>,
    %c162 = arith.constant 162 : index
    %c0_18 = arith.constant 0 : index
    %35 = vector.load %arg9[%c162, %c0_18] : memref<578x4xf32, #tpu.memory_space<vmem>>, vector<16x4xf32>
    %c0_19 = arith.constant 0 : index
    %c4 = arith.constant 4 : index
    %36 = vector.load %arg13[%c0_19, %c4] : memref<128x36xf32, #tpu.memory_space<vmem>>, vector<16x4xf32>
    tpu.vector_store %arg13[%c0_19, %c4], %35 {strides = array<i32>} : memref<128x36xf32, #tpu.memory_space<vmem>>, vector<16x4xf32>,
    %c2 = arith.constant 2 : index
    %c0_20 = arith.constant 0 : index
    %37 = vector.load %arg9[%c2, %c0_20] : memref<578x4xf32, #tpu.memory_space<vmem>>, vector<16x4xf32>
    %c0_21 = arith.constant 0 : index
    %c8 = arith.constant 8 : index
    %38 = vector.load %arg13[%c0_21, %c8] : memref<128x36xf32, #tpu.memory_space<vmem>>, vector<16x4xf32>
    tpu.vector_store %arg13[%c0_21, %c8], %37 {strides = array<i32>} : memref<128x36xf32, #tpu.memory_space<vmem>>, vector<16x4xf32>,
    %c306 = arith.constant 306 : index
    %c0_22 = arith.constant 0 : index
    %39 = vector.load %arg9[%c306, %c0_22] : memref<578x4xf32, #tpu.memory_space<vmem>>, vector<16x4xf32>
    %c0_23 = arith.constant 0 : index
    %c12 = arith.constant 12 : index
    %40 = vector.load %arg13[%c0_23, %c12] : memref<128x36xf32, #tpu.memory_space<vmem>>, vector<16x4xf32>
    tpu.vector_store %arg13[%c0_23, %c12], %39 {strides = array<i32>} : memref<128x36xf32, #tpu.memory_space<vmem>>, vector<16x4xf32>,
    %c450 = arith.constant 450 : index
    %c0_24 = arith.constant 0 : index
    %41 = vector.load %arg9[%c450, %c0_24] : memref<578x4xf32, #tpu.memory_space<vmem>>, vector<16x4xf32>
    %c0_25 = arith.constant 0 : index
    %c16 = arith.constant 16 : index
    %42 = vector.load %arg13[%c0_25, %c16] : memref<128x36xf32, #tpu.memory_space<vmem>>, vector<16x4xf32>
    tpu.vector_store %arg13[%c0_25, %c16], %41 {strides = array<i32>} : memref<128x36xf32, #tpu.memory_space<vmem>>, vector<16x4xf32>,
    %c308 = arith.constant 308 : index
    %c0_26 = arith.constant 0 : index
    %43 = vector.load %arg9[%c308, %c0_26] : memref<578x4xf32, #tpu.memory_space<vmem>>, vector<16x4xf32>
    %c0_27 = arith.constant 0 : index
    %c20 = arith.constant 20 : index
    %44 = vector.load %arg13[%c0_27, %c20] : memref<128x36xf32, #tpu.memory_space<vmem>>, vector<16x4xf32>
    tpu.vector_store %arg13[%c0_27, %c20], %43 {strides = array<i32>} : memref<128x36xf32, #tpu.memory_space<vmem>>, vector<16x4xf32>,
    %c18 = arith.constant 18 : index
    %c0_28 = arith.constant 0 : index
    %45 = vector.load %arg9[%c18, %c0_28] : memref<578x4xf32, #tpu.memory_space<vmem>>, vector<16x4xf32>
    %c0_29 = arith.constant 0 : index
    %c24 = arith.constant 24 : index
    %46 = vector.load %arg13[%c0_29, %c24] : memref<128x36xf32, #tpu.memory_space<vmem>>, vector<16x4xf32>
    tpu.vector_store %arg13[%c0_29, %c24], %45 {strides = array<i32>} : memref<128x36xf32, #tpu.memory_space<vmem>>, vector<16x4xf32>,
    %c178 = arith.constant 178 : index
    %c0_30 = arith.constant 0 : index
    %47 = vector.load %arg9[%c178, %c0_30] : memref<578x4xf32, #tpu.memory_space<vmem>>, vector<16x4xf32>
    %c0_31 = arith.constant 0 : index
    %c28 = arith.constant 28 : index
    %48 = vector.load %arg13[%c0_31, %c28] : memref<128x36xf32, #tpu.memory_space<vmem>>, vector<16x4xf32>
    tpu.vector_store %arg13[%c0_31, %c28], %47 {strides = array<i32>} : memref<128x36xf32, #tpu.memory_space<vmem>>, vector<16x4xf32>,
    %c20_32 = arith.constant 20 : index
    %c0_33 = arith.constant 0 : index
    %49 = vector.load %arg9[%c20_32, %c0_33] : memref<578x4xf32, #tpu.memory_space<vmem>>, vector<16x4xf32>
    %c0_34 = arith.constant 0 : index
    %c32 = arith.constant 32 : index
    %50 = vector.load %arg13[%c0_34, %c32] : memref<128x36xf32, #tpu.memory_space<vmem>>, vector<16x4xf32>
    tpu.vector_store %arg13[%c0_34, %c32], %49 {strides = array<i32>} : memref<128x36xf32, #tpu.memory_space<vmem>>, vector<16x4xf32>,
    %c18_35 = arith.constant 18 : index
    %c0_36 = arith.constant 0 : index
    %51 = vector.load %arg9[%c18_35, %c0_36] : memref<578x4xf32, #tpu.memory_space<vmem>>, vector<16x4xf32>
    %c16_37 = arith.constant 16 : index
    %c0_38 = arith.constant 0 : index
    %52 = vector.load %arg13[%c16_37, %c0_38] : memref<128x36xf32, #tpu.memory_space<vmem>>, vector<16x4xf32>
    tpu.vector_store %arg13[%c16_37, %c0_38], %51 {strides = array<i32>} : memref<128x36xf32, #tpu.memory_space<vmem>>, vector<16x4xf32>,
    %c178_39 = arith.constant 178 : index
    %c0_40 = arith.constant 0 : index
    %53 = vector.load %arg9[%c178_39, %c0_40] : memref<578x4xf32, #tpu.memory_space<vmem>>, vector<16x4xf32>
    %c16_41 = arith.constant 16 : index
    %c4_42 = arith.constant 4 : index
    %54 = vector.load %arg13[%c16_41, %c4_42] : memref<128x36xf32, #tpu.memory_space<vmem>>, vector<16x4xf32>
    tpu.vector_store %arg13[%c16_41, %c4_42], %53 {strides = array<i32>} : memref<128x36xf32, #tpu.memory_space<vmem>>, vector<16x4xf32>,
    %c20_43 = arith.constant 20 : index
    %c0_44 = arith.constant 0 : index
    %55 = vector.load %arg9[%c20_43, %c0_44] : memref<578x4xf32, #tpu.memory_space<vmem>>, vector<16x4xf32>
    %c16_45 = arith.constant 16 : index
    %c8_46 = arith.constant 8 : index
    %56 = vector.load %arg13[%c16_45, %c8_46] : memref<128x36xf32, #tpu.memory_space<vmem>>, vector<16x4xf32>
    tpu.vector_store %arg13[%c16_45, %c8_46], %55 {strides = array<i32>} : memref<128x36xf32, #tpu.memory_space<vmem>>, vector<16x4xf32>,
    %c324 = arith.constant 324 : index
    %c0_47 = arith.constant 0 : index
    %57 = vector.load %arg9[%c324, %c0_47] : memref<578x4xf32, #tpu.memory_space<vmem>>, vector<16x4xf32>
    %c16_48 = arith.constant 16 : index
    %c12_49 = arith.constant 12 : index
    %58 = vector.load %arg13[%c16_48, %c12_49] : memref<128x36xf32, #tpu.memory_space<vmem>>, vector<16x4xf32>
    tpu.vector_store %arg13[%c16_48, %c12_49], %57 {strides = array<i32>} : memref<128x36xf32, #tpu.memory_space<vmem>>, vector<16x4xf32>,
    %c466 = arith.constant 466 : index
    %c0_50 = arith.constant 0 : index
    %59 = vector.load %arg9[%c466, %c0_50] : memref<578x4xf32, #tpu.memory_space<vmem>>, vector<16x4xf32>
    %c16_51 = arith.constant 16 : index
    %c16_52 = arith.constant 16 : index
    %60 = vector.load %arg13[%c16_51, %c16_52] : memref<128x36xf32, #tpu.memory_space<vmem>>, vector<16x4xf32>
    tpu.vector_store %arg13[%c16_51, %c16_52], %59 {strides = array<i32>} : memref<128x36xf32, #tpu.memory_space<vmem>>, vector<16x4xf32>,
    %c326 = arith.constant 326 : index
    %c0_53 = arith.constant 0 : index
    %61 = vector.load %arg9[%c326, %c0_53] : memref<578x4xf32, #tpu.memory_space<vmem>>, vector<16x4xf32>
    %c16_54 = arith.constant 16 : index
    %c20_55 = arith.constant 20 : index
    %62 = vector.load %arg13[%c16_54, %c20_55] : memref<128x36xf32, #tpu.memory_space<vmem>>, vector<16x4xf32>
    tpu.vector_store %arg13[%c16_54, %c20_55], %61 {strides = array<i32>} : memref<128x36xf32, #tpu.memory_space<vmem>>, vector<16x4xf32>,
    %c36 = arith.constant 36 : index
    %c0_56 = arith.constant 0 : index
    %63 = vector.load %arg9[%c36, %c0_56] : memref<578x4xf32, #tpu.memory_space<vmem>>, vector<16x4xf32>
    %c16_57 = arith.constant 16 : index
    %c24_58 = arith.constant 24 : index
    %64 = vector.load %arg13[%c16_57, %c24_58] : memref<128x36xf32, #tpu.memory_space<vmem>>, vector<16x4xf32>
    tpu.vector_store %arg13[%c16_57, %c24_58], %63 {strides = array<i32>} : memref<128x36xf32, #tpu.memory_space<vmem>>, vector<16x4xf32>,
    %c194 = arith.constant 194 : index
    %c0_59 = arith.constant 0 : index
    %65 = vector.load %arg9[%c194, %c0_59] : memref<578x4xf32, #tpu.memory_space<vmem>>, vector<16x4xf32>
    %c16_60 = arith.constant 16 : index
    %c28_61 = arith.constant 28 : index
    %66 = vector.load %arg13[%c16_60, %c28_61] : memref<128x36xf32, #tpu.memory_space<vmem>>, vector<16x4xf32>
    tpu.vector_store %arg13[%c16_60, %c28_61], %65 {strides = array<i32>} : memref<128x36xf32, #tpu.memory_space<vmem>>, vector<16x4xf32>,
    %c38 = arith.constant 38 : index
    %c0_62 = arith.constant 0 : index
    %67 = vector.load %arg9[%c38, %c0_62] : memref<578x4xf32, #tpu.memory_space<vmem>>, vector<16x4xf32>
    %c16_63 = arith.constant 16 : index
    %c32_64 = arith.constant 32 : index
    %68 = vector.load %arg13[%c16_63, %c32_64] : memref<128x36xf32, #tpu.memory_space<vmem>>, vector<16x4xf32>
    tpu.vector_store %arg13[%c16_63, %c32_64], %67 {strides = array<i32>} : memref<128x36xf32, #tpu.memory_space<vmem>>, vector<16x4xf32>,
    %c36_65 = arith.constant 36 : index
    %c0_66 = arith.constant 0 : index
    %69 = vector.load %arg9[%c36_65, %c0_66] : memref<578x4xf32, #tpu.memory_space<vmem>>, vector<16x4xf32>
    %c32_67 = arith.constant 32 : index
    %c0_68 = arith.constant 0 : index
    %70 = vector.load %arg13[%c32_67, %c0_68] : memref<128x36xf32, #tpu.memory_space<vmem>>, vector<16x4xf32>
    tpu.vector_store %arg13[%c32_67, %c0_68], %69 {strides = array<i32>} : memref<128x36xf32, #tpu.memory_space<vmem>>, vector<16x4xf32>,
    %c194_69 = arith.constant 194 : index
    %c0_70 = arith.constant 0 : index
    %71 = vector.load %arg9[%c194_69, %c0_70] : memref<578x4xf32, #tpu.memory_space<vmem>>, vector<16x4xf32>
    %c32_71 = arith.constant 32 : index
    %c4_72 = arith.constant 4 : index
    %72 = vector.load %arg13[%c32_71, %c4_72] : memref<128x36xf32, #tpu.memory_space<vmem>>, vector<16x4xf32>
    tpu.vector_store %arg13[%c32_71, %c4_72], %71 {strides = array<i32>} : memref<128x36xf32, #tpu.memory_space<vmem>>, vector<16x4xf32>,
    %c38_73 = arith.constant 38 : index
    %c0_74 = arith.constant 0 : index
    %73 = vector.load %arg9[%c38_73, %c0_74] : memref<578x4xf32, #tpu.memory_space<vmem>>, vector<16x4xf32>
    %c32_75 = arith.constant 32 : index
    %c8_76 = arith.constant 8 : index
    %74 = vector.load %arg13[%c32_75, %c8_76] : memref<128x36xf32, #tpu.memory_space<vmem>>, vector<16x4xf32>
    tpu.vector_store %arg13[%c32_75, %c8_76], %73 {strides = array<i32>} : memref<128x36xf32, #tpu.memory_space<vmem>>, vector<16x4xf32>,
    %c342 = arith.constant 342 : index
    %c0_77 = arith.constant 0 : index
    %75 = vector.load %arg9[%c342, %c0_77] : memref<578x4xf32, #tpu.memory_space<vmem>>, vector<16x4xf32>
    %c32_78 = arith.constant 32 : index
    %c12_79 = arith.constant 12 : index
    %76 = vector.load %arg13[%c32_78, %c12_79] : memref<128x36xf32, #tpu.memory_space<vmem>>, vector<16x4xf32>
    tpu.vector_store %arg13[%c32_78, %c12_79], %75 {strides = array<i32>} : memref<128x36xf32, #tpu.memory_space<vmem>>, vector<16x4xf32>,
    %c482 = arith.constant 482 : index
    %c0_80 = arith.constant 0 : index
    %77 = vector.load %arg9[%c482, %c0_80] : memref<578x4xf32, #tpu.memory_space<vmem>>, vector<16x4xf32>
    %c32_81 = arith.constant 32 : index
    %c16_82 = arith.constant 16 : index
    %78 = vector.load %arg13[%c32_81, %c16_82] : memref<128x36xf32, #tpu.memory_space<vmem>>, vector<16x4xf32>
    tpu.vector_store %arg13[%c32_81, %c16_82], %77 {strides = array<i32>} : memref<128x36xf32, #tpu.memory_space<vmem>>, vector<16x4xf32>,
    %c344 = arith.constant 344 : index
    %c0_83 = arith.constant 0 : index
    %79 = vector.load %arg9[%c344, %c0_83] : memref<578x4xf32, #tpu.memory_space<vmem>>, vector<16x4xf32>
    %c32_84 = arith.constant 32 : index
    %c20_85 = arith.constant 20 : index
    %80 = vector.load %arg13[%c32_84, %c20_85] : memref<128x36xf32, #tpu.memory_space<vmem>>, vector<16x4xf32>
    tpu.vector_store %arg13[%c32_84, %c20_85], %79 {strides = array<i32>} : memref<128x36xf32, #tpu.memory_space<vmem>>, vector<16x4xf32>,
    %c54 = arith.constant 54 : index
    %c0_86 = arith.constant 0 : index
    %81 = vector.load %arg9[%c54, %c0_86] : memref<578x4xf32, #tpu.memory_space<vmem>>, vector<16x4xf32>
    %c32_87 = arith.constant 32 : index
    %c24_88 = arith.constant 24 : index
    %82 = vector.load %arg13[%c32_87, %c24_88] : memref<128x36xf32, #tpu.memory_space<vmem>>, vector<16x4xf32>
    tpu.vector_store %arg13[%c32_87, %c24_88], %81 {strides = array<i32>} : memref<128x36xf32, #tpu.memory_space<vmem>>, vector<16x4xf32>,
    %c210 = arith.constant 210 : index
    %c0_89 = arith.constant 0 : index
    %83 = vector.load %arg9[%c210, %c0_89] : memref<578x4xf32, #tpu.memory_space<vmem>>, vector<16x4xf32>
    %c32_90 = arith.constant 32 : index
    %c28_91 = arith.constant 28 : index
    %84 = vector.load %arg13[%c32_90, %c28_91] : memref<128x36xf32, #tpu.memory_space<vmem>>, vector<16x4xf32>
    tpu.vector_store %arg13[%c32_90, %c28_91], %83 {strides = array<i32>} : memref<128x36xf32, #tpu.memory_space<vmem>>, vector<16x4xf32>,
    %c56 = arith.constant 56 : index
    %c0_92 = arith.constant 0 : index
    %85 = vector.load %arg9[%c56, %c0_92] : memref<578x4xf32, #tpu.memory_space<vmem>>, vector<16x4xf32>
    %c32_93 = arith.constant 32 : index
    %c32_94 = arith.constant 32 : index
    %86 = vector.load %arg13[%c32_93, %c32_94] : memref<128x36xf32, #tpu.memory_space<vmem>>, vector<16x4xf32>
    tpu.vector_store %arg13[%c32_93, %c32_94], %85 {strides = array<i32>} : memref<128x36xf32, #tpu.memory_space<vmem>>, vector<16x4xf32>,
    %c54_95 = arith.constant 54 : index
    %c0_96 = arith.constant 0 : index
    %87 = vector.load %arg9[%c54_95, %c0_96] : memref<578x4xf32, #tpu.memory_space<vmem>>, vector<16x4xf32>
    %c48 = arith.constant 48 : index
    %c0_97 = arith.constant 0 : index
    %88 = vector.load %arg13[%c48, %c0_97] : memref<128x36xf32, #tpu.memory_space<vmem>>, vector<16x4xf32>
    tpu.vector_store %arg13[%c48, %c0_97], %87 {strides = array<i32>} : memref<128x36xf32, #tpu.memory_space<vmem>>, vector<16x4xf32>,
    %c210_98 = arith.constant 210 : index
    %c0_99 = arith.constant 0 : index
    %89 = vector.load %arg9[%c210_98, %c0_99] : memref<578x4xf32, #tpu.memory_space<vmem>>, vector<16x4xf32>
    %c48_100 = arith.constant 48 : index
    %c4_101 = arith.constant 4 : index
    %90 = vector.load %arg13[%c48_100, %c4_101] : memref<128x36xf32, #tpu.memory_space<vmem>>, vector<16x4xf32>
    tpu.vector_store %arg13[%c48_100, %c4_101], %89 {strides = array<i32>} : memref<128x36xf32, #tpu.memory_space<vmem>>, vector<16x4xf32>,
    %c56_102 = arith.constant 56 : index
    %c0_103 = arith.constant 0 : index
    %91 = vector.load %arg9[%c56_102, %c0_103] : memref<578x4xf32, #tpu.memory_space<vmem>>, vector<16x4xf32>
    %c48_104 = arith.constant 48 : index
    %c8_105 = arith.constant 8 : index
    %92 = vector.load %arg13[%c48_104, %c8_105] : memref<128x36xf32, #tpu.memory_space<vmem>>, vector<16x4xf32>
    tpu.vector_store %arg13[%c48_104, %c8_105], %91 {strides = array<i32>} : memref<128x36xf32, #tpu.memory_space<vmem>>, vector<16x4xf32>,
    %c360 = arith.constant 360 : index
    %c0_106 = arith.constant 0 : index
    %93 = vector.load %arg9[%c360, %c0_106] : memref<578x4xf32, #tpu.memory_space<vmem>>, vector<16x4xf32>
    %c48_107 = arith.constant 48 : index
    %c12_108 = arith.constant 12 : index
    %94 = vector.load %arg13[%c48_107, %c12_108] : memref<128x36xf32, #tpu.memory_space<vmem>>, vector<16x4xf32>
    tpu.vector_store %arg13[%c48_107, %c12_108], %93 {strides = array<i32>} : memref<128x36xf32, #tpu.memory_space<vmem>>, vector<16x4xf32>,
    %c498 = arith.constant 498 : index
    %c0_109 = arith.constant 0 : index
    %95 = vector.load %arg9[%c498, %c0_109] : memref<578x4xf32, #tpu.memory_space<vmem>>, vector<16x4xf32>
    %c48_110 = arith.constant 48 : index
    %c16_111 = arith.constant 16 : index
    %96 = vector.load %arg13[%c48_110, %c16_111] : memref<128x36xf32, #tpu.memory_space<vmem>>, vector<16x4xf32>
    tpu.vector_store %arg13[%c48_110, %c16_111], %95 {strides = array<i32>} : memref<128x36xf32, #tpu.memory_space<vmem>>, vector<16x4xf32>,
    %c362 = arith.constant 362 : index
    %c0_112 = arith.constant 0 : index
    %97 = vector.load %arg9[%c362, %c0_112] : memref<578x4xf32, #tpu.memory_space<vmem>>, vector<16x4xf32>
    %c48_113 = arith.constant 48 : index
    %c20_114 = arith.constant 20 : index
    %98 = vector.load %arg13[%c48_113, %c20_114] : memref<128x36xf32, #tpu.memory_space<vmem>>, vector<16x4xf32>
    tpu.vector_store %arg13[%c48_113, %c20_114], %97 {strides = array<i32>} : memref<128x36xf32, #tpu.memory_space<vmem>>, vector<16x4xf32>,
    %c72 = arith.constant 72 : index
    %c0_115 = arith.constant 0 : index
    %99 = vector.load %arg9[%c72, %c0_115] : memref<578x4xf32, #tpu.memory_space<vmem>>, vector<16x4xf32>
    %c48_116 = arith.constant 48 : index
    %c24_117 = arith.constant 24 : index
    %100 = vector.load %arg13[%c48_116, %c24_117] : memref<128x36xf32, #tpu.memory_space<vmem>>, vector<16x4xf32>
    tpu.vector_store %arg13[%c48_116, %c24_117], %99 {strides = array<i32>} : memref<128x36xf32, #tpu.memory_space<vmem>>, vector<16x4xf32>,
    %c226 = arith.constant 226 : index
    %c0_118 = arith.constant 0 : index
    %101 = vector.load %arg9[%c226, %c0_118] : memref<578x4xf32, #tpu.memory_space<vmem>>, vector<16x4xf32>
    %c48_119 = arith.constant 48 : index
    %c28_120 = arith.constant 28 : index
    %102 = vector.load %arg13[%c48_119, %c28_120] : memref<128x36xf32, #tpu.memory_space<vmem>>, vector<16x4xf32>
    tpu.vector_store %arg13[%c48_119, %c28_120], %101 {strides = array<i32>} : memref<128x36xf32, #tpu.memory_space<vmem>>, vector<16x4xf32>,
    %c74 = arith.constant 74 : index
    %c0_121 = arith.constant 0 : index
    %103 = vector.load %arg9[%c74, %c0_121] : memref<578x4xf32, #tpu.memory_space<vmem>>, vector<16x4xf32>
    %c48_122 = arith.constant 48 : index
    %c32_123 = arith.constant 32 : index
    %104 = vector.load %arg13[%c48_122, %c32_123] : memref<128x36xf32, #tpu.memory_space<vmem>>, vector<16x4xf32>
    tpu.vector_store %arg13[%c48_122, %c32_123], %103 {strides = array<i32>} : memref<128x36xf32, #tpu.memory_space<vmem>>, vector<16x4xf32>,
    %c72_124 = arith.constant 72 : index
    %c0_125 = arith.constant 0 : index
    %105 = vector.load %arg9[%c72_124, %c0_125] : memref<578x4xf32, #tpu.memory_space<vmem>>, vector<16x4xf32>
    %c64 = arith.constant 64 : index
    %c0_126 = arith.constant 0 : index
    %106 = vector.load %arg13[%c64, %c0_126] : memref<128x36xf32, #tpu.memory_space<vmem>>, vector<16x4xf32>
    tpu.vector_store %arg13[%c64, %c0_126], %105 {strides = array<i32>} : memref<128x36xf32, #tpu.memory_space<vmem>>, vector<16x4xf32>,
    %c226_127 = arith.constant 226 : index
    %c0_128 = arith.constant 0 : index
    %107 = vector.load %arg9[%c226_127, %c0_128] : memref<578x4xf32, #tpu.memory_space<vmem>>, vector<16x4xf32>
    %c64_129 = arith.constant 64 : index
    %c4_130 = arith.constant 4 : index
    %108 = vector.load %arg13[%c64_129, %c4_130] : memref<128x36xf32, #tpu.memory_space<vmem>>, vector<16x4xf32>
    tpu.vector_store %arg13[%c64_129, %c4_130], %107 {strides = array<i32>} : memref<128x36xf32, #tpu.memory_space<vmem>>, vector<16x4xf32>,
    %c74_131 = arith.constant 74 : index
    %c0_132 = arith.constant 0 : index
    %109 = vector.load %arg9[%c74_131, %c0_132] : memref<578x4xf32, #tpu.memory_space<vmem>>, vector<16x4xf32>
    %c64_133 = arith.constant 64 : index
    %c8_134 = arith.constant 8 : index
    %110 = vector.load %arg13[%c64_133, %c8_134] : memref<128x36xf32, #tpu.memory_space<vmem>>, vector<16x4xf32>
    tpu.vector_store %arg13[%c64_133, %c8_134], %109 {strides = array<i32>} : memref<128x36xf32, #tpu.memory_space<vmem>>, vector<16x4xf32>,
    %c378 = arith.constant 378 : index
    %c0_135 = arith.constant 0 : index
    %111 = vector.load %arg9[%c378, %c0_135] : memref<578x4xf32, #tpu.memory_space<vmem>>, vector<16x4xf32>
    %c64_136 = arith.constant 64 : index
    %c12_137 = arith.constant 12 : index
    %112 = vector.load %arg13[%c64_136, %c12_137] : memref<128x36xf32, #tpu.memory_space<vmem>>, vector<16x4xf32>
    tpu.vector_store %arg13[%c64_136, %c12_137], %111 {strides = array<i32>} : memref<128x36xf32, #tpu.memory_space<vmem>>, vector<16x4xf32>,
    %c514 = arith.constant 514 : index
    %c0_138 = arith.constant 0 : index
    %113 = vector.load %arg9[%c514, %c0_138] : memref<578x4xf32, #tpu.memory_space<vmem>>, vector<16x4xf32>
    %c64_139 = arith.constant 64 : index
    %c16_140 = arith.constant 16 : index
    %114 = vector.load %arg13[%c64_139, %c16_140] : memref<128x36xf32, #tpu.memory_space<vmem>>, vector<16x4xf32>
    tpu.vector_store %arg13[%c64_139, %c16_140], %113 {strides = array<i32>} : memref<128x36xf32, #tpu.memory_space<vmem>>, vector<16x4xf32>,
    %c380 = arith.constant 380 : index
    %c0_141 = arith.constant 0 : index
    %115 = vector.load %arg9[%c380, %c0_141] : memref<578x4xf32, #tpu.memory_space<vmem>>, vector<16x4xf32>
    %c64_142 = arith.constant 64 : index
    %c20_143 = arith.constant 20 : index
    %116 = vector.load %arg13[%c64_142, %c20_143] : memref<128x36xf32, #tpu.memory_space<vmem>>, vector<16x4xf32>
    tpu.vector_store %arg13[%c64_142, %c20_143], %115 {strides = array<i32>} : memref<128x36xf32, #tpu.memory_space<vmem>>, vector<16x4xf32>,
    %c90 = arith.constant 90 : index
    %c0_144 = arith.constant 0 : index
    %117 = vector.load %arg9[%c90, %c0_144] : memref<578x4xf32, #tpu.memory_space<vmem>>, vector<16x4xf32>
    %c64_145 = arith.constant 64 : index
    %c24_146 = arith.constant 24 : index
    %118 = vector.load %arg13[%c64_145, %c24_146] : memref<128x36xf32, #tpu.memory_space<vmem>>, vector<16x4xf32>
    tpu.vector_store %arg13[%c64_145, %c24_146], %117 {strides = array<i32>} : memref<128x36xf32, #tpu.memory_space<vmem>>, vector<16x4xf32>,
    %c242 = arith.constant 242 : index
    %c0_147 = arith.constant 0 : index
    %119 = vector.load %arg9[%c242, %c0_147] : memref<578x4xf32, #tpu.memory_space<vmem>>, vector<16x4xf32>
    %c64_148 = arith.constant 64 : index
    %c28_149 = arith.constant 28 : index
    %120 = vector.load %arg13[%c64_148, %c28_149] : memref<128x36xf32, #tpu.memory_space<vmem>>, vector<16x4xf32>
    tpu.vector_store %arg13[%c64_148, %c28_149], %119 {strides = array<i32>} : memref<128x36xf32, #tpu.memory_space<vmem>>, vector<16x4xf32>,
    %c92 = arith.constant 92 : index
    %c0_150 = arith.constant 0 : index
    %121 = vector.load %arg9[%c92, %c0_150] : memref<578x4xf32, #tpu.memory_space<vmem>>, vector<16x4xf32>
    %c64_151 = arith.constant 64 : index
    %c32_152 = arith.constant 32 : index
    %122 = vector.load %arg13[%c64_151, %c32_152] : memref<128x36xf32, #tpu.memory_space<vmem>>, vector<16x4xf32>
    tpu.vector_store %arg13[%c64_151, %c32_152], %121 {strides = array<i32>} : memref<128x36xf32, #tpu.memory_space<vmem>>, vector<16x4xf32>,
    %c90_153 = arith.constant 90 : index
    %c0_154 = arith.constant 0 : index
    %123 = vector.load %arg9[%c90_153, %c0_154] : memref<578x4xf32, #tpu.memory_space<vmem>>, vector<16x4xf32>
    %c80 = arith.constant 80 : index
    %c0_155 = arith.constant 0 : index
    %124 = vector.load %arg13[%c80, %c0_155] : memref<128x36xf32, #tpu.memory_space<vmem>>, vector<16x4xf32>
    tpu.vector_store %arg13[%c80, %c0_155], %123 {strides = array<i32>} : memref<128x36xf32, #tpu.memory_space<vmem>>, vector<16x4xf32>,
    %c242_156 = arith.constant 242 : index
    %c0_157 = arith.constant 0 : index
    %125 = vector.load %arg9[%c242_156, %c0_157] : memref<578x4xf32, #tpu.memory_space<vmem>>, vector<16x4xf32>
    %c80_158 = arith.constant 80 : index
    %c4_159 = arith.constant 4 : index
    %126 = vector.load %arg13[%c80_158, %c4_159] : memref<128x36xf32, #tpu.memory_space<vmem>>, vector<16x4xf32>
    tpu.vector_store %arg13[%c80_158, %c4_159], %125 {strides = array<i32>} : memref<128x36xf32, #tpu.memory_space<vmem>>, vector<16x4xf32>,
    %c92_160 = arith.constant 92 : index
    %c0_161 = arith.constant 0 : index
    %127 = vector.load %arg9[%c92_160, %c0_161] : memref<578x4xf32, #tpu.memory_space<vmem>>, vector<16x4xf32>
    %c80_162 = arith.constant 80 : index
    %c8_163 = arith.constant 8 : index
    %128 = vector.load %arg13[%c80_162, %c8_163] : memref<128x36xf32, #tpu.memory_space<vmem>>, vector<16x4xf32>
    tpu.vector_store %arg13[%c80_162, %c8_163], %127 {strides = array<i32>} : memref<128x36xf32, #tpu.memory_space<vmem>>, vector<16x4xf32>,
    %c396 = arith.constant 396 : index
    %c0_164 = arith.constant 0 : index
    %129 = vector.load %arg9[%c396, %c0_164] : memref<578x4xf32, #tpu.memory_space<vmem>>, vector<16x4xf32>
    %c80_165 = arith.constant 80 : index
    %c12_166 = arith.constant 12 : index
    %130 = vector.load %arg13[%c80_165, %c12_166] : memref<128x36xf32, #tpu.memory_space<vmem>>, vector<16x4xf32>
    tpu.vector_store %arg13[%c80_165, %c12_166], %129 {strides = array<i32>} : memref<128x36xf32, #tpu.memory_space<vmem>>, vector<16x4xf32>,
    %c530 = arith.constant 530 : index
    %c0_167 = arith.constant 0 : index
    %131 = vector.load %arg9[%c530, %c0_167] : memref<578x4xf32, #tpu.memory_space<vmem>>, vector<16x4xf32>
    %c80_168 = arith.constant 80 : index
    %c16_169 = arith.constant 16 : index
    %132 = vector.load %arg13[%c80_168, %c16_169] : memref<128x36xf32, #tpu.memory_space<vmem>>, vector<16x4xf32>
    tpu.vector_store %arg13[%c80_168, %c16_169], %131 {strides = array<i32>} : memref<128x36xf32, #tpu.memory_space<vmem>>, vector<16x4xf32>,
    %c398 = arith.constant 398 : index
    %c0_170 = arith.constant 0 : index
    %133 = vector.load %arg9[%c398, %c0_170] : memref<578x4xf32, #tpu.memory_space<vmem>>, vector<16x4xf32>
    %c80_171 = arith.constant 80 : index
    %c20_172 = arith.constant 20 : index
    %134 = vector.load %arg13[%c80_171, %c20_172] : memref<128x36xf32, #tpu.memory_space<vmem>>, vector<16x4xf32>
    tpu.vector_store %arg13[%c80_171, %c20_172], %133 {strides = array<i32>} : memref<128x36xf32, #tpu.memory_space<vmem>>, vector<16x4xf32>,
    %c108 = arith.constant 108 : index
    %c0_173 = arith.constant 0 : index
    %135 = vector.load %arg9[%c108, %c0_173] : memref<578x4xf32, #tpu.memory_space<vmem>>, vector<16x4xf32>
    %c80_174 = arith.constant 80 : index
    %c24_175 = arith.constant 24 : index
    %136 = vector.load %arg13[%c80_174, %c24_175] : memref<128x36xf32, #tpu.memory_space<vmem>>, vector<16x4xf32>
    tpu.vector_store %arg13[%c80_174, %c24_175], %135 {strides = array<i32>} : memref<128x36xf32, #tpu.memory_space<vmem>>, vector<16x4xf32>,
    %c258 = arith.constant 258 : index
    %c0_176 = arith.constant 0 : index
    %137 = vector.load %arg9[%c258, %c0_176] : memref<578x4xf32, #tpu.memory_space<vmem>>, vector<16x4xf32>
    %c80_177 = arith.constant 80 : index
    %c28_178 = arith.constant 28 : index
    %138 = vector.load %arg13[%c80_177, %c28_178] : memref<128x36xf32, #tpu.memory_space<vmem>>, vector<16x4xf32>
    tpu.vector_store %arg13[%c80_177, %c28_178], %137 {strides = array<i32>} : memref<128x36xf32, #tpu.memory_space<vmem>>, vector<16x4xf32>,
    %c110 = arith.constant 110 : index
    %c0_179 = arith.constant 0 : index
    %139 = vector.load %arg9[%c110, %c0_179] : memref<578x4xf32, #tpu.memory_space<vmem>>, vector<16x4xf32>
    %c80_180 = arith.constant 80 : index
    %c32_181 = arith.constant 32 : index
    %140 = vector.load %arg13[%c80_180, %c32_181] : memref<128x36xf32, #tpu.memory_space<vmem>>, vector<16x4xf32>
    tpu.vector_store %arg13[%c80_180, %c32_181], %139 {strides = array<i32>} : memref<128x36xf32, #tpu.memory_space<vmem>>, vector<16x4xf32>,
    %c108_182 = arith.constant 108 : index
    %c0_183 = arith.constant 0 : index
    %141 = vector.load %arg9[%c108_182, %c0_183] : memref<578x4xf32, #tpu.memory_space<vmem>>, vector<16x4xf32>
    %c96 = arith.constant 96 : index
    %c0_184 = arith.constant 0 : index
    %142 = vector.load %arg13[%c96, %c0_184] : memref<128x36xf32, #tpu.memory_space<vmem>>, vector<16x4xf32>
    tpu.vector_store %arg13[%c96, %c0_184], %141 {strides = array<i32>} : memref<128x36xf32, #tpu.memory_space<vmem>>, vector<16x4xf32>,
    %c258_185 = arith.constant 258 : index
    %c0_186 = arith.constant 0 : index
    %143 = vector.load %arg9[%c258_185, %c0_186] : memref<578x4xf32, #tpu.memory_space<vmem>>, vector<16x4xf32>
    %c96_187 = arith.constant 96 : index
    %c4_188 = arith.constant 4 : index
    %144 = vector.load %arg13[%c96_187, %c4_188] : memref<128x36xf32, #tpu.memory_space<vmem>>, vector<16x4xf32>
    tpu.vector_store %arg13[%c96_187, %c4_188], %143 {strides = array<i32>} : memref<128x36xf32, #tpu.memory_space<vmem>>, vector<16x4xf32>,
    %c110_189 = arith.constant 110 : index
    %c0_190 = arith.constant 0 : index
    %145 = vector.load %arg9[%c110_189, %c0_190] : memref<578x4xf32, #tpu.memory_space<vmem>>, vector<16x4xf32>
    %c96_191 = arith.constant 96 : index
    %c8_192 = arith.constant 8 : index
    %146 = vector.load %arg13[%c96_191, %c8_192] : memref<128x36xf32, #tpu.memory_space<vmem>>, vector<16x4xf32>
    tpu.vector_store %arg13[%c96_191, %c8_192], %145 {strides = array<i32>} : memref<128x36xf32, #tpu.memory_space<vmem>>, vector<16x4xf32>,
    %c414 = arith.constant 414 : index
    %c0_193 = arith.constant 0 : index
    %147 = vector.load %arg9[%c414, %c0_193] : memref<578x4xf32, #tpu.memory_space<vmem>>, vector<16x4xf32>
    %c96_194 = arith.constant 96 : index
    %c12_195 = arith.constant 12 : index
    %148 = vector.load %arg13[%c96_194, %c12_195] : memref<128x36xf32, #tpu.memory_space<vmem>>, vector<16x4xf32>
    tpu.vector_store %arg13[%c96_194, %c12_195], %147 {strides = array<i32>} : memref<128x36xf32, #tpu.memory_space<vmem>>, vector<16x4xf32>,
    %c546 = arith.constant 546 : index
    %c0_196 = arith.constant 0 : index
    %149 = vector.load %arg9[%c546, %c0_196] : memref<578x4xf32, #tpu.memory_space<vmem>>, vector<16x4xf32>
    %c96_197 = arith.constant 96 : index
    %c16_198 = arith.constant 16 : index
    %150 = vector.load %arg13[%c96_197, %c16_198] : memref<128x36xf32, #tpu.memory_space<vmem>>, vector<16x4xf32>
    tpu.vector_store %arg13[%c96_197, %c16_198], %149 {strides = array<i32>} : memref<128x36xf32, #tpu.memory_space<vmem>>, vector<16x4xf32>,
    %c416 = arith.constant 416 : index
    %c0_199 = arith.constant 0 : index
    %151 = vector.load %arg9[%c416, %c0_199] : memref<578x4xf32, #tpu.memory_space<vmem>>, vector<16x4xf32>
    %c96_200 = arith.constant 96 : index
    %c20_201 = arith.constant 20 : index
    %152 = vector.load %arg13[%c96_200, %c20_201] : memref<128x36xf32, #tpu.memory_space<vmem>>, vector<16x4xf32>
    tpu.vector_store %arg13[%c96_200, %c20_201], %151 {strides = array<i32>} : memref<128x36xf32, #tpu.memory_space<vmem>>, vector<16x4xf32>,
    %c126 = arith.constant 126 : index
    %c0_202 = arith.constant 0 : index
    %153 = vector.load %arg9[%c126, %c0_202] : memref<578x4xf32, #tpu.memory_space<vmem>>, vector<16x4xf32>
    %c96_203 = arith.constant 96 : index
    %c24_204 = arith.constant 24 : index
    %154 = vector.load %arg13[%c96_203, %c24_204] : memref<128x36xf32, #tpu.memory_space<vmem>>, vector<16x4xf32>
    tpu.vector_store %arg13[%c96_203, %c24_204], %153 {strides = array<i32>} : memref<128x36xf32, #tpu.memory_space<vmem>>, vector<16x4xf32>,
    %c274 = arith.constant 274 : index
    %c0_205 = arith.constant 0 : index
    %155 = vector.load %arg9[%c274, %c0_205] : memref<578x4xf32, #tpu.memory_space<vmem>>, vector<16x4xf32>
    %c96_206 = arith.constant 96 : index
    %c28_207 = arith.constant 28 : index
    %156 = vector.load %arg13[%c96_206, %c28_207] : memref<128x36xf32, #tpu.memory_space<vmem>>, vector<16x4xf32>
    tpu.vector_store %arg13[%c96_206, %c28_207], %155 {strides = array<i32>} : memref<128x36xf32, #tpu.memory_space<vmem>>, vector<16x4xf32>,
    %c128 = arith.constant 128 : index
    %c0_208 = arith.constant 0 : index
    %157 = vector.load %arg9[%c128, %c0_208] : memref<578x4xf32, #tpu.memory_space<vmem>>, vector<16x4xf32>
    %c96_209 = arith.constant 96 : index
    %c32_210 = arith.constant 32 : index
    %158 = vector.load %arg13[%c96_209, %c32_210] : memref<128x36xf32, #tpu.memory_space<vmem>>, vector<16x4xf32>
    tpu.vector_store %arg13[%c96_209, %c32_210], %157 {strides = array<i32>} : memref<128x36xf32, #tpu.memory_space<vmem>>, vector<16x4xf32>,
    %c126_211 = arith.constant 126 : index
    %c0_212 = arith.constant 0 : index
    %159 = vector.load %arg9[%c126_211, %c0_212] : memref<578x4xf32, #tpu.memory_space<vmem>>, vector<16x4xf32>
    %c112 = arith.constant 112 : index
    %c0_213 = arith.constant 0 : index
    %160 = vector.load %arg13[%c112, %c0_213] : memref<128x36xf32, #tpu.memory_space<vmem>>, vector<16x4xf32>
    tpu.vector_store %arg13[%c112, %c0_213], %159 {strides = array<i32>} : memref<128x36xf32, #tpu.memory_space<vmem>>, vector<16x4xf32>,
    %c274_214 = arith.constant 274 : index
    %c0_215 = arith.constant 0 : index
    %161 = vector.load %arg9[%c274_214, %c0_215] : memref<578x4xf32, #tpu.memory_space<vmem>>, vector<16x4xf32>
    %c112_216 = arith.constant 112 : index
    %c4_217 = arith.constant 4 : index
    %162 = vector.load %arg13[%c112_216, %c4_217] : memref<128x36xf32, #tpu.memory_space<vmem>>, vector<16x4xf32>
    tpu.vector_store %arg13[%c112_216, %c4_217], %161 {strides = array<i32>} : memref<128x36xf32, #tpu.memory_space<vmem>>, vector<16x4xf32>,
    %c128_218 = arith.constant 128 : index
    %c0_219 = arith.constant 0 : index
    %163 = vector.load %arg9[%c128_218, %c0_219] : memref<578x4xf32, #tpu.memory_space<vmem>>, vector<16x4xf32>
    %c112_220 = arith.constant 112 : index
    %c8_221 = arith.constant 8 : index
    %164 = vector.load %arg13[%c112_220, %c8_221] : memref<128x36xf32, #tpu.memory_space<vmem>>, vector<16x4xf32>
    tpu.vector_store %arg13[%c112_220, %c8_221], %163 {strides = array<i32>} : memref<128x36xf32, #tpu.memory_space<vmem>>, vector<16x4xf32>,
    %c432 = arith.constant 432 : index
    %c0_222 = arith.constant 0 : index
    %165 = vector.load %arg9[%c432, %c0_222] : memref<578x4xf32, #tpu.memory_space<vmem>>, vector<16x4xf32>
    %c112_223 = arith.constant 112 : index
    %c12_224 = arith.constant 12 : index
    %166 = vector.load %arg13[%c112_223, %c12_224] : memref<128x36xf32, #tpu.memory_space<vmem>>, vector<16x4xf32>
    tpu.vector_store %arg13[%c112_223, %c12_224], %165 {strides = array<i32>} : memref<128x36xf32, #tpu.memory_space<vmem>>, vector<16x4xf32>,
    %c562 = arith.constant 562 : index
    %c0_225 = arith.constant 0 : index
    %167 = vector.load %arg9[%c562, %c0_225] : memref<578x4xf32, #tpu.memory_space<vmem>>, vector<16x4xf32>
    %c112_226 = arith.constant 112 : index
    %c16_227 = arith.constant 16 : index
    %168 = vector.load %arg13[%c112_226, %c16_227] : memref<128x36xf32, #tpu.memory_space<vmem>>, vector<16x4xf32>
    tpu.vector_store %arg13[%c112_226, %c16_227], %167 {strides = array<i32>} : memref<128x36xf32, #tpu.memory_space<vmem>>, vector<16x4xf32>,
    %c434 = arith.constant 434 : index
    %c0_228 = arith.constant 0 : index
    %169 = vector.load %arg9[%c434, %c0_228] : memref<578x4xf32, #tpu.memory_space<vmem>>, vector<16x4xf32>
    %c112_229 = arith.constant 112 : index
    %c20_230 = arith.constant 20 : index
    %170 = vector.load %arg13[%c112_229, %c20_230] : memref<128x36xf32, #tpu.memory_space<vmem>>, vector<16x4xf32>
    tpu.vector_store %arg13[%c112_229, %c20_230], %169 {strides = array<i32>} : memref<128x36xf32, #tpu.memory_space<vmem>>, vector<16x4xf32>,
    %c144 = arith.constant 144 : index
    %c0_231 = arith.constant 0 : index
    %171 = vector.load %arg9[%c144, %c0_231] : memref<578x4xf32, #tpu.memory_space<vmem>>, vector<16x4xf32>
    %c112_232 = arith.constant 112 : index
    %c24_233 = arith.constant 24 : index
    %172 = vector.load %arg13[%c112_232, %c24_233] : memref<128x36xf32, #tpu.memory_space<vmem>>, vector<16x4xf32>
    tpu.vector_store %arg13[%c112_232, %c24_233], %171 {strides = array<i32>} : memref<128x36xf32, #tpu.memory_space<vmem>>, vector<16x4xf32>,
    %c290 = arith.constant 290 : index
    %c0_234 = arith.constant 0 : index
    %173 = vector.load %arg9[%c290, %c0_234] : memref<578x4xf32, #tpu.memory_space<vmem>>, vector<16x4xf32>
    %c112_235 = arith.constant 112 : index
    %c28_236 = arith.constant 28 : index
    %174 = vector.load %arg13[%c112_235, %c28_236] : memref<128x36xf32, #tpu.memory_space<vmem>>, vector<16x4xf32>
    tpu.vector_store %arg13[%c112_235, %c28_236], %173 {strides = array<i32>} : memref<128x36xf32, #tpu.memory_space<vmem>>, vector<16x4xf32>,
    %c146 = arith.constant 146 : index
    %c0_237 = arith.constant 0 : index
    %175 = vector.load %arg9[%c146, %c0_237] : memref<578x4xf32, #tpu.memory_space<vmem>>, vector<16x4xf32>
    %c112_238 = arith.constant 112 : index
    %c32_239 = arith.constant 32 : index
    %176 = vector.load %arg13[%c112_238, %c32_239] : memref<128x36xf32, #tpu.memory_space<vmem>>, vector<16x4xf32>
    tpu.vector_store %arg13[%c112_238, %c32_239], %175 {strides = array<i32>} : memref<128x36xf32, #tpu.memory_space<vmem>>, vector<16x4xf32>,
    %c0_240 = arith.constant 0 : index
    %c0_241 = arith.constant 0 : index
    %177 = vector.load %arg13[%c0_240, %c0_241] : memref<128x36xf32, #tpu.memory_space<vmem>>, vector<128x36xf32>
    %c0_242 = arith.constant 0 : index
    %c0_243 = arith.constant 0 : index
    %178 = vector.load %arg3[%c0_242, %c0_243] : memref<36x8xf32, #tpu.memory_space<vmem>>, vector<36x8xf32>
    %cst_244 = arith.constant dense<0.000000e+00> : vector<128x8xf32>
    %179 = tpu.matmul %177, %178, %cst_244 {dimension_numbers = #tpu.dot_dimension_numbers<[1], [0], [0], [1], [0, 0, 1, 1], [], []>} : vector<128x36xf32>, vector<36x8xf32>, vector<128x8xf32> -> vector<128x8xf32>
    %180 = vector.extract_strided_slice %0 {offsets = [2, 0], sizes = [1, 8], strides = [1, 1]} : vector<9x64xf32> to vector<1x8xf32>
    %181 = vector.extract_strided_slice %0 {offsets = [3, 0], sizes = [1, 8], strides = [1, 1]} : vector<9x64xf32> to vector<1x8xf32>
    %cst_245 = arith.constant dense<0.000000e+00> : vector<8xf32>
    %182 = vector.multi_reduction <add>, %179, %cst_245 [0] : vector<128x8xf32> to vector<8xf32>
    %183 = vector.shape_cast %182 : vector<8xf32> to vector<1x8xf32>
    %184 = arith.mulf %179, %179 : vector<128x8xf32>
    %cst_246 = arith.constant dense<0.000000e+00> : vector<8xf32>
    %185 = vector.multi_reduction <add>, %184, %cst_246 [0] : vector<128x8xf32> to vector<8xf32>
    %186 = vector.shape_cast %185 : vector<8xf32> to vector<1x8xf32>
    %cst_247 = arith.constant 7.812500e-03 : f32
    %187 = vector.broadcast %cst_247 : f32 to vector<1x8xf32>
    %188 = arith.mulf %183, %187 : vector<1x8xf32>
    %cst_248 = arith.constant 7.812500e-03 : f32
    %189 = vector.broadcast %cst_248 : f32 to vector<1x8xf32>
    %190 = arith.mulf %186, %189 : vector<1x8xf32>
    %191 = arith.mulf %188, %188 : vector<1x8xf32>
    %192 = arith.subf %190, %191 : vector<1x8xf32>
    %cst_249 = arith.constant 0.000000e+00 : f32
    %193 = vector.broadcast %cst_249 : f32 to vector<1x8xf32>
    %194 = arith.maximumf %192, %193 : vector<1x8xf32>
    %cst_250 = arith.constant 9.99999974E-6 : f32
    %195 = vector.broadcast %cst_250 : f32 to vector<1x8xf32>
    %196 = arith.addf %194, %195 : vector<1x8xf32>
    %197 = math.rsqrt %196 : vector<1x8xf32>
    %198 = arith.mulf %180, %197 : vector<1x8xf32>
    %199 = arith.mulf %188, %198 : vector<1x8xf32>
    %200 = arith.subf %181, %199 : vector<1x8xf32>
    %201 = vector.broadcast %198 : vector<1x8xf32> to vector<128x8xf32>
    %202 = arith.mulf %179, %201 : vector<128x8xf32>
    %203 = vector.broadcast %200 : vector<1x8xf32> to vector<128x8xf32>
    %204 = arith.addf %202, %203 : vector<128x8xf32>
    %cst_251 = arith.constant 2.000000e-02 : f32
    %205 = vector.broadcast %cst_251 : f32 to vector<128x8xf32>
    %206 = arith.mulf %205, %204 : vector<128x8xf32>
    %207 = arith.maximumf %204, %206 : vector<128x8xf32>
    %c0_252 = arith.constant 0 : index
    %c0_253 = arith.constant 0 : index
    %208 = vector.load %arg10[%c0_252, %c0_253] : memref<128x8xf32, #tpu.memory_space<vmem>>, vector<128x8xf32>
    tpu.vector_store %arg10[%c0_252, %c0_253], %207 {strides = array<i32>} : memref<128x8xf32, #tpu.memory_space<vmem>>, vector<128x8xf32>,
    %c0_254 = arith.constant 0 : index
    %c0_255 = arith.constant 0 : index
    %209 = vector.load %arg10[%c0_254, %c0_255] : memref<128x8xf32, #tpu.memory_space<vmem>>, vector<16x8xf32>
    %210 = vector.extract_strided_slice %209 {offsets = [0, 0], sizes = [12, 8], strides = [1, 1]} : vector<16x8xf32> to vector<12x8xf32>
    %c0_256 = arith.constant 0 : index
    %c0_257 = arith.constant 0 : index
    %211 = vector.load %arg14[%c0_256, %c0_257] : memref<72x72xf32, #tpu.memory_space<vmem>>, vector<12x8xf32>
    tpu.vector_store %arg14[%c0_256, %c0_257], %210 {strides = array<i32>} : memref<72x72xf32, #tpu.memory_space<vmem>>, vector<12x8xf32>,
    %212 = vector.extract_strided_slice %209 {offsets = [2, 0], sizes = [12, 8], strides = [1, 1]} : vector<16x8xf32> to vector<12x8xf32>
    %c0_258 = arith.constant 0 : index
    %c8_259 = arith.constant 8 : index
    %213 = vector.load %arg14[%c0_258, %c8_259] : memref<72x72xf32, #tpu.memory_space<vmem>>, vector<12x8xf32>
    tpu.vector_store %arg14[%c0_258, %c8_259], %212 {strides = array<i32>} : memref<72x72xf32, #tpu.memory_space<vmem>>, vector<12x8xf32>,
    %214 = vector.extract_strided_slice %209 {offsets = [4, 0], sizes = [12, 8], strides = [1, 1]} : vector<16x8xf32> to vector<12x8xf32>
    %c0_260 = arith.constant 0 : index
    %c16_261 = arith.constant 16 : index
    %215 = vector.load %arg14[%c0_260, %c16_261] : memref<72x72xf32, #tpu.memory_space<vmem>>, vector<12x8xf32>
    tpu.vector_store %arg14[%c0_260, %c16_261], %214 {strides = array<i32>} : memref<72x72xf32, #tpu.memory_space<vmem>>, vector<12x8xf32>,
    %c16_262 = arith.constant 16 : index
    %c0_263 = arith.constant 0 : index
    %216 = vector.load %arg10[%c16_262, %c0_263] : memref<128x8xf32, #tpu.memory_space<vmem>>, vector<16x8xf32>
    %217 = vector.extract_strided_slice %216 {offsets = [0, 0], sizes = [12, 8], strides = [1, 1]} : vector<16x8xf32> to vector<12x8xf32>
    %c0_264 = arith.constant 0 : index
    %c24_265 = arith.constant 24 : index
    %218 = vector.load %arg14[%c0_264, %c24_265] : memref<72x72xf32, #tpu.memory_space<vmem>>, vector<12x8xf32>
    tpu.vector_store %arg14[%c0_264, %c24_265], %217 {strides = array<i32>} : memref<72x72xf32, #tpu.memory_space<vmem>>, vector<12x8xf32>,
    %219 = vector.extract_strided_slice %216 {offsets = [2, 0], sizes = [12, 8], strides = [1, 1]} : vector<16x8xf32> to vector<12x8xf32>
    %c0_266 = arith.constant 0 : index
    %c32_267 = arith.constant 32 : index
    %220 = vector.load %arg14[%c0_266, %c32_267] : memref<72x72xf32, #tpu.memory_space<vmem>>, vector<12x8xf32>
    tpu.vector_store %arg14[%c0_266, %c32_267], %219 {strides = array<i32>} : memref<72x72xf32, #tpu.memory_space<vmem>>, vector<12x8xf32>,
    %221 = vector.extract_strided_slice %216 {offsets = [4, 0], sizes = [12, 8], strides = [1, 1]} : vector<16x8xf32> to vector<12x8xf32>
    %c0_268 = arith.constant 0 : index
    %c40 = arith.constant 40 : index
    %222 = vector.load %arg14[%c0_268, %c40] : memref<72x72xf32, #tpu.memory_space<vmem>>, vector<12x8xf32>
    tpu.vector_store %arg14[%c0_268, %c40], %221 {strides = array<i32>} : memref<72x72xf32, #tpu.memory_space<vmem>>, vector<12x8xf32>,
    %c32_269 = arith.constant 32 : index
    %c0_270 = arith.constant 0 : index
    %223 = vector.load %arg10[%c32_269, %c0_270] : memref<128x8xf32, #tpu.memory_space<vmem>>, vector<16x8xf32>
    %224 = vector.extract_strided_slice %223 {offsets = [0, 0], sizes = [12, 8], strides = [1, 1]} : vector<16x8xf32> to vector<12x8xf32>
    %c0_271 = arith.constant 0 : index
    %c48_272 = arith.constant 48 : index
    %225 = vector.load %arg14[%c0_271, %c48_272] : memref<72x72xf32, #tpu.memory_space<vmem>>, vector<12x8xf32>
    tpu.vector_store %arg14[%c0_271, %c48_272], %224 {strides = array<i32>} : memref<72x72xf32, #tpu.memory_space<vmem>>, vector<12x8xf32>,
    %226 = vector.extract_strided_slice %223 {offsets = [2, 0], sizes = [12, 8], strides = [1, 1]} : vector<16x8xf32> to vector<12x8xf32>
    %c0_273 = arith.constant 0 : index
    %c56_274 = arith.constant 56 : index
    %227 = vector.load %arg14[%c0_273, %c56_274] : memref<72x72xf32, #tpu.memory_space<vmem>>, vector<12x8xf32>
    tpu.vector_store %arg14[%c0_273, %c56_274], %226 {strides = array<i32>} : memref<72x72xf32, #tpu.memory_space<vmem>>, vector<12x8xf32>,
    %228 = vector.extract_strided_slice %223 {offsets = [4, 0], sizes = [12, 8], strides = [1, 1]} : vector<16x8xf32> to vector<12x8xf32>
    %c0_275 = arith.constant 0 : index
    %c64_276 = arith.constant 64 : index
    %229 = vector.load %arg14[%c0_275, %c64_276] : memref<72x72xf32, #tpu.memory_space<vmem>>, vector<12x8xf32>
    tpu.vector_store %arg14[%c0_275, %c64_276], %228 {strides = array<i32>} : memref<72x72xf32, #tpu.memory_space<vmem>>, vector<12x8xf32>,
    %c16_277 = arith.constant 16 : index
    %c0_278 = arith.constant 0 : index
    %230 = vector.load %arg10[%c16_277, %c0_278] : memref<128x8xf32, #tpu.memory_space<vmem>>, vector<16x8xf32>
    %231 = vector.extract_strided_slice %230 {offsets = [0, 0], sizes = [12, 8], strides = [1, 1]} : vector<16x8xf32> to vector<12x8xf32>
    %c12_279 = arith.constant 12 : index
    %c0_280 = arith.constant 0 : index
    %232 = vector.load %arg14[%c12_279, %c0_280] : memref<72x72xf32, #tpu.memory_space<vmem>>, vector<12x8xf32>
    tpu.vector_store %arg14[%c12_279, %c0_280], %231 {strides = array<i32>} : memref<72x72xf32, #tpu.memory_space<vmem>>, vector<12x8xf32>,
    %233 = vector.extract_strided_slice %230 {offsets = [2, 0], sizes = [12, 8], strides = [1, 1]} : vector<16x8xf32> to vector<12x8xf32>
    %c12_281 = arith.constant 12 : index
    %c8_282 = arith.constant 8 : index
    %234 = vector.load %arg14[%c12_281, %c8_282] : memref<72x72xf32, #tpu.memory_space<vmem>>, vector<12x8xf32>
    tpu.vector_store %arg14[%c12_281, %c8_282], %233 {strides = array<i32>} : memref<72x72xf32, #tpu.memory_space<vmem>>, vector<12x8xf32>,
    %235 = vector.extract_strided_slice %230 {offsets = [4, 0], sizes = [12, 8], strides = [1, 1]} : vector<16x8xf32> to vector<12x8xf32>
    %c12_283 = arith.constant 12 : index
    %c16_284 = arith.constant 16 : index
    %236 = vector.load %arg14[%c12_283, %c16_284] : memref<72x72xf32, #tpu.memory_space<vmem>>, vector<12x8xf32>
    tpu.vector_store %arg14[%c12_283, %c16_284], %235 {strides = array<i32>} : memref<72x72xf32, #tpu.memory_space<vmem>>, vector<12x8xf32>,
    %c32_285 = arith.constant 32 : index
    %c0_286 = arith.constant 0 : index
    %237 = vector.load %arg10[%c32_285, %c0_286] : memref<128x8xf32, #tpu.memory_space<vmem>>, vector<16x8xf32>
    %238 = vector.extract_strided_slice %237 {offsets = [0, 0], sizes = [12, 8], strides = [1, 1]} : vector<16x8xf32> to vector<12x8xf32>
    %c12_287 = arith.constant 12 : index
    %c24_288 = arith.constant 24 : index
    %239 = vector.load %arg14[%c12_287, %c24_288] : memref<72x72xf32, #tpu.memory_space<vmem>>, vector<12x8xf32>
    tpu.vector_store %arg14[%c12_287, %c24_288], %238 {strides = array<i32>} : memref<72x72xf32, #tpu.memory_space<vmem>>, vector<12x8xf32>,
    %240 = vector.extract_strided_slice %237 {offsets = [2, 0], sizes = [12, 8], strides = [1, 1]} : vector<16x8xf32> to vector<12x8xf32>
    %c12_289 = arith.constant 12 : index
    %c32_290 = arith.constant 32 : index
    %241 = vector.load %arg14[%c12_289, %c32_290] : memref<72x72xf32, #tpu.memory_space<vmem>>, vector<12x8xf32>
    tpu.vector_store %arg14[%c12_289, %c32_290], %240 {strides = array<i32>} : memref<72x72xf32, #tpu.memory_space<vmem>>, vector<12x8xf32>,
    %242 = vector.extract_strided_slice %237 {offsets = [4, 0], sizes = [12, 8], strides = [1, 1]} : vector<16x8xf32> to vector<12x8xf32>
    %c12_291 = arith.constant 12 : index
    %c40_292 = arith.constant 40 : index
    %243 = vector.load %arg14[%c12_291, %c40_292] : memref<72x72xf32, #tpu.memory_space<vmem>>, vector<12x8xf32>
    tpu.vector_store %arg14[%c12_291, %c40_292], %242 {strides = array<i32>} : memref<72x72xf32, #tpu.memory_space<vmem>>, vector<12x8xf32>,
    %c48_293 = arith.constant 48 : index
    %c0_294 = arith.constant 0 : index
    %244 = vector.load %arg10[%c48_293, %c0_294] : memref<128x8xf32, #tpu.memory_space<vmem>>, vector<16x8xf32>
    %245 = vector.extract_strided_slice %244 {offsets = [0, 0], sizes = [12, 8], strides = [1, 1]} : vector<16x8xf32> to vector<12x8xf32>
    %c12_295 = arith.constant 12 : index
    %c48_296 = arith.constant 48 : index
    %246 = vector.load %arg14[%c12_295, %c48_296] : memref<72x72xf32, #tpu.memory_space<vmem>>, vector<12x8xf32>
    tpu.vector_store %arg14[%c12_295, %c48_296], %245 {strides = array<i32>} : memref<72x72xf32, #tpu.memory_space<vmem>>, vector<12x8xf32>,
    %247 = vector.extract_strided_slice %244 {offsets = [2, 0], sizes = [12, 8], strides = [1, 1]} : vector<16x8xf32> to vector<12x8xf32>
    %c12_297 = arith.constant 12 : index
    %c56_298 = arith.constant 56 : index
    %248 = vector.load %arg14[%c12_297, %c56_298] : memref<72x72xf32, #tpu.memory_space<vmem>>, vector<12x8xf32>
    tpu.vector_store %arg14[%c12_297, %c56_298], %247 {strides = array<i32>} : memref<72x72xf32, #tpu.memory_space<vmem>>, vector<12x8xf32>,
    %249 = vector.extract_strided_slice %244 {offsets = [4, 0], sizes = [12, 8], strides = [1, 1]} : vector<16x8xf32> to vector<12x8xf32>
    %c12_299 = arith.constant 12 : index
    %c64_300 = arith.constant 64 : index
    %250 = vector.load %arg14[%c12_299, %c64_300] : memref<72x72xf32, #tpu.memory_space<vmem>>, vector<12x8xf32>
    tpu.vector_store %arg14[%c12_299, %c64_300], %249 {strides = array<i32>} : memref<72x72xf32, #tpu.memory_space<vmem>>, vector<12x8xf32>,
    %c32_301 = arith.constant 32 : index
    %c0_302 = arith.constant 0 : index
    %251 = vector.load %arg10[%c32_301, %c0_302] : memref<128x8xf32, #tpu.memory_space<vmem>>, vector<16x8xf32>
    %252 = vector.extract_strided_slice %251 {offsets = [0, 0], sizes = [12, 8], strides = [1, 1]} : vector<16x8xf32> to vector<12x8xf32>
    %c24_303 = arith.constant 24 : index
    %c0_304 = arith.constant 0 : index
    %253 = vector.load %arg14[%c24_303, %c0_304] : memref<72x72xf32, #tpu.memory_space<vmem>>, vector<12x8xf32>
    tpu.vector_store %arg14[%c24_303, %c0_304], %252 {strides = array<i32>} : memref<72x72xf32, #tpu.memory_space<vmem>>, vector<12x8xf32>,
    %254 = vector.extract_strided_slice %251 {offsets = [2, 0], sizes = [12, 8], strides = [1, 1]} : vector<16x8xf32> to vector<12x8xf32>
    %c24_305 = arith.constant 24 : index
    %c8_306 = arith.constant 8 : index
    %255 = vector.load %arg14[%c24_305, %c8_306] : memref<72x72xf32, #tpu.memory_space<vmem>>, vector<12x8xf32>
    tpu.vector_store %arg14[%c24_305, %c8_306], %254 {strides = array<i32>} : memref<72x72xf32, #tpu.memory_space<vmem>>, vector<12x8xf32>,
    %256 = vector.extract_strided_slice %251 {offsets = [4, 0], sizes = [12, 8], strides = [1, 1]} : vector<16x8xf32> to vector<12x8xf32>
    %c24_307 = arith.constant 24 : index
    %c16_308 = arith.constant 16 : index
    %257 = vector.load %arg14[%c24_307, %c16_308] : memref<72x72xf32, #tpu.memory_space<vmem>>, vector<12x8xf32>
    tpu.vector_store %arg14[%c24_307, %c16_308], %256 {strides = array<i32>} : memref<72x72xf32, #tpu.memory_space<vmem>>, vector<12x8xf32>,
    %c48_309 = arith.constant 48 : index
    %c0_310 = arith.constant 0 : index
    %258 = vector.load %arg10[%c48_309, %c0_310] : memref<128x8xf32, #tpu.memory_space<vmem>>, vector<16x8xf32>
    %259 = vector.extract_strided_slice %258 {offsets = [0, 0], sizes = [12, 8], strides = [1, 1]} : vector<16x8xf32> to vector<12x8xf32>
    %c24_311 = arith.constant 24 : index
    %c24_312 = arith.constant 24 : index
    %260 = vector.load %arg14[%c24_311, %c24_312] : memref<72x72xf32, #tpu.memory_space<vmem>>, vector<12x8xf32>
    tpu.vector_store %arg14[%c24_311, %c24_312], %259 {strides = array<i32>} : memref<72x72xf32, #tpu.memory_space<vmem>>, vector<12x8xf32>,
    %261 = vector.extract_strided_slice %258 {offsets = [2, 0], sizes = [12, 8], strides = [1, 1]} : vector<16x8xf32> to vector<12x8xf32>
    %c24_313 = arith.constant 24 : index
    %c32_314 = arith.constant 32 : index
    %262 = vector.load %arg14[%c24_313, %c32_314] : memref<72x72xf32, #tpu.memory_space<vmem>>, vector<12x8xf32>
    tpu.vector_store %arg14[%c24_313, %c32_314], %261 {strides = array<i32>} : memref<72x72xf32, #tpu.memory_space<vmem>>, vector<12x8xf32>,
    %263 = vector.extract_strided_slice %258 {offsets = [4, 0], sizes = [12, 8], strides = [1, 1]} : vector<16x8xf32> to vector<12x8xf32>
    %c24_315 = arith.constant 24 : index
    %c40_316 = arith.constant 40 : index
    %264 = vector.load %arg14[%c24_315, %c40_316] : memref<72x72xf32, #tpu.memory_space<vmem>>, vector<12x8xf32>
    tpu.vector_store %arg14[%c24_315, %c40_316], %263 {strides = array<i32>} : memref<72x72xf32, #tpu.memory_space<vmem>>, vector<12x8xf32>,
    %c64_317 = arith.constant 64 : index
    %c0_318 = arith.constant 0 : index
    %265 = vector.load %arg10[%c64_317, %c0_318] : memref<128x8xf32, #tpu.memory_space<vmem>>, vector<16x8xf32>
    %266 = vector.extract_strided_slice %265 {offsets = [0, 0], sizes = [12, 8], strides = [1, 1]} : vector<16x8xf32> to vector<12x8xf32>
    %c24_319 = arith.constant 24 : index
    %c48_320 = arith.constant 48 : index
    %267 = vector.load %arg14[%c24_319, %c48_320] : memref<72x72xf32, #tpu.memory_space<vmem>>, vector<12x8xf32>
    tpu.vector_store %arg14[%c24_319, %c48_320], %266 {strides = array<i32>} : memref<72x72xf32, #tpu.memory_space<vmem>>, vector<12x8xf32>,
    %268 = vector.extract_strided_slice %265 {offsets = [2, 0], sizes = [12, 8], strides = [1, 1]} : vector<16x8xf32> to vector<12x8xf32>
    %c24_321 = arith.constant 24 : index
    %c56_322 = arith.constant 56 : index
    %269 = vector.load %arg14[%c24_321, %c56_322] : memref<72x72xf32, #tpu.memory_space<vmem>>, vector<12x8xf32>
    tpu.vector_store %arg14[%c24_321, %c56_322], %268 {strides = array<i32>} : memref<72x72xf32, #tpu.memory_space<vmem>>, vector<12x8xf32>,
    %270 = vector.extract_strided_slice %265 {offsets = [4, 0], sizes = [12, 8], strides = [1, 1]} : vector<16x8xf32> to vector<12x8xf32>
    %c24_323 = arith.constant 24 : index
    %c64_324 = arith.constant 64 : index
    %271 = vector.load %arg14[%c24_323, %c64_324] : memref<72x72xf32, #tpu.memory_space<vmem>>, vector<12x8xf32>
    tpu.vector_store %arg14[%c24_323, %c64_324], %270 {strides = array<i32>} : memref<72x72xf32, #tpu.memory_space<vmem>>, vector<12x8xf32>,
    %c48_325 = arith.constant 48 : index
    %c0_326 = arith.constant 0 : index
    %272 = vector.load %arg10[%c48_325, %c0_326] : memref<128x8xf32, #tpu.memory_space<vmem>>, vector<16x8xf32>
    %273 = vector.extract_strided_slice %272 {offsets = [0, 0], sizes = [12, 8], strides = [1, 1]} : vector<16x8xf32> to vector<12x8xf32>
    %c36_327 = arith.constant 36 : index
    %c0_328 = arith.constant 0 : index
    %274 = vector.load %arg14[%c36_327, %c0_328] : memref<72x72xf32, #tpu.memory_space<vmem>>, vector<12x8xf32>
    tpu.vector_store %arg14[%c36_327, %c0_328], %273 {strides = array<i32>} : memref<72x72xf32, #tpu.memory_space<vmem>>, vector<12x8xf32>,
    %275 = vector.extract_strided_slice %272 {offsets = [2, 0], sizes = [12, 8], strides = [1, 1]} : vector<16x8xf32> to vector<12x8xf32>
    %c36_329 = arith.constant 36 : index
    %c8_330 = arith.constant 8 : index
    %276 = vector.load %arg14[%c36_329, %c8_330] : memref<72x72xf32, #tpu.memory_space<vmem>>, vector<12x8xf32>
    tpu.vector_store %arg14[%c36_329, %c8_330], %275 {strides = array<i32>} : memref<72x72xf32, #tpu.memory_space<vmem>>, vector<12x8xf32>,
    %277 = vector.extract_strided_slice %272 {offsets = [4, 0], sizes = [12, 8], strides = [1, 1]} : vector<16x8xf32> to vector<12x8xf32>
    %c36_331 = arith.constant 36 : index
    %c16_332 = arith.constant 16 : index
    %278 = vector.load %arg14[%c36_331, %c16_332] : memref<72x72xf32, #tpu.memory_space<vmem>>, vector<12x8xf32>
    tpu.vector_store %arg14[%c36_331, %c16_332], %277 {strides = array<i32>} : memref<72x72xf32, #tpu.memory_space<vmem>>, vector<12x8xf32>,
    %c64_333 = arith.constant 64 : index
    %c0_334 = arith.constant 0 : index
    %279 = vector.load %arg10[%c64_333, %c0_334] : memref<128x8xf32, #tpu.memory_space<vmem>>, vector<16x8xf32>
    %280 = vector.extract_strided_slice %279 {offsets = [0, 0], sizes = [12, 8], strides = [1, 1]} : vector<16x8xf32> to vector<12x8xf32>
    %c36_335 = arith.constant 36 : index
    %c24_336 = arith.constant 24 : index
    %281 = vector.load %arg14[%c36_335, %c24_336] : memref<72x72xf32, #tpu.memory_space<vmem>>, vector<12x8xf32>
    tpu.vector_store %arg14[%c36_335, %c24_336], %280 {strides = array<i32>} : memref<72x72xf32, #tpu.memory_space<vmem>>, vector<12x8xf32>,
    %282 = vector.extract_strided_slice %279 {offsets = [2, 0], sizes = [12, 8], strides = [1, 1]} : vector<16x8xf32> to vector<12x8xf32>
    %c36_337 = arith.constant 36 : index
    %c32_338 = arith.constant 32 : index
    %283 = vector.load %arg14[%c36_337, %c32_338] : memref<72x72xf32, #tpu.memory_space<vmem>>, vector<12x8xf32>
    tpu.vector_store %arg14[%c36_337, %c32_338], %282 {strides = array<i32>} : memref<72x72xf32, #tpu.memory_space<vmem>>, vector<12x8xf32>,
    %284 = vector.extract_strided_slice %279 {offsets = [4, 0], sizes = [12, 8], strides = [1, 1]} : vector<16x8xf32> to vector<12x8xf32>
    %c36_339 = arith.constant 36 : index
    %c40_340 = arith.constant 40 : index
    %285 = vector.load %arg14[%c36_339, %c40_340] : memref<72x72xf32, #tpu.memory_space<vmem>>, vector<12x8xf32>
    tpu.vector_store %arg14[%c36_339, %c40_340], %284 {strides = array<i32>} : memref<72x72xf32, #tpu.memory_space<vmem>>, vector<12x8xf32>,
    %c80_341 = arith.constant 80 : index
    %c0_342 = arith.constant 0 : index
    %286 = vector.load %arg10[%c80_341, %c0_342] : memref<128x8xf32, #tpu.memory_space<vmem>>, vector<16x8xf32>
    %287 = vector.extract_strided_slice %286 {offsets = [0, 0], sizes = [12, 8], strides = [1, 1]} : vector<16x8xf32> to vector<12x8xf32>
    %c36_343 = arith.constant 36 : index
    %c48_344 = arith.constant 48 : index
    %288 = vector.load %arg14[%c36_343, %c48_344] : memref<72x72xf32, #tpu.memory_space<vmem>>, vector<12x8xf32>
    tpu.vector_store %arg14[%c36_343, %c48_344], %287 {strides = array<i32>} : memref<72x72xf32, #tpu.memory_space<vmem>>, vector<12x8xf32>,
    %289 = vector.extract_strided_slice %286 {offsets = [2, 0], sizes = [12, 8], strides = [1, 1]} : vector<16x8xf32> to vector<12x8xf32>
    %c36_345 = arith.constant 36 : index
    %c56_346 = arith.constant 56 : index
    %290 = vector.load %arg14[%c36_345, %c56_346] : memref<72x72xf32, #tpu.memory_space<vmem>>, vector<12x8xf32>
    tpu.vector_store %arg14[%c36_345, %c56_346], %289 {strides = array<i32>} : memref<72x72xf32, #tpu.memory_space<vmem>>, vector<12x8xf32>,
    %291 = vector.extract_strided_slice %286 {offsets = [4, 0], sizes = [12, 8], strides = [1, 1]} : vector<16x8xf32> to vector<12x8xf32>
    %c36_347 = arith.constant 36 : index
    %c64_348 = arith.constant 64 : index
    %292 = vector.load %arg14[%c36_347, %c64_348] : memref<72x72xf32, #tpu.memory_space<vmem>>, vector<12x8xf32>
    tpu.vector_store %arg14[%c36_347, %c64_348], %291 {strides = array<i32>} : memref<72x72xf32, #tpu.memory_space<vmem>>, vector<12x8xf32>,
    %c64_349 = arith.constant 64 : index
    %c0_350 = arith.constant 0 : index
    %293 = vector.load %arg10[%c64_349, %c0_350] : memref<128x8xf32, #tpu.memory_space<vmem>>, vector<16x8xf32>
    %294 = vector.extract_strided_slice %293 {offsets = [0, 0], sizes = [12, 8], strides = [1, 1]} : vector<16x8xf32> to vector<12x8xf32>
    %c48_351 = arith.constant 48 : index
    %c0_352 = arith.constant 0 : index
    %295 = vector.load %arg14[%c48_351, %c0_352] : memref<72x72xf32, #tpu.memory_space<vmem>>, vector<12x8xf32>
    tpu.vector_store %arg14[%c48_351, %c0_352], %294 {strides = array<i32>} : memref<72x72xf32, #tpu.memory_space<vmem>>, vector<12x8xf32>,
    %296 = vector.extract_strided_slice %293 {offsets = [2, 0], sizes = [12, 8], strides = [1, 1]} : vector<16x8xf32> to vector<12x8xf32>
    %c48_353 = arith.constant 48 : index
    %c8_354 = arith.constant 8 : index
    %297 = vector.load %arg14[%c48_353, %c8_354] : memref<72x72xf32, #tpu.memory_space<vmem>>, vector<12x8xf32>
    tpu.vector_store %arg14[%c48_353, %c8_354], %296 {strides = array<i32>} : memref<72x72xf32, #tpu.memory_space<vmem>>, vector<12x8xf32>,
    %298 = vector.extract_strided_slice %293 {offsets = [4, 0], sizes = [12, 8], strides = [1, 1]} : vector<16x8xf32> to vector<12x8xf32>
    %c48_355 = arith.constant 48 : index
    %c16_356 = arith.constant 16 : index
    %299 = vector.load %arg14[%c48_355, %c16_356] : memref<72x72xf32, #tpu.memory_space<vmem>>, vector<12x8xf32>
    tpu.vector_store %arg14[%c48_355, %c16_356], %298 {strides = array<i32>} : memref<72x72xf32, #tpu.memory_space<vmem>>, vector<12x8xf32>,
    %c80_357 = arith.constant 80 : index
    %c0_358 = arith.constant 0 : index
    %300 = vector.load %arg10[%c80_357, %c0_358] : memref<128x8xf32, #tpu.memory_space<vmem>>, vector<16x8xf32>
    %301 = vector.extract_strided_slice %300 {offsets = [0, 0], sizes = [12, 8], strides = [1, 1]} : vector<16x8xf32> to vector<12x8xf32>
    %c48_359 = arith.constant 48 : index
    %c24_360 = arith.constant 24 : index
    %302 = vector.load %arg14[%c48_359, %c24_360] : memref<72x72xf32, #tpu.memory_space<vmem>>, vector<12x8xf32>
    tpu.vector_store %arg14[%c48_359, %c24_360], %301 {strides = array<i32>} : memref<72x72xf32, #tpu.memory_space<vmem>>, vector<12x8xf32>,
    %303 = vector.extract_strided_slice %300 {offsets = [2, 0], sizes = [12, 8], strides = [1, 1]} : vector<16x8xf32> to vector<12x8xf32>
    %c48_361 = arith.constant 48 : index
    %c32_362 = arith.constant 32 : index
    %304 = vector.load %arg14[%c48_361, %c32_362] : memref<72x72xf32, #tpu.memory_space<vmem>>, vector<12x8xf32>
    tpu.vector_store %arg14[%c48_361, %c32_362], %303 {strides = array<i32>} : memref<72x72xf32, #tpu.memory_space<vmem>>, vector<12x8xf32>,
    %305 = vector.extract_strided_slice %300 {offsets = [4, 0], sizes = [12, 8], strides = [1, 1]} : vector<16x8xf32> to vector<12x8xf32>
    %c48_363 = arith.constant 48 : index
    %c40_364 = arith.constant 40 : index
    %306 = vector.load %arg14[%c48_363, %c40_364] : memref<72x72xf32, #tpu.memory_space<vmem>>, vector<12x8xf32>
    tpu.vector_store %arg14[%c48_363, %c40_364], %305 {strides = array<i32>} : memref<72x72xf32, #tpu.memory_space<vmem>>, vector<12x8xf32>,
    %c96_365 = arith.constant 96 : index
    %c0_366 = arith.constant 0 : index
    %307 = vector.load %arg10[%c96_365, %c0_366] : memref<128x8xf32, #tpu.memory_space<vmem>>, vector<16x8xf32>
    %308 = vector.extract_strided_slice %307 {offsets = [0, 0], sizes = [12, 8], strides = [1, 1]} : vector<16x8xf32> to vector<12x8xf32>
    %c48_367 = arith.constant 48 : index
    %c48_368 = arith.constant 48 : index
    %309 = vector.load %arg14[%c48_367, %c48_368] : memref<72x72xf32, #tpu.memory_space<vmem>>, vector<12x8xf32>
    tpu.vector_store %arg14[%c48_367, %c48_368], %308 {strides = array<i32>} : memref<72x72xf32, #tpu.memory_space<vmem>>, vector<12x8xf32>,
    %310 = vector.extract_strided_slice %307 {offsets = [2, 0], sizes = [12, 8], strides = [1, 1]} : vector<16x8xf32> to vector<12x8xf32>
    %c48_369 = arith.constant 48 : index
    %c56_370 = arith.constant 56 : index
    %311 = vector.load %arg14[%c48_369, %c56_370] : memref<72x72xf32, #tpu.memory_space<vmem>>, vector<12x8xf32>
    tpu.vector_store %arg14[%c48_369, %c56_370], %310 {strides = array<i32>} : memref<72x72xf32, #tpu.memory_space<vmem>>, vector<12x8xf32>,
    %312 = vector.extract_strided_slice %307 {offsets = [4, 0], sizes = [12, 8], strides = [1, 1]} : vector<16x8xf32> to vector<12x8xf32>
    %c48_371 = arith.constant 48 : index
    %c64_372 = arith.constant 64 : index
    %313 = vector.load %arg14[%c48_371, %c64_372] : memref<72x72xf32, #tpu.memory_space<vmem>>, vector<12x8xf32>
    tpu.vector_store %arg14[%c48_371, %c64_372], %312 {strides = array<i32>} : memref<72x72xf32, #tpu.memory_space<vmem>>, vector<12x8xf32>,
    %c80_373 = arith.constant 80 : index
    %c0_374 = arith.constant 0 : index
    %314 = vector.load %arg10[%c80_373, %c0_374] : memref<128x8xf32, #tpu.memory_space<vmem>>, vector<16x8xf32>
    %315 = vector.extract_strided_slice %314 {offsets = [0, 0], sizes = [12, 8], strides = [1, 1]} : vector<16x8xf32> to vector<12x8xf32>
    %c60 = arith.constant 60 : index
    %c0_375 = arith.constant 0 : index
    %316 = vector.load %arg14[%c60, %c0_375] : memref<72x72xf32, #tpu.memory_space<vmem>>, vector<12x8xf32>
    tpu.vector_store %arg14[%c60, %c0_375], %315 {strides = array<i32>} : memref<72x72xf32, #tpu.memory_space<vmem>>, vector<12x8xf32>,
    %317 = vector.extract_strided_slice %314 {offsets = [2, 0], sizes = [12, 8], strides = [1, 1]} : vector<16x8xf32> to vector<12x8xf32>
    %c60_376 = arith.constant 60 : index
    %c8_377 = arith.constant 8 : index
    %318 = vector.load %arg14[%c60_376, %c8_377] : memref<72x72xf32, #tpu.memory_space<vmem>>, vector<12x8xf32>
    tpu.vector_store %arg14[%c60_376, %c8_377], %317 {strides = array<i32>} : memref<72x72xf32, #tpu.memory_space<vmem>>, vector<12x8xf32>,
    %319 = vector.extract_strided_slice %314 {offsets = [4, 0], sizes = [12, 8], strides = [1, 1]} : vector<16x8xf32> to vector<12x8xf32>
    %c60_378 = arith.constant 60 : index
    %c16_379 = arith.constant 16 : index
    %320 = vector.load %arg14[%c60_378, %c16_379] : memref<72x72xf32, #tpu.memory_space<vmem>>, vector<12x8xf32>
    tpu.vector_store %arg14[%c60_378, %c16_379], %319 {strides = array<i32>} : memref<72x72xf32, #tpu.memory_space<vmem>>, vector<12x8xf32>,
    %c96_380 = arith.constant 96 : index
    %c0_381 = arith.constant 0 : index
    %321 = vector.load %arg10[%c96_380, %c0_381] : memref<128x8xf32, #tpu.memory_space<vmem>>, vector<16x8xf32>
    %322 = vector.extract_strided_slice %321 {offsets = [0, 0], sizes = [12, 8], strides = [1, 1]} : vector<16x8xf32> to vector<12x8xf32>
    %c60_382 = arith.constant 60 : index
    %c24_383 = arith.constant 24 : index
    %323 = vector.load %arg14[%c60_382, %c24_383] : memref<72x72xf32, #tpu.memory_space<vmem>>, vector<12x8xf32>
    tpu.vector_store %arg14[%c60_382, %c24_383], %322 {strides = array<i32>} : memref<72x72xf32, #tpu.memory_space<vmem>>, vector<12x8xf32>,
    %324 = vector.extract_strided_slice %321 {offsets = [2, 0], sizes = [12, 8], strides = [1, 1]} : vector<16x8xf32> to vector<12x8xf32>
    %c60_384 = arith.constant 60 : index
    %c32_385 = arith.constant 32 : index
    %325 = vector.load %arg14[%c60_384, %c32_385] : memref<72x72xf32, #tpu.memory_space<vmem>>, vector<12x8xf32>
    tpu.vector_store %arg14[%c60_384, %c32_385], %324 {strides = array<i32>} : memref<72x72xf32, #tpu.memory_space<vmem>>, vector<12x8xf32>,
    %326 = vector.extract_strided_slice %321 {offsets = [4, 0], sizes = [12, 8], strides = [1, 1]} : vector<16x8xf32> to vector<12x8xf32>
    %c60_386 = arith.constant 60 : index
    %c40_387 = arith.constant 40 : index
    %327 = vector.load %arg14[%c60_386, %c40_387] : memref<72x72xf32, #tpu.memory_space<vmem>>, vector<12x8xf32>
    tpu.vector_store %arg14[%c60_386, %c40_387], %326 {strides = array<i32>} : memref<72x72xf32, #tpu.memory_space<vmem>>, vector<12x8xf32>,
    %c112_388 = arith.constant 112 : index
    %c0_389 = arith.constant 0 : index
    %328 = vector.load %arg10[%c112_388, %c0_389] : memref<128x8xf32, #tpu.memory_space<vmem>>, vector<16x8xf32>
    %329 = vector.extract_strided_slice %328 {offsets = [0, 0], sizes = [12, 8], strides = [1, 1]} : vector<16x8xf32> to vector<12x8xf32>
    %c60_390 = arith.constant 60 : index
    %c48_391 = arith.constant 48 : index
    %330 = vector.load %arg14[%c60_390, %c48_391] : memref<72x72xf32, #tpu.memory_space<vmem>>, vector<12x8xf32>
    tpu.vector_store %arg14[%c60_390, %c48_391], %329 {strides = array<i32>} : memref<72x72xf32, #tpu.memory_space<vmem>>, vector<12x8xf32>,
    %331 = vector.extract_strided_slice %328 {offsets = [2, 0], sizes = [12, 8], strides = [1, 1]} : vector<16x8xf32> to vector<12x8xf32>
    %c60_392 = arith.constant 60 : index
    %c56_393 = arith.constant 56 : index
    %332 = vector.load %arg14[%c60_392, %c56_393] : memref<72x72xf32, #tpu.memory_space<vmem>>, vector<12x8xf32>
    tpu.vector_store %arg14[%c60_392, %c56_393], %331 {strides = array<i32>} : memref<72x72xf32, #tpu.memory_space<vmem>>, vector<12x8xf32>,
    %333 = vector.extract_strided_slice %328 {offsets = [4, 0], sizes = [12, 8], strides = [1, 1]} : vector<16x8xf32> to vector<12x8xf32>
    %c60_394 = arith.constant 60 : index
    %c64_395 = arith.constant 64 : index
    %334 = vector.load %arg14[%c60_394, %c64_395] : memref<72x72xf32, #tpu.memory_space<vmem>>, vector<12x8xf32>
    tpu.vector_store %arg14[%c60_394, %c64_395], %333 {strides = array<i32>} : memref<72x72xf32, #tpu.memory_space<vmem>>, vector<12x8xf32>,
    %c0_396 = arith.constant 0 : index
    %c0_397 = arith.constant 0 : index
    %335 = vector.load %arg14[%c0_396, %c0_397] : memref<72x72xf32, #tpu.memory_space<vmem>>, vector<72x72xf32>
    %c0_398 = arith.constant 0 : index
    %c0_399 = arith.constant 0 : index
    %336 = vector.load %arg4[%c0_398, %c0_399] : memref<72x16xf32, #tpu.memory_space<vmem>>, vector<72x16xf32>
    %cst_400 = arith.constant dense<0.000000e+00> : vector<72x16xf32>
    %337 = tpu.matmul %335, %336, %cst_400 {dimension_numbers = #tpu.dot_dimension_numbers<[1], [0], [0], [1], [0, 0, 1, 1], [], []>} : vector<72x72xf32>, vector<72x16xf32>, vector<72x16xf32> -> vector<72x16xf32>
    %338 = vector.extract_strided_slice %0 {offsets = [4, 0], sizes = [1, 16], strides = [1, 1]} : vector<9x64xf32> to vector<1x16xf32>
    %339 = vector.extract_strided_slice %0 {offsets = [5, 0], sizes = [1, 16], strides = [1, 1]} : vector<9x64xf32> to vector<1x16xf32>
    %cst_401 = arith.constant dense<0.000000e+00> : vector<16xf32>
    %340 = vector.multi_reduction <add>, %337, %cst_401 [0] : vector<72x16xf32> to vector<16xf32>
    %341 = vector.shape_cast %340 : vector<16xf32> to vector<1x16xf32>
    %342 = arith.mulf %337, %337 : vector<72x16xf32>
    %cst_402 = arith.constant dense<0.000000e+00> : vector<16xf32>
    %343 = vector.multi_reduction <add>, %342, %cst_402 [0] : vector<72x16xf32> to vector<16xf32>
    %344 = vector.shape_cast %343 : vector<16xf32> to vector<1x16xf32>
    %cst_403 = arith.constant 0.013888889 : f32
    %345 = vector.broadcast %cst_403 : f32 to vector<1x16xf32>
    %346 = arith.mulf %341, %345 : vector<1x16xf32>
    %cst_404 = arith.constant 0.013888889 : f32
    %347 = vector.broadcast %cst_404 : f32 to vector<1x16xf32>
    %348 = arith.mulf %344, %347 : vector<1x16xf32>
    %349 = arith.mulf %346, %346 : vector<1x16xf32>
    %350 = arith.subf %348, %349 : vector<1x16xf32>
    %cst_405 = arith.constant 0.000000e+00 : f32
    %351 = vector.broadcast %cst_405 : f32 to vector<1x16xf32>
    %352 = arith.maximumf %350, %351 : vector<1x16xf32>
    %cst_406 = arith.constant 9.99999974E-6 : f32
    %353 = vector.broadcast %cst_406 : f32 to vector<1x16xf32>
    %354 = arith.addf %352, %353 : vector<1x16xf32>
    %355 = math.rsqrt %354 : vector<1x16xf32>
    %356 = arith.mulf %338, %355 : vector<1x16xf32>
    %357 = arith.mulf %346, %356 : vector<1x16xf32>
    %358 = arith.subf %339, %357 : vector<1x16xf32>
    %359 = vector.broadcast %356 : vector<1x16xf32> to vector<72x16xf32>
    %360 = arith.mulf %337, %359 : vector<72x16xf32>
    %361 = vector.broadcast %358 : vector<1x16xf32> to vector<72x16xf32>
    %362 = arith.addf %360, %361 : vector<72x16xf32>
    %cst_407 = arith.constant 2.000000e-02 : f32
    %363 = vector.broadcast %cst_407 : f32 to vector<72x16xf32>
    %364 = arith.mulf %363, %362 : vector<72x16xf32>
    %365 = arith.maximumf %362, %364 : vector<72x16xf32>
    %c0_408 = arith.constant 0 : index
    %c0_409 = arith.constant 0 : index
    %366 = vector.load %arg11[%c0_408, %c0_409] : memref<72x16xf32, #tpu.memory_space<vmem>>, vector<72x16xf32>
    tpu.vector_store %arg11[%c0_408, %c0_409], %365 {strides = array<i32>} : memref<72x16xf32, #tpu.memory_space<vmem>>, vector<72x16xf32>,
    %c0_410 = arith.constant 0 : index
    %c0_411 = arith.constant 0 : index
    %367 = vector.load %arg11[%c0_410, %c0_411] : memref<72x16xf32, #tpu.memory_space<vmem>>, vector<12x16xf32>
    %368 = vector.extract_strided_slice %367 {offsets = [0, 0], sizes = [8, 16], strides = [1, 1]} : vector<12x16xf32> to vector<8x16xf32>
    %c0_412 = arith.constant 0 : index
    %c0_413 = arith.constant 0 : index
    %369 = vector.load %arg15[%c0_412, %c0_413] : memref<32x144xf32, #tpu.memory_space<vmem>>, vector<8x16xf32>
    tpu.vector_store %arg15[%c0_412, %c0_413], %368 {strides = array<i32>} : memref<32x144xf32, #tpu.memory_space<vmem>>, vector<8x16xf32>,
    %370 = vector.extract_strided_slice %367 {offsets = [2, 0], sizes = [8, 16], strides = [1, 1]} : vector<12x16xf32> to vector<8x16xf32>
    %c0_414 = arith.constant 0 : index
    %c16_415 = arith.constant 16 : index
    %371 = vector.load %arg15[%c0_414, %c16_415] : memref<32x144xf32, #tpu.memory_space<vmem>>, vector<8x16xf32>
    tpu.vector_store %arg15[%c0_414, %c16_415], %370 {strides = array<i32>} : memref<32x144xf32, #tpu.memory_space<vmem>>, vector<8x16xf32>,
    %372 = vector.extract_strided_slice %367 {offsets = [4, 0], sizes = [8, 16], strides = [1, 1]} : vector<12x16xf32> to vector<8x16xf32>
    %c0_416 = arith.constant 0 : index
    %c32_417 = arith.constant 32 : index
    %373 = vector.load %arg15[%c0_416, %c32_417] : memref<32x144xf32, #tpu.memory_space<vmem>>, vector<8x16xf32>
    tpu.vector_store %arg15[%c0_416, %c32_417], %372 {strides = array<i32>} : memref<32x144xf32, #tpu.memory_space<vmem>>, vector<8x16xf32>,
    %c12_418 = arith.constant 12 : index
    %c0_419 = arith.constant 0 : index
    %374 = vector.load %arg11[%c12_418, %c0_419] : memref<72x16xf32, #tpu.memory_space<vmem>>, vector<12x16xf32>
    %375 = vector.extract_strided_slice %374 {offsets = [0, 0], sizes = [8, 16], strides = [1, 1]} : vector<12x16xf32> to vector<8x16xf32>
    %c0_420 = arith.constant 0 : index
    %c48_421 = arith.constant 48 : index
    %376 = vector.load %arg15[%c0_420, %c48_421] : memref<32x144xf32, #tpu.memory_space<vmem>>, vector<8x16xf32>
    tpu.vector_store %arg15[%c0_420, %c48_421], %375 {strides = array<i32>} : memref<32x144xf32, #tpu.memory_space<vmem>>, vector<8x16xf32>,
    %377 = vector.extract_strided_slice %374 {offsets = [2, 0], sizes = [8, 16], strides = [1, 1]} : vector<12x16xf32> to vector<8x16xf32>
    %c0_422 = arith.constant 0 : index
    %c64_423 = arith.constant 64 : index
    %378 = vector.load %arg15[%c0_422, %c64_423] : memref<32x144xf32, #tpu.memory_space<vmem>>, vector<8x16xf32>
    tpu.vector_store %arg15[%c0_422, %c64_423], %377 {strides = array<i32>} : memref<32x144xf32, #tpu.memory_space<vmem>>, vector<8x16xf32>,
    %379 = vector.extract_strided_slice %374 {offsets = [4, 0], sizes = [8, 16], strides = [1, 1]} : vector<12x16xf32> to vector<8x16xf32>
    %c0_424 = arith.constant 0 : index
    %c80_425 = arith.constant 80 : index
    %380 = vector.load %arg15[%c0_424, %c80_425] : memref<32x144xf32, #tpu.memory_space<vmem>>, vector<8x16xf32>
    tpu.vector_store %arg15[%c0_424, %c80_425], %379 {strides = array<i32>} : memref<32x144xf32, #tpu.memory_space<vmem>>, vector<8x16xf32>,
    %c24_426 = arith.constant 24 : index
    %c0_427 = arith.constant 0 : index
    %381 = vector.load %arg11[%c24_426, %c0_427] : memref<72x16xf32, #tpu.memory_space<vmem>>, vector<12x16xf32>
    %382 = vector.extract_strided_slice %381 {offsets = [0, 0], sizes = [8, 16], strides = [1, 1]} : vector<12x16xf32> to vector<8x16xf32>
    %c0_428 = arith.constant 0 : index
    %c96_429 = arith.constant 96 : index
    %383 = vector.load %arg15[%c0_428, %c96_429] : memref<32x144xf32, #tpu.memory_space<vmem>>, vector<8x16xf32>
    tpu.vector_store %arg15[%c0_428, %c96_429], %382 {strides = array<i32>} : memref<32x144xf32, #tpu.memory_space<vmem>>, vector<8x16xf32>,
    %384 = vector.extract_strided_slice %381 {offsets = [2, 0], sizes = [8, 16], strides = [1, 1]} : vector<12x16xf32> to vector<8x16xf32>
    %c0_430 = arith.constant 0 : index
    %c112_431 = arith.constant 112 : index
    %385 = vector.load %arg15[%c0_430, %c112_431] : memref<32x144xf32, #tpu.memory_space<vmem>>, vector<8x16xf32>
    tpu.vector_store %arg15[%c0_430, %c112_431], %384 {strides = array<i32>} : memref<32x144xf32, #tpu.memory_space<vmem>>, vector<8x16xf32>,
    %386 = vector.extract_strided_slice %381 {offsets = [4, 0], sizes = [8, 16], strides = [1, 1]} : vector<12x16xf32> to vector<8x16xf32>
    %c0_432 = arith.constant 0 : index
    %c128_433 = arith.constant 128 : index
    %387 = vector.load %arg15[%c0_432, %c128_433] : memref<32x144xf32, #tpu.memory_space<vmem>>, vector<8x16xf32>
    tpu.vector_store %arg15[%c0_432, %c128_433], %386 {strides = array<i32>} : memref<32x144xf32, #tpu.memory_space<vmem>>, vector<8x16xf32>,
    %c12_434 = arith.constant 12 : index
    %c0_435 = arith.constant 0 : index
    %388 = vector.load %arg11[%c12_434, %c0_435] : memref<72x16xf32, #tpu.memory_space<vmem>>, vector<12x16xf32>
    %389 = vector.extract_strided_slice %388 {offsets = [0, 0], sizes = [8, 16], strides = [1, 1]} : vector<12x16xf32> to vector<8x16xf32>
    %c8_436 = arith.constant 8 : index
    %c0_437 = arith.constant 0 : index
    %390 = vector.load %arg15[%c8_436, %c0_437] : memref<32x144xf32, #tpu.memory_space<vmem>>, vector<8x16xf32>
    tpu.vector_store %arg15[%c8_436, %c0_437], %389 {strides = array<i32>} : memref<32x144xf32, #tpu.memory_space<vmem>>, vector<8x16xf32>,
    %391 = vector.extract_strided_slice %388 {offsets = [2, 0], sizes = [8, 16], strides = [1, 1]} : vector<12x16xf32> to vector<8x16xf32>
    %c8_438 = arith.constant 8 : index
    %c16_439 = arith.constant 16 : index
    %392 = vector.load %arg15[%c8_438, %c16_439] : memref<32x144xf32, #tpu.memory_space<vmem>>, vector<8x16xf32>
    tpu.vector_store %arg15[%c8_438, %c16_439], %391 {strides = array<i32>} : memref<32x144xf32, #tpu.memory_space<vmem>>, vector<8x16xf32>,
    %393 = vector.extract_strided_slice %388 {offsets = [4, 0], sizes = [8, 16], strides = [1, 1]} : vector<12x16xf32> to vector<8x16xf32>
    %c8_440 = arith.constant 8 : index
    %c32_441 = arith.constant 32 : index
    %394 = vector.load %arg15[%c8_440, %c32_441] : memref<32x144xf32, #tpu.memory_space<vmem>>, vector<8x16xf32>
    tpu.vector_store %arg15[%c8_440, %c32_441], %393 {strides = array<i32>} : memref<32x144xf32, #tpu.memory_space<vmem>>, vector<8x16xf32>,
    %c24_442 = arith.constant 24 : index
    %c0_443 = arith.constant 0 : index
    %395 = vector.load %arg11[%c24_442, %c0_443] : memref<72x16xf32, #tpu.memory_space<vmem>>, vector<12x16xf32>
    %396 = vector.extract_strided_slice %395 {offsets = [0, 0], sizes = [8, 16], strides = [1, 1]} : vector<12x16xf32> to vector<8x16xf32>
    %c8_444 = arith.constant 8 : index
    %c48_445 = arith.constant 48 : index
    %397 = vector.load %arg15[%c8_444, %c48_445] : memref<32x144xf32, #tpu.memory_space<vmem>>, vector<8x16xf32>
    tpu.vector_store %arg15[%c8_444, %c48_445], %396 {strides = array<i32>} : memref<32x144xf32, #tpu.memory_space<vmem>>, vector<8x16xf32>,
    %398 = vector.extract_strided_slice %395 {offsets = [2, 0], sizes = [8, 16], strides = [1, 1]} : vector<12x16xf32> to vector<8x16xf32>
    %c8_446 = arith.constant 8 : index
    %c64_447 = arith.constant 64 : index
    %399 = vector.load %arg15[%c8_446, %c64_447] : memref<32x144xf32, #tpu.memory_space<vmem>>, vector<8x16xf32>
    tpu.vector_store %arg15[%c8_446, %c64_447], %398 {strides = array<i32>} : memref<32x144xf32, #tpu.memory_space<vmem>>, vector<8x16xf32>,
    %400 = vector.extract_strided_slice %395 {offsets = [4, 0], sizes = [8, 16], strides = [1, 1]} : vector<12x16xf32> to vector<8x16xf32>
    %c8_448 = arith.constant 8 : index
    %c80_449 = arith.constant 80 : index
    %401 = vector.load %arg15[%c8_448, %c80_449] : memref<32x144xf32, #tpu.memory_space<vmem>>, vector<8x16xf32>
    tpu.vector_store %arg15[%c8_448, %c80_449], %400 {strides = array<i32>} : memref<32x144xf32, #tpu.memory_space<vmem>>, vector<8x16xf32>,
    %c36_450 = arith.constant 36 : index
    %c0_451 = arith.constant 0 : index
    %402 = vector.load %arg11[%c36_450, %c0_451] : memref<72x16xf32, #tpu.memory_space<vmem>>, vector<12x16xf32>
    %403 = vector.extract_strided_slice %402 {offsets = [0, 0], sizes = [8, 16], strides = [1, 1]} : vector<12x16xf32> to vector<8x16xf32>
    %c8_452 = arith.constant 8 : index
    %c96_453 = arith.constant 96 : index
    %404 = vector.load %arg15[%c8_452, %c96_453] : memref<32x144xf32, #tpu.memory_space<vmem>>, vector<8x16xf32>
    tpu.vector_store %arg15[%c8_452, %c96_453], %403 {strides = array<i32>} : memref<32x144xf32, #tpu.memory_space<vmem>>, vector<8x16xf32>,
    %405 = vector.extract_strided_slice %402 {offsets = [2, 0], sizes = [8, 16], strides = [1, 1]} : vector<12x16xf32> to vector<8x16xf32>
    %c8_454 = arith.constant 8 : index
    %c112_455 = arith.constant 112 : index
    %406 = vector.load %arg15[%c8_454, %c112_455] : memref<32x144xf32, #tpu.memory_space<vmem>>, vector<8x16xf32>
    tpu.vector_store %arg15[%c8_454, %c112_455], %405 {strides = array<i32>} : memref<32x144xf32, #tpu.memory_space<vmem>>, vector<8x16xf32>,
    %407 = vector.extract_strided_slice %402 {offsets = [4, 0], sizes = [8, 16], strides = [1, 1]} : vector<12x16xf32> to vector<8x16xf32>
    %c8_456 = arith.constant 8 : index
    %c128_457 = arith.constant 128 : index
    %408 = vector.load %arg15[%c8_456, %c128_457] : memref<32x144xf32, #tpu.memory_space<vmem>>, vector<8x16xf32>
    tpu.vector_store %arg15[%c8_456, %c128_457], %407 {strides = array<i32>} : memref<32x144xf32, #tpu.memory_space<vmem>>, vector<8x16xf32>,
    %c24_458 = arith.constant 24 : index
    %c0_459 = arith.constant 0 : index
    %409 = vector.load %arg11[%c24_458, %c0_459] : memref<72x16xf32, #tpu.memory_space<vmem>>, vector<12x16xf32>
    %410 = vector.extract_strided_slice %409 {offsets = [0, 0], sizes = [8, 16], strides = [1, 1]} : vector<12x16xf32> to vector<8x16xf32>
    %c16_460 = arith.constant 16 : index
    %c0_461 = arith.constant 0 : index
    %411 = vector.load %arg15[%c16_460, %c0_461] : memref<32x144xf32, #tpu.memory_space<vmem>>, vector<8x16xf32>
    tpu.vector_store %arg15[%c16_460, %c0_461], %410 {strides = array<i32>} : memref<32x144xf32, #tpu.memory_space<vmem>>, vector<8x16xf32>,
    %412 = vector.extract_strided_slice %409 {offsets = [2, 0], sizes = [8, 16], strides = [1, 1]} : vector<12x16xf32> to vector<8x16xf32>
    %c16_462 = arith.constant 16 : index
    %c16_463 = arith.constant 16 : index
    %413 = vector.load %arg15[%c16_462, %c16_463] : memref<32x144xf32, #tpu.memory_space<vmem>>, vector<8x16xf32>
    tpu.vector_store %arg15[%c16_462, %c16_463], %412 {strides = array<i32>} : memref<32x144xf32, #tpu.memory_space<vmem>>, vector<8x16xf32>,
    %414 = vector.extract_strided_slice %409 {offsets = [4, 0], sizes = [8, 16], strides = [1, 1]} : vector<12x16xf32> to vector<8x16xf32>
    %c16_464 = arith.constant 16 : index
    %c32_465 = arith.constant 32 : index
    %415 = vector.load %arg15[%c16_464, %c32_465] : memref<32x144xf32, #tpu.memory_space<vmem>>, vector<8x16xf32>
    tpu.vector_store %arg15[%c16_464, %c32_465], %414 {strides = array<i32>} : memref<32x144xf32, #tpu.memory_space<vmem>>, vector<8x16xf32>,
    %c36_466 = arith.constant 36 : index
    %c0_467 = arith.constant 0 : index
    %416 = vector.load %arg11[%c36_466, %c0_467] : memref<72x16xf32, #tpu.memory_space<vmem>>, vector<12x16xf32>
    %417 = vector.extract_strided_slice %416 {offsets = [0, 0], sizes = [8, 16], strides = [1, 1]} : vector<12x16xf32> to vector<8x16xf32>
    %c16_468 = arith.constant 16 : index
    %c48_469 = arith.constant 48 : index
    %418 = vector.load %arg15[%c16_468, %c48_469] : memref<32x144xf32, #tpu.memory_space<vmem>>, vector<8x16xf32>
    tpu.vector_store %arg15[%c16_468, %c48_469], %417 {strides = array<i32>} : memref<32x144xf32, #tpu.memory_space<vmem>>, vector<8x16xf32>,
    %419 = vector.extract_strided_slice %416 {offsets = [2, 0], sizes = [8, 16], strides = [1, 1]} : vector<12x16xf32> to vector<8x16xf32>
    %c16_470 = arith.constant 16 : index
    %c64_471 = arith.constant 64 : index
    %420 = vector.load %arg15[%c16_470, %c64_471] : memref<32x144xf32, #tpu.memory_space<vmem>>, vector<8x16xf32>
    tpu.vector_store %arg15[%c16_470, %c64_471], %419 {strides = array<i32>} : memref<32x144xf32, #tpu.memory_space<vmem>>, vector<8x16xf32>,
    %421 = vector.extract_strided_slice %416 {offsets = [4, 0], sizes = [8, 16], strides = [1, 1]} : vector<12x16xf32> to vector<8x16xf32>
    %c16_472 = arith.constant 16 : index
    %c80_473 = arith.constant 80 : index
    %422 = vector.load %arg15[%c16_472, %c80_473] : memref<32x144xf32, #tpu.memory_space<vmem>>, vector<8x16xf32>
    tpu.vector_store %arg15[%c16_472, %c80_473], %421 {strides = array<i32>} : memref<32x144xf32, #tpu.memory_space<vmem>>, vector<8x16xf32>,
    %c48_474 = arith.constant 48 : index
    %c0_475 = arith.constant 0 : index
    %423 = vector.load %arg11[%c48_474, %c0_475] : memref<72x16xf32, #tpu.memory_space<vmem>>, vector<12x16xf32>
    %424 = vector.extract_strided_slice %423 {offsets = [0, 0], sizes = [8, 16], strides = [1, 1]} : vector<12x16xf32> to vector<8x16xf32>
    %c16_476 = arith.constant 16 : index
    %c96_477 = arith.constant 96 : index
    %425 = vector.load %arg15[%c16_476, %c96_477] : memref<32x144xf32, #tpu.memory_space<vmem>>, vector<8x16xf32>
    tpu.vector_store %arg15[%c16_476, %c96_477], %424 {strides = array<i32>} : memref<32x144xf32, #tpu.memory_space<vmem>>, vector<8x16xf32>,
    %426 = vector.extract_strided_slice %423 {offsets = [2, 0], sizes = [8, 16], strides = [1, 1]} : vector<12x16xf32> to vector<8x16xf32>
    %c16_478 = arith.constant 16 : index
    %c112_479 = arith.constant 112 : index
    %427 = vector.load %arg15[%c16_478, %c112_479] : memref<32x144xf32, #tpu.memory_space<vmem>>, vector<8x16xf32>
    tpu.vector_store %arg15[%c16_478, %c112_479], %426 {strides = array<i32>} : memref<32x144xf32, #tpu.memory_space<vmem>>, vector<8x16xf32>,
    %428 = vector.extract_strided_slice %423 {offsets = [4, 0], sizes = [8, 16], strides = [1, 1]} : vector<12x16xf32> to vector<8x16xf32>
    %c16_480 = arith.constant 16 : index
    %c128_481 = arith.constant 128 : index
    %429 = vector.load %arg15[%c16_480, %c128_481] : memref<32x144xf32, #tpu.memory_space<vmem>>, vector<8x16xf32>
    tpu.vector_store %arg15[%c16_480, %c128_481], %428 {strides = array<i32>} : memref<32x144xf32, #tpu.memory_space<vmem>>, vector<8x16xf32>,
    %c36_482 = arith.constant 36 : index
    %c0_483 = arith.constant 0 : index
    %430 = vector.load %arg11[%c36_482, %c0_483] : memref<72x16xf32, #tpu.memory_space<vmem>>, vector<12x16xf32>
    %431 = vector.extract_strided_slice %430 {offsets = [0, 0], sizes = [8, 16], strides = [1, 1]} : vector<12x16xf32> to vector<8x16xf32>
    %c24_484 = arith.constant 24 : index
    %c0_485 = arith.constant 0 : index
    %432 = vector.load %arg15[%c24_484, %c0_485] : memref<32x144xf32, #tpu.memory_space<vmem>>, vector<8x16xf32>
    tpu.vector_store %arg15[%c24_484, %c0_485], %431 {strides = array<i32>} : memref<32x144xf32, #tpu.memory_space<vmem>>, vector<8x16xf32>,
    %433 = vector.extract_strided_slice %430 {offsets = [2, 0], sizes = [8, 16], strides = [1, 1]} : vector<12x16xf32> to vector<8x16xf32>
    %c24_486 = arith.constant 24 : index
    %c16_487 = arith.constant 16 : index
    %434 = vector.load %arg15[%c24_486, %c16_487] : memref<32x144xf32, #tpu.memory_space<vmem>>, vector<8x16xf32>
    tpu.vector_store %arg15[%c24_486, %c16_487], %433 {strides = array<i32>} : memref<32x144xf32, #tpu.memory_space<vmem>>, vector<8x16xf32>,
    %435 = vector.extract_strided_slice %430 {offsets = [4, 0], sizes = [8, 16], strides = [1, 1]} : vector<12x16xf32> to vector<8x16xf32>
    %c24_488 = arith.constant 24 : index
    %c32_489 = arith.constant 32 : index
    %436 = vector.load %arg15[%c24_488, %c32_489] : memref<32x144xf32, #tpu.memory_space<vmem>>, vector<8x16xf32>
    tpu.vector_store %arg15[%c24_488, %c32_489], %435 {strides = array<i32>} : memref<32x144xf32, #tpu.memory_space<vmem>>, vector<8x16xf32>,
    %c48_490 = arith.constant 48 : index
    %c0_491 = arith.constant 0 : index
    %437 = vector.load %arg11[%c48_490, %c0_491] : memref<72x16xf32, #tpu.memory_space<vmem>>, vector<12x16xf32>
    %438 = vector.extract_strided_slice %437 {offsets = [0, 0], sizes = [8, 16], strides = [1, 1]} : vector<12x16xf32> to vector<8x16xf32>
    %c24_492 = arith.constant 24 : index
    %c48_493 = arith.constant 48 : index
    %439 = vector.load %arg15[%c24_492, %c48_493] : memref<32x144xf32, #tpu.memory_space<vmem>>, vector<8x16xf32>
    tpu.vector_store %arg15[%c24_492, %c48_493], %438 {strides = array<i32>} : memref<32x144xf32, #tpu.memory_space<vmem>>, vector<8x16xf32>,
    %440 = vector.extract_strided_slice %437 {offsets = [2, 0], sizes = [8, 16], strides = [1, 1]} : vector<12x16xf32> to vector<8x16xf32>
    %c24_494 = arith.constant 24 : index
    %c64_495 = arith.constant 64 : index
    %441 = vector.load %arg15[%c24_494, %c64_495] : memref<32x144xf32, #tpu.memory_space<vmem>>, vector<8x16xf32>
    tpu.vector_store %arg15[%c24_494, %c64_495], %440 {strides = array<i32>} : memref<32x144xf32, #tpu.memory_space<vmem>>, vector<8x16xf32>,
    %442 = vector.extract_strided_slice %437 {offsets = [4, 0], sizes = [8, 16], strides = [1, 1]} : vector<12x16xf32> to vector<8x16xf32>
    %c24_496 = arith.constant 24 : index
    %c80_497 = arith.constant 80 : index
    %443 = vector.load %arg15[%c24_496, %c80_497] : memref<32x144xf32, #tpu.memory_space<vmem>>, vector<8x16xf32>
    tpu.vector_store %arg15[%c24_496, %c80_497], %442 {strides = array<i32>} : memref<32x144xf32, #tpu.memory_space<vmem>>, vector<8x16xf32>,
    %c60_498 = arith.constant 60 : index
    %c0_499 = arith.constant 0 : index
    %444 = vector.load %arg11[%c60_498, %c0_499] : memref<72x16xf32, #tpu.memory_space<vmem>>, vector<12x16xf32>
    %445 = vector.extract_strided_slice %444 {offsets = [0, 0], sizes = [8, 16], strides = [1, 1]} : vector<12x16xf32> to vector<8x16xf32>
    %c24_500 = arith.constant 24 : index
    %c96_501 = arith.constant 96 : index
    %446 = vector.load %arg15[%c24_500, %c96_501] : memref<32x144xf32, #tpu.memory_space<vmem>>, vector<8x16xf32>
    tpu.vector_store %arg15[%c24_500, %c96_501], %445 {strides = array<i32>} : memref<32x144xf32, #tpu.memory_space<vmem>>, vector<8x16xf32>,
    %447 = vector.extract_strided_slice %444 {offsets = [2, 0], sizes = [8, 16], strides = [1, 1]} : vector<12x16xf32> to vector<8x16xf32>
    %c24_502 = arith.constant 24 : index
    %c112_503 = arith.constant 112 : index
    %448 = vector.load %arg15[%c24_502, %c112_503] : memref<32x144xf32, #tpu.memory_space<vmem>>, vector<8x16xf32>
    tpu.vector_store %arg15[%c24_502, %c112_503], %447 {strides = array<i32>} : memref<32x144xf32, #tpu.memory_space<vmem>>, vector<8x16xf32>,
    %449 = vector.extract_strided_slice %444 {offsets = [4, 0], sizes = [8, 16], strides = [1, 1]} : vector<12x16xf32> to vector<8x16xf32>
    %c24_504 = arith.constant 24 : index
    %c128_505 = arith.constant 128 : index
    %450 = vector.load %arg15[%c24_504, %c128_505] : memref<32x144xf32, #tpu.memory_space<vmem>>, vector<8x16xf32>
    tpu.vector_store %arg15[%c24_504, %c128_505], %449 {strides = array<i32>} : memref<32x144xf32, #tpu.memory_space<vmem>>, vector<8x16xf32>,
    %c0_506 = arith.constant 0 : index
    %c0_507 = arith.constant 0 : index
    %451 = vector.load %arg15[%c0_506, %c0_507] : memref<32x144xf32, #tpu.memory_space<vmem>>, vector<32x144xf32>
    %c0_508 = arith.constant 0 : index
    %c0_509 = arith.constant 0 : index
    %452 = vector.load %arg5[%c0_508, %c0_509] : memref<144x32xf32, #tpu.memory_space<vmem>>, vector<144x32xf32>
    %cst_510 = arith.constant dense<0.000000e+00> : vector<32x32xf32>
    %453 = tpu.matmul %451, %452, %cst_510 {dimension_numbers = #tpu.dot_dimension_numbers<[1], [0], [0], [1], [0, 0, 1, 1], [], []>} : vector<32x144xf32>, vector<144x32xf32>, vector<32x32xf32> -> vector<32x32xf32>
    %454 = vector.extract_strided_slice %0 {offsets = [6, 0], sizes = [1, 32], strides = [1, 1]} : vector<9x64xf32> to vector<1x32xf32>
    %455 = vector.extract_strided_slice %0 {offsets = [7, 0], sizes = [1, 32], strides = [1, 1]} : vector<9x64xf32> to vector<1x32xf32>
    %cst_511 = arith.constant dense<0.000000e+00> : vector<32xf32>
    %456 = vector.multi_reduction <add>, %453, %cst_511 [0] : vector<32x32xf32> to vector<32xf32>
    %457 = vector.shape_cast %456 : vector<32xf32> to vector<1x32xf32>
    %458 = arith.mulf %453, %453 : vector<32x32xf32>
    %cst_512 = arith.constant dense<0.000000e+00> : vector<32xf32>
    %459 = vector.multi_reduction <add>, %458, %cst_512 [0] : vector<32x32xf32> to vector<32xf32>
    %460 = vector.shape_cast %459 : vector<32xf32> to vector<1x32xf32>
    %cst_513 = arith.constant 3.125000e-02 : f32
    %461 = vector.broadcast %cst_513 : f32 to vector<1x32xf32>
    %462 = arith.mulf %457, %461 : vector<1x32xf32>
    %cst_514 = arith.constant 3.125000e-02 : f32
    %463 = vector.broadcast %cst_514 : f32 to vector<1x32xf32>
    %464 = arith.mulf %460, %463 : vector<1x32xf32>
    %465 = arith.mulf %462, %462 : vector<1x32xf32>
    %466 = arith.subf %464, %465 : vector<1x32xf32>
    %cst_515 = arith.constant 0.000000e+00 : f32
    %467 = vector.broadcast %cst_515 : f32 to vector<1x32xf32>
    %468 = arith.maximumf %466, %467 : vector<1x32xf32>
    %cst_516 = arith.constant 9.99999974E-6 : f32
    %469 = vector.broadcast %cst_516 : f32 to vector<1x32xf32>
    %470 = arith.addf %468, %469 : vector<1x32xf32>
    %471 = math.rsqrt %470 : vector<1x32xf32>
    %472 = arith.mulf %454, %471 : vector<1x32xf32>
    %473 = arith.mulf %462, %472 : vector<1x32xf32>
    %474 = arith.subf %455, %473 : vector<1x32xf32>
    %475 = vector.broadcast %472 : vector<1x32xf32> to vector<32x32xf32>
    %476 = arith.mulf %453, %475 : vector<32x32xf32>
    %477 = vector.broadcast %474 : vector<1x32xf32> to vector<32x32xf32>
    %478 = arith.addf %476, %477 : vector<32x32xf32>
    %cst_517 = arith.constant 2.000000e-02 : f32
    %479 = vector.broadcast %cst_517 : f32 to vector<32x32xf32>
    %480 = arith.mulf %479, %478 : vector<32x32xf32>
    %481 = arith.maximumf %478, %480 : vector<32x32xf32>
    %c0_518 = arith.constant 0 : index
    %c0_519 = arith.constant 0 : index
    %482 = vector.load %arg12[%c0_518, %c0_519] : memref<32x32xf32, #tpu.memory_space<vmem>>, vector<32x32xf32>
    tpu.vector_store %arg12[%c0_518, %c0_519], %481 {strides = array<i32>} : memref<32x32xf32, #tpu.memory_space<vmem>>, vector<32x32xf32>,
    %c0_520 = arith.constant 0 : index
    %c0_521 = arith.constant 0 : index
    %483 = vector.load %arg12[%c0_520, %c0_521] : memref<32x32xf32, #tpu.memory_space<vmem>>, vector<8x32xf32>
    %484 = vector.extract_strided_slice %483 {offsets = [0, 0], sizes = [4, 32], strides = [1, 1]} : vector<8x32xf32> to vector<4x32xf32>
    %c0_522 = arith.constant 0 : index
    %c0_523 = arith.constant 0 : index
    %485 = vector.load %arg16[%c0_522, %c0_523] : memref<8x288xf32, #tpu.memory_space<vmem>>, vector<4x32xf32>
    tpu.vector_store %arg16[%c0_522, %c0_523], %484 {strides = array<i32>} : memref<8x288xf32, #tpu.memory_space<vmem>>, vector<4x32xf32>,
    %486 = vector.extract_strided_slice %483 {offsets = [2, 0], sizes = [4, 32], strides = [1, 1]} : vector<8x32xf32> to vector<4x32xf32>
    %c0_524 = arith.constant 0 : index
    %c32_525 = arith.constant 32 : index
    %487 = vector.load %arg16[%c0_524, %c32_525] : memref<8x288xf32, #tpu.memory_space<vmem>>, vector<4x32xf32>
    tpu.vector_store %arg16[%c0_524, %c32_525], %486 {strides = array<i32>} : memref<8x288xf32, #tpu.memory_space<vmem>>, vector<4x32xf32>,
    %488 = vector.extract_strided_slice %483 {offsets = [4, 0], sizes = [4, 32], strides = [1, 1]} : vector<8x32xf32> to vector<4x32xf32>
    %c0_526 = arith.constant 0 : index
    %c64_527 = arith.constant 64 : index
    %489 = vector.load %arg16[%c0_526, %c64_527] : memref<8x288xf32, #tpu.memory_space<vmem>>, vector<4x32xf32>
    tpu.vector_store %arg16[%c0_526, %c64_527], %488 {strides = array<i32>} : memref<8x288xf32, #tpu.memory_space<vmem>>, vector<4x32xf32>,
    %c8_528 = arith.constant 8 : index
    %c0_529 = arith.constant 0 : index
    %490 = vector.load %arg12[%c8_528, %c0_529] : memref<32x32xf32, #tpu.memory_space<vmem>>, vector<8x32xf32>
    %491 = vector.extract_strided_slice %490 {offsets = [0, 0], sizes = [4, 32], strides = [1, 1]} : vector<8x32xf32> to vector<4x32xf32>
    %c0_530 = arith.constant 0 : index
    %c96_531 = arith.constant 96 : index
    %492 = vector.load %arg16[%c0_530, %c96_531] : memref<8x288xf32, #tpu.memory_space<vmem>>, vector<4x32xf32>
    tpu.vector_store %arg16[%c0_530, %c96_531], %491 {strides = array<i32>} : memref<8x288xf32, #tpu.memory_space<vmem>>, vector<4x32xf32>,
    %493 = vector.extract_strided_slice %490 {offsets = [2, 0], sizes = [4, 32], strides = [1, 1]} : vector<8x32xf32> to vector<4x32xf32>
    %c0_532 = arith.constant 0 : index
    %c128_533 = arith.constant 128 : index
    %494 = vector.load %arg16[%c0_532, %c128_533] : memref<8x288xf32, #tpu.memory_space<vmem>>, vector<4x32xf32>
    tpu.vector_store %arg16[%c0_532, %c128_533], %493 {strides = array<i32>} : memref<8x288xf32, #tpu.memory_space<vmem>>, vector<4x32xf32>,
    %495 = vector.extract_strided_slice %490 {offsets = [4, 0], sizes = [4, 32], strides = [1, 1]} : vector<8x32xf32> to vector<4x32xf32>
    %c0_534 = arith.constant 0 : index
    %c160 = arith.constant 160 : index
    %496 = vector.load %arg16[%c0_534, %c160] : memref<8x288xf32, #tpu.memory_space<vmem>>, vector<4x32xf32>
    tpu.vector_store %arg16[%c0_534, %c160], %495 {strides = array<i32>} : memref<8x288xf32, #tpu.memory_space<vmem>>, vector<4x32xf32>,
    %c16_535 = arith.constant 16 : index
    %c0_536 = arith.constant 0 : index
    %497 = vector.load %arg12[%c16_535, %c0_536] : memref<32x32xf32, #tpu.memory_space<vmem>>, vector<8x32xf32>
    %498 = vector.extract_strided_slice %497 {offsets = [0, 0], sizes = [4, 32], strides = [1, 1]} : vector<8x32xf32> to vector<4x32xf32>
    %c0_537 = arith.constant 0 : index
    %c192 = arith.constant 192 : index
    %499 = vector.load %arg16[%c0_537, %c192] : memref<8x288xf32, #tpu.memory_space<vmem>>, vector<4x32xf32>
    tpu.vector_store %arg16[%c0_537, %c192], %498 {strides = array<i32>} : memref<8x288xf32, #tpu.memory_space<vmem>>, vector<4x32xf32>,
    %500 = vector.extract_strided_slice %497 {offsets = [2, 0], sizes = [4, 32], strides = [1, 1]} : vector<8x32xf32> to vector<4x32xf32>
    %c0_538 = arith.constant 0 : index
    %c224 = arith.constant 224 : index
    %501 = vector.load %arg16[%c0_538, %c224] : memref<8x288xf32, #tpu.memory_space<vmem>>, vector<4x32xf32>
    tpu.vector_store %arg16[%c0_538, %c224], %500 {strides = array<i32>} : memref<8x288xf32, #tpu.memory_space<vmem>>, vector<4x32xf32>,
    %502 = vector.extract_strided_slice %497 {offsets = [4, 0], sizes = [4, 32], strides = [1, 1]} : vector<8x32xf32> to vector<4x32xf32>
    %c0_539 = arith.constant 0 : index
    %c256 = arith.constant 256 : index
    %503 = vector.load %arg16[%c0_539, %c256] : memref<8x288xf32, #tpu.memory_space<vmem>>, vector<4x32xf32>
    tpu.vector_store %arg16[%c0_539, %c256], %502 {strides = array<i32>} : memref<8x288xf32, #tpu.memory_space<vmem>>, vector<4x32xf32>,
    %c8_540 = arith.constant 8 : index
    %c0_541 = arith.constant 0 : index
    %504 = vector.load %arg12[%c8_540, %c0_541] : memref<32x32xf32, #tpu.memory_space<vmem>>, vector<8x32xf32>
    %505 = vector.extract_strided_slice %504 {offsets = [0, 0], sizes = [4, 32], strides = [1, 1]} : vector<8x32xf32> to vector<4x32xf32>
    %c4_542 = arith.constant 4 : index
    %c0_543 = arith.constant 0 : index
    %506 = vector.load %arg16[%c4_542, %c0_543] : memref<8x288xf32, #tpu.memory_space<vmem>>, vector<4x32xf32>
    tpu.vector_store %arg16[%c4_542, %c0_543], %505 {strides = array<i32>} : memref<8x288xf32, #tpu.memory_space<vmem>>, vector<4x32xf32>,
    %507 = vector.extract_strided_slice %504 {offsets = [2, 0], sizes = [4, 32], strides = [1, 1]} : vector<8x32xf32> to vector<4x32xf32>
    %c4_544 = arith.constant 4 : index
    %c32_545 = arith.constant 32 : index
    %508 = vector.load %arg16[%c4_544, %c32_545] : memref<8x288xf32, #tpu.memory_space<vmem>>, vector<4x32xf32>
    tpu.vector_store %arg16[%c4_544, %c32_545], %507 {strides = array<i32>} : memref<8x288xf32, #tpu.memory_space<vmem>>, vector<4x32xf32>,
    %509 = vector.extract_strided_slice %504 {offsets = [4, 0], sizes = [4, 32], strides = [1, 1]} : vector<8x32xf32> to vector<4x32xf32>
    %c4_546 = arith.constant 4 : index
    %c64_547 = arith.constant 64 : index
    %510 = vector.load %arg16[%c4_546, %c64_547] : memref<8x288xf32, #tpu.memory_space<vmem>>, vector<4x32xf32>
    tpu.vector_store %arg16[%c4_546, %c64_547], %509 {strides = array<i32>} : memref<8x288xf32, #tpu.memory_space<vmem>>, vector<4x32xf32>,
    %c16_548 = arith.constant 16 : index
    %c0_549 = arith.constant 0 : index
    %511 = vector.load %arg12[%c16_548, %c0_549] : memref<32x32xf32, #tpu.memory_space<vmem>>, vector<8x32xf32>
    %512 = vector.extract_strided_slice %511 {offsets = [0, 0], sizes = [4, 32], strides = [1, 1]} : vector<8x32xf32> to vector<4x32xf32>
    %c4_550 = arith.constant 4 : index
    %c96_551 = arith.constant 96 : index
    %513 = vector.load %arg16[%c4_550, %c96_551] : memref<8x288xf32, #tpu.memory_space<vmem>>, vector<4x32xf32>
    tpu.vector_store %arg16[%c4_550, %c96_551], %512 {strides = array<i32>} : memref<8x288xf32, #tpu.memory_space<vmem>>, vector<4x32xf32>,
    %514 = vector.extract_strided_slice %511 {offsets = [2, 0], sizes = [4, 32], strides = [1, 1]} : vector<8x32xf32> to vector<4x32xf32>
    %c4_552 = arith.constant 4 : index
    %c128_553 = arith.constant 128 : index
    %515 = vector.load %arg16[%c4_552, %c128_553] : memref<8x288xf32, #tpu.memory_space<vmem>>, vector<4x32xf32>
    tpu.vector_store %arg16[%c4_552, %c128_553], %514 {strides = array<i32>} : memref<8x288xf32, #tpu.memory_space<vmem>>, vector<4x32xf32>,
    %516 = vector.extract_strided_slice %511 {offsets = [4, 0], sizes = [4, 32], strides = [1, 1]} : vector<8x32xf32> to vector<4x32xf32>
    %c4_554 = arith.constant 4 : index
    %c160_555 = arith.constant 160 : index
    %517 = vector.load %arg16[%c4_554, %c160_555] : memref<8x288xf32, #tpu.memory_space<vmem>>, vector<4x32xf32>
    tpu.vector_store %arg16[%c4_554, %c160_555], %516 {strides = array<i32>} : memref<8x288xf32, #tpu.memory_space<vmem>>, vector<4x32xf32>,
    %c24_556 = arith.constant 24 : index
    %c0_557 = arith.constant 0 : index
    %518 = vector.load %arg12[%c24_556, %c0_557] : memref<32x32xf32, #tpu.memory_space<vmem>>, vector<8x32xf32>
    %519 = vector.extract_strided_slice %518 {offsets = [0, 0], sizes = [4, 32], strides = [1, 1]} : vector<8x32xf32> to vector<4x32xf32>
    %c4_558 = arith.constant 4 : index
    %c192_559 = arith.constant 192 : index
    %520 = vector.load %arg16[%c4_558, %c192_559] : memref<8x288xf32, #tpu.memory_space<vmem>>, vector<4x32xf32>
    tpu.vector_store %arg16[%c4_558, %c192_559], %519 {strides = array<i32>} : memref<8x288xf32, #tpu.memory_space<vmem>>, vector<4x32xf32>,
    %521 = vector.extract_strided_slice %518 {offsets = [2, 0], sizes = [4, 32], strides = [1, 1]} : vector<8x32xf32> to vector<4x32xf32>
    %c4_560 = arith.constant 4 : index
    %c224_561 = arith.constant 224 : index
    %522 = vector.load %arg16[%c4_560, %c224_561] : memref<8x288xf32, #tpu.memory_space<vmem>>, vector<4x32xf32>
    tpu.vector_store %arg16[%c4_560, %c224_561], %521 {strides = array<i32>} : memref<8x288xf32, #tpu.memory_space<vmem>>, vector<4x32xf32>,
    %523 = vector.extract_strided_slice %518 {offsets = [4, 0], sizes = [4, 32], strides = [1, 1]} : vector<8x32xf32> to vector<4x32xf32>
    %c4_562 = arith.constant 4 : index
    %c256_563 = arith.constant 256 : index
    %524 = vector.load %arg16[%c4_562, %c256_563] : memref<8x288xf32, #tpu.memory_space<vmem>>, vector<4x32xf32>
    tpu.vector_store %arg16[%c4_562, %c256_563], %523 {strides = array<i32>} : memref<8x288xf32, #tpu.memory_space<vmem>>, vector<4x32xf32>,
    %c0_564 = arith.constant 0 : index
    %c0_565 = arith.constant 0 : index
    %525 = vector.load %arg16[%c0_564, %c0_565] : memref<8x288xf32, #tpu.memory_space<vmem>>, vector<8x288xf32>
    %c0_566 = arith.constant 0 : index
    %c0_567 = arith.constant 0 : index
    %526 = vector.load %arg6[%c0_566, %c0_567] : memref<288x64xf32, #tpu.memory_space<vmem>>, vector<288x64xf32>
    %cst_568 = arith.constant dense<0.000000e+00> : vector<8x64xf32>
    %527 = tpu.matmul %525, %526, %cst_568 {dimension_numbers = #tpu.dot_dimension_numbers<[1], [0], [0], [1], [0, 0, 1, 1], [], []>} : vector<8x288xf32>, vector<288x64xf32>, vector<8x64xf32> -> vector<8x64xf32>
    %528 = vector.extract_strided_slice %0 {offsets = [8, 0], sizes = [1, 64], strides = [1, 1]} : vector<9x64xf32> to vector<1x64xf32>
    %529 = vector.broadcast %528 : vector<1x64xf32> to vector<8x64xf32>
    %530 = arith.addf %527, %529 : vector<8x64xf32>
    %c0_569 = arith.constant 0 : index
    %c0_570 = arith.constant 0 : index
    %531 = vector.load %arg8[%c0_569, %c0_570] : memref<8x64xf32, #tpu.memory_space<vmem>>, vector<8x64xf32>
    tpu.vector_store %arg8[%c0_569, %c0_570], %530 {strides = array<i32>} : memref<8x64xf32, #tpu.memory_space<vmem>>, vector<8x64xf32>,
    return
  }
  func.func @transform_0(%arg0: i32) -> (i32, i32) {
    %c0_i32 = arith.constant 0 : i32
    %c0_i32_0 = arith.constant 0 : i32
    %c0_i32_1 = arith.constant 0 : i32
    return %c0_i32, %c0_i32_0 : i32, i32
  }
  func.func @transform_1(%arg0: i32) -> (i32, i32) {
    %c0_i32 = arith.constant 0 : i32
    %c0_i32_0 = arith.constant 0 : i32
    %c0_i32_1 = arith.constant 0 : i32
    return %c0_i32, %c0_i32_0 : i32, i32
  }
  func.func @transform_2(%arg0: i32) -> (i32, i32) {
    %c0_i32 = arith.constant 0 : i32
    %c0_i32_0 = arith.constant 0 : i32
    %c0_i32_1 = arith.constant 0 : i32
    return %c0_i32, %c0_i32_0 : i32, i32
  }
  func.func @transform_3(%arg0: i32) -> (i32, i32) {
    %c0_i32 = arith.constant 0 : i32
    %c0_i32_0 = arith.constant 0 : i32
    %c0_i32_1 = arith.constant 0 : i32
    return %c0_i32, %c0_i32_0 : i32, i32
  }
  func.func @transform_4(%arg0: i32) -> (i32, i32) {
    %c0_i32 = arith.constant 0 : i32
    %c0_i32_0 = arith.constant 0 : i32
    %c0_i32_1 = arith.constant 0 : i32
    return %c0_i32, %c0_i32_0 : i32, i32
  }
  func.func @transform_5(%arg0: i32) -> (i32, i32) {
    %c0_i32 = arith.constant 0 : i32
    %c0_i32_0 = arith.constant 0 : i32
    %c0_i32_1 = arith.constant 0 : i32
    return %c0_i32, %c0_i32_0 : i32, i32
  }
  func.func @transform_6(%arg0: i32) -> (i32, i32) {
    %c0_i32 = arith.constant 0 : i32
    %c0_i32_0 = arith.constant 0 : i32
    %c0_i32_1 = arith.constant 0 : i32
    return %c0_i32, %c0_i32_0 : i32, i32
  }
  func.func @transform_7(%arg0: i32) -> (i32, i32) {
    %c0_i32 = arith.constant 0 : i32
    %c0_i32_0 = arith.constant 0 : i32
    %c0_i32_1 = arith.constant 0 : i32
    return %c0_i32, %c0_i32_0 : i32, i32
  }
}

</mosaic_0001>

<llo_original>
// kernel: _generator_z_forward_impl.1
$region0: #{_generator_z_forward_impl.1}
  #allocation0 [shape = 'u32[]', space=smem, size = 0x4, offset = 0x4, fixed_abs, tag = 'smem constant byte address 0x4 - core index']
  #allocation1 [shape = 'u32[72,128]{1,0:T(1,128)}', space=vmem, size = 0x9000, scoped, tag = 'internal scratch']
  #allocation2 [shape = 'f32[578,4]{1,0:T(8,128)}', space=vmem, size = 0x49000, scoped, tag = 'scratch operand']
  #allocation3 [shape = 'f32[128,8]{1,0:T(8,128)}', space=vmem, size = 0x10000, scoped, tag = 'scratch operand']
  #allocation4 [shape = 'f32[72,16]{1,0:T(8,128)}', space=vmem, size = 0x9000, scoped, tag = 'scratch operand']
  #allocation5 [shape = 'f32[32,32]{1,0:T(8,128)}', space=vmem, size = 0x4000, scoped, tag = 'scratch operand']
  #allocation6 [shape = 'f32[128,36]{1,0:T(8,128)}', space=vmem, size = 0x10000, scoped, tag = 'scratch operand']
  #allocation7 [shape = 'f32[72,72]{1,0:T(8,128)}', space=vmem, size = 0x9000, scoped, tag = 'scratch operand']
  #allocation8 [shape = 'f32[32,144]{1,0:T(8,128)}', space=vmem, size = 0x8000, scoped, tag = 'scratch operand']
  #allocation9 [shape = 'f32[8,288]{1,0:T(8,128)}', space=vmem, size = 0x3000, scoped, tag = 'scratch operand']
  %s0 = inlined_call_operand.vmem [shape: f32[578,9], index: 0, kind: input, shape index: {}]
  %s1 = inlined_call_operand.vmem [shape: f32[9,4], index: 1, kind: input, shape index: {}]
  %s2 = inlined_call_operand.vmem [shape: f32[36,8], index: 2, kind: input, shape index: {}]
  %s3 = inlined_call_operand.vmem [shape: f32[72,16], index: 3, kind: input, shape index: {}]
  %s4 = inlined_call_operand.vmem [shape: f32[144,32], index: 4, kind: input, shape index: {}]
  %s5 = inlined_call_operand.vmem [shape: f32[288,64], index: 5, kind: input, shape index: {}]
  %s6 = inlined_call_operand.vmem [shape: f32[9,64], index: 6, kind: input, shape index: {}]
  %s7 = inlined_call_operand.vmem [shape: f32[8,64], index: 7, kind: output, shape index: {}]
  %s8 = sld [smem:[#allocation0]]
  $region38: #{_generator_z_forward_impl.1} parent=0
    _
  %s10 = ssub.s32 1, %s8
  %s11 = scalar_select 0, %s10, %s8
  // Predicated region
  $region2: #{_generator_z_forward_impl.1} parent=0 // pred_check
    _
  $region3: #{_generator_z_forward_impl.1} parent=0 // pred_check_branch
    %13 = sbr.rel (0) target = $region5
  $region4: #{_generator_z_forward_impl.1} parent=0 // pred_region
    _
  $region5: #{_generator_z_forward_impl.1} parent=0 // pred_fallthru
    _
  // Predicated region
  $region6: #{_generator_z_forward_impl.1} parent=0 // pred_check
    _
  $region7: #{_generator_z_forward_impl.1} parent=0 // pred_check_branch
    %15 = sbr.rel (0) target = $region9
  $region8: #{_generator_z_forward_impl.1} parent=0 // pred_region
    _
  $region9: #{_generator_z_forward_impl.1} parent=0 // pred_fallthru
    _
  // Predicated region
  $region10: #{_generator_z_forward_impl.1} parent=0 // pred_check
    _
  $region11: #{_generator_z_forward_impl.1} parent=0 // pred_check_branch
    %17 = sbr.rel (0) target = $region13
  $region12: #{_generator_z_forward_impl.1} parent=0 // pred_region
    _
  $region13: #{_generator_z_forward_impl.1} parent=0 // pred_fallthru
    _
  // Predicated region
  $region14: #{_generator_z_forward_impl.1} parent=0 // pred_check
    _
  $region15: #{_generator_z_forward_impl.1} parent=0 // pred_check_branch
    %19 = sbr.rel (0) target = $region17
  $region16: #{_generator_z_forward_impl.1} parent=0 // pred_region
    _
  $region17: #{_generator_z_forward_impl.1} parent=0 // pred_fallthru
    _
  // Predicated region
  $region18: #{_generator_z_forward_impl.1} parent=0 // pred_check
    _
  $region19: #{_generator_z_forward_impl.1} parent=0 // pred_check_branch
    %21 = sbr.rel (0) target = $region21
  $region20: #{_generator_z_forward_impl.1} parent=0 // pred_region
    _
  $region21: #{_generator_z_forward_impl.1} parent=0 // pred_fallthru
    _
  // Predicated region
  $region22: #{_generator_z_forward_impl.1} parent=0 // pred_check
    _
  $region23: #{_generator_z_forward_impl.1} parent=0 // pred_check_branch
    %23 = sbr.rel (0) target = $region25
  $region24: #{_generator_z_forward_impl.1} parent=0 // pred_region
    _
  $region25: #{_generator_z_forward_impl.1} parent=0 // pred_fallthru
    _
  // Predicated region
  $region26: #{_generator_z_forward_impl.1} parent=0 // pred_check
    _
  $region27: #{_generator_z_forward_impl.1} parent=0 // pred_check_branch
    %25 = sbr.rel (0) target = $region29
  $region28: #{_generator_z_forward_impl.1} parent=0 // pred_region
    _
  $region29: #{_generator_z_forward_impl.1} parent=0 // pred_fallthru
    _
  %v26 = vld [vmem:[%s6] sm:$0xff]
  %v27 = vld [vmem:[%s6 + $0x8] sm:$0x1]
  %v28 = vld [vmem:[%s0] sm:$0xff]
  %v29 = vld [vmem:[%s0 + $0x8] sm:$0xff]
  %v30 = vld [vmem:[%s0 + $0x10] sm:$0xff]
  %v31 = vld [vmem:[%s0 + $0x18] sm:$0xff]
  %v32 = vld [vmem:[%s0 + $0x20] sm:$0xff]
  %v33 = vld [vmem:[%s0 + $0x28] sm:$0xff]
  %v34 = vld [vmem:[%s0 + $0x30] sm:$0xff]
  %v35 = vld [vmem:[%s0 + $0x38] sm:$0xff]
  %v36 = vld [vmem:[%s0 + $0x40] sm:$0xff]
  %v37 = vld [vmem:[%s0 + $0x48] sm:$0xff]
  %v38 = vld [vmem:[%s0 + $0x50] sm:$0xff]
  %v39 = vld [vmem:[%s0 + $0x58] sm:$0xff]
  %v40 = vld [vmem:[%s0 + $0x60] sm:$0xff]
  %v41 = vld [vmem:[%s0 + $0x68] sm:$0xff]
  %v42 = vld [vmem:[%s0 + $0x70] sm:$0xff]
  %v43 = vld [vmem:[%s0 + $0x78] sm:$0xff]
  %v44 = vld [vmem:[%s0 + $0x80] sm:$0xff]
  %v45 = vld [vmem:[%s0 + $0x88] sm:$0xff]
  %v46 = vld [vmem:[%s0 + $0x90] sm:$0xff]
  %v47 = vld [vmem:[%s0 + $0x98] sm:$0xff]
  %v48 = vld [vmem:[%s0 + $0xa0] sm:$0xff]
  %v49 = vld [vmem:[%s0 + $0xa8] sm:$0xff]
  %v50 = vld [vmem:[%s0 + $0xb0] sm:$0xff]
  %v51 = vld [vmem:[%s0 + $0xb8] sm:$0xff]
  %v52 = vld [vmem:[%s0 + $0xc0] sm:$0xff]
  %v53 = vld [vmem:[%s0 + $0xc8] sm:$0xff]
  %v54 = vld [vmem:[%s0 + $0xd0] sm:$0xff]
  %v55 = vld [vmem:[%s0 + $0xd8] sm:$0xff]
  %v56 = vld [vmem:[%s0 + $0xe0] sm:$0xff]
  %v57 = vld [vmem:[%s0 + $0xe8] sm:$0xff]
  %v58 = vld [vmem:[%s0 + $0xf0] sm:$0xff]
  %v59 = vld [vmem:[%s0 + $0xf8] sm:$0xff]
  %v60 = vld [vmem:[%s0 + $0x100] sm:$0xff]
  %v61 = vld [vmem:[%s0 + $0x108] sm:$0xff]
  %v62 = vld [vmem:[%s0 + $0x110] sm:$0xff]
  %v63 = vld [vmem:[%s0 + $0x118] sm:$0xff]
  %v64 = vld [vmem:[%s0 + $0x120] sm:$0xff]
  %v65 = vld [vmem:[%s0 + $0x128] sm:$0xff]
  %v66 = vld [vmem:[%s0 + $0x130] sm:$0xff]
  %v67 = vld [vmem:[%s0 + $0x138] sm:$0xff]
  %v68 = vld [vmem:[%s0 + $0x140] sm:$0xff]
  %v69 = vld [vmem:[%s0 + $0x148] sm:$0xff]
  %v70 = vld [vmem:[%s0 + $0x150] sm:$0xff]
  %v71 = vld [vmem:[%s0 + $0x158] sm:$0xff]
  %v72 = vld [vmem:[%s0 + $0x160] sm:$0xff]
  %v73 = vld [vmem:[%s0 + $0x168] sm:$0xff]
  %v74 = vld [vmem:[%s0 + $0x170] sm:$0xff]
  %v75 = vld [vmem:[%s0 + $0x178] sm:$0xff]
  %v76 = vld [vmem:[%s0 + $0x180] sm:$0xff]
  %v77 = vld [vmem:[%s0 + $0x188] sm:$0xff]
  %v78 = vld [vmem:[%s0 + $0x190] sm:$0xff]
  %v79 = vld [vmem:[%s0 + $0x198] sm:$0xff]
  %v80 = vld [vmem:[%s0 + $0x1a0] sm:$0xff]
  %v81 = vld [vmem:[%s0 + $0x1a8] sm:$0xff]
  %v82 = vld [vmem:[%s0 + $0x1b0] sm:$0xff]
  %v83 = vld [vmem:[%s0 + $0x1b8] sm:$0xff]
  %v84 = vld [vmem:[%s0 + $0x1c0] sm:$0xff]
  %v85 = vld [vmem:[%s0 + $0x1c8] sm:$0xff]
  %v86 = vld [vmem:[%s0 + $0x1d0] sm:$0xff]
  %v87 = vld [vmem:[%s0 + $0x1d8] sm:$0xff]
  %v88 = vld [vmem:[%s0 + $0x1e0] sm:$0xff]
  %v89 = vld [vmem:[%s0 + $0x1e8] sm:$0xff]
  %v90 = vld [vmem:[%s0 + $0x1f0] sm:$0xff]
  %v91 = vld [vmem:[%s0 + $0x1f8] sm:$0xff]
  %v92 = vld [vmem:[%s0 + $0x200] sm:$0xff]
  %v93 = vld [vmem:[%s0 + $0x208] sm:$0xff]
  %v94 = vld [vmem:[%s0 + $0x210] sm:$0xff]
  %v95 = vld [vmem:[%s0 + $0x218] sm:$0xff]
  %v96 = vld [vmem:[%s0 + $0x220] sm:$0xff]
  %v97 = vld [vmem:[%s0 + $0x228] sm:$0xff]
  %v98 = vld [vmem:[%s0 + $0x230] sm:$0xff]
  %v99 = vld [vmem:[%s0 + $0x238] sm:$0xff]
  %v100 = vld [vmem:[%s0 + $0x240] sm:$0x3]
  %v101 = vld [vmem:[%s1] sm:$0xff]
  %v102 = vld [vmem:[%s1 + $0x8] sm:$0x1]
  %vm103 = vcmask 72704
  %v105 = vsel %vm103, %v28, 0
  %v108 = vsel %vm103, %v29, 0
  %v111 = vsel %vm103, %v30, 0
  %v114 = vsel %vm103, %v31, 0
  %v117 = vsel %vm103, %v32, 0
  %v120 = vsel %vm103, %v33, 0
  %v123 = vsel %vm103, %v34, 0
  %v126 = vsel %vm103, %v35, 0
  %v129 = vsel %vm103, %v36, 0
  %v132 = vsel %vm103, %v37, 0
  %v135 = vsel %vm103, %v38, 0
  %v138 = vsel %vm103, %v39, 0
  %v141 = vsel %vm103, %v40, 0
  %v144 = vsel %vm103, %v41, 0
  %v147 = vsel %vm103, %v42, 0
  %v150 = vsel %vm103, %v43, 0
  %v153 = vsel %vm103, %v44, 0
  %v156 = vsel %vm103, %v45, 0
  %v159 = vsel %vm103, %v46, 0
  %v162 = vsel %vm103, %v47, 0
  %v165 = vsel %vm103, %v48, 0
  %v168 = vsel %vm103, %v49, 0
  %v171 = vsel %vm103, %v50, 0
  %v174 = vsel %vm103, %v51, 0
  %v177 = vsel %vm103, %v52, 0
  %v180 = vsel %vm103, %v53, 0
  %v183 = vsel %vm103, %v54, 0
  %v186 = vsel %vm103, %v55, 0
  %v189 = vsel %vm103, %v56, 0
  %v192 = vsel %vm103, %v57, 0
  %v195 = vsel %vm103, %v58, 0
  %v198 = vsel %vm103, %v59, 0
  %v201 = vsel %vm103, %v60, 0
  %v204 = vsel %vm103, %v61, 0
  %v207 = vsel %vm103, %v62, 0
  %v210 = vsel %vm103, %v63, 0
  %v213 = vsel %vm103, %v64, 0
  %v216 = vsel %vm103, %v65, 0
  %v219 = vsel %vm103, %v66, 0
  %v222 = vsel %vm103, %v67, 0
  %v225 = vsel %vm103, %v68, 0
  %v228 = vsel %vm103, %v69, 0
  %v231 = vsel %vm103, %v70, 0
  %v234 = vsel %vm103, %v71, 0
  %v237 = vsel %vm103, %v72, 0
  %v240 = vsel %vm103, %v73, 0
  %v243 = vsel %vm103, %v74, 0
  %v246 = vsel %vm103, %v75, 0
  %v249 = vsel %vm103, %v76, 0
  %v252 = vsel %vm103, %v77, 0
  %v255 = vsel %vm103, %v78, 0
  %v258 = vsel %vm103, %v79, 0
  %v261 = vsel %vm103, %v80, 0
  %v264 = vsel %vm103, %v81, 0
  %v267 = vsel %vm103, %v82, 0
  %v270 = vsel %vm103, %v83, 0
  %v273 = vsel %vm103, %v84, 0
  %v276 = vsel %vm103, %v85, 0
  %v279 = vsel %vm103, %v86, 0
  %v282 = vsel %vm103, %v87, 0
  %v285 = vsel %vm103, %v88, 0
  %v288 = vsel %vm103, %v89, 0
  %v291 = vsel %vm103, %v90, 0
  %v294 = vsel %vm103, %v91, 0
  %v297 = vsel %vm103, %v92, 0
  %v300 = vsel %vm103, %v93, 0
  %v303 = vsel %vm103, %v94, 0
  %v306 = vsel %vm103, %v95, 0
  %v309 = vsel %vm103, %v96, 0
  %v312 = vsel %vm103, %v97, 0
  %v315 = vsel %vm103, %v98, 0
  %v318 = vsel %vm103, %v99, 0
  %v321 = vsel %vm103, %v100, 0
  %vm323 = vcmask 1040384
  %v325 = vsel %vm323, %v102, 0
  %327 = vmatpush.msra.mxu0 0.0
  %328 = vmatpush.msra.mxu0 0.0
  %329 = vmatpush.msra.mxu0 0.0
  %330 = vmatpush.msra.mxu0 0.0
  %331 = vmatpush.msra.mxu0 0.0
  %332 = vmatpush.msra.mxu0 0.0
  %333 = vmatpush.msra.mxu0 0.0
  %334 = vmatpush.msra.mxu0 0.0
  %335 = vmatpush.msra.mxu0 0.0
  %336 = vmatpush.msra.mxu0 0.0
  %337 = vmatpush.msra.mxu0 0.0
  %338 = vmatpush.msra.mxu0 0.0
  %339 = vmatpush.msra.mxu0 0.0
  %340 = vmatpush.msra.mxu0 0.0
  %341 = vmatpush.msra.mxu0 %v325
  %342 = vmatpush.msra.mxu0 %v101
  %343 = vmatmul.f32.gmra.mxu0 %v105
  %v344 = vpop.f32.mrf.mxu0
  %v345 = vadd.f32 0.0, %v344
  %346 = vmatmul.f32.gmra.mxu0 %v108
  %v347 = vpop.f32.mrf.mxu0
  %v348 = vadd.f32 0.0, %v347
  %349 = vmatmul.f32.gmra.mxu0 %v111
  %v350 = vpop.f32.mrf.mxu0
  %v351 = vadd.f32 0.0, %v350
  %352 = vmatmul.f32.gmra.mxu0 %v114
  %v353 = vpop.f32.mrf.mxu0
  %v354 = vadd.f32 0.0, %v353
  %355 = vmatmul.f32.gmra.mxu0 %v117
  %v356 = vpop.f32.mrf.mxu0
  %v357 = vadd.f32 0.0, %v356
  %358 = vmatmul.f32.gmra.mxu0 %v120
  %v359 = vpop.f32.mrf.mxu0
  %v360 = vadd.f32 0.0, %v359
  %361 = vmatmul.f32.gmra.mxu0 %v123
  %v362 = vpop.f32.mrf.mxu0
  %v363 = vadd.f32 0.0, %v362
  %364 = vmatmul.f32.gmra.mxu0 %v126
  %v365 = vpop.f32.mrf.mxu0
  %v366 = vadd.f32 0.0, %v365
  %367 = vmatmul.f32.gmra.mxu0 %v129
  %v368 = vpop.f32.mrf.mxu0
  %v369 = vadd.f32 0.0, %v368
  %370 = vmatmul.f32.gmra.mxu0 %v132
  %v371 = vpop.f32.mrf.mxu0
  %v372 = vadd.f32 0.0, %v371
  %373 = vmatmul.f32.gmra.mxu0 %v135
  %v374 = vpop.f32.mrf.mxu0
  %v375 = vadd.f32 0.0, %v374
  %376 = vmatmul.f32.gmra.mxu0 %v138
  %v377 = vpop.f32.mrf.mxu0
  %v378 = vadd.f32 0.0, %v377
  %379 = vmatmul.f32.gmra.mxu0 %v141
  %v380 = vpop.f32.mrf.mxu0
  %v381 = vadd.f32 0.0, %v380
  %382 = vmatmul.f32.gmra.mxu0 %v144
  %v383 = vpop.f32.mrf.mxu0
  %v384 = vadd.f32 0.0, %v383
  %385 = vmatmul.f32.gmra.mxu0 %v147
  %v386 = vpop.f32.mrf.mxu0
  %v387 = vadd.f32 0.0, %v386
  %388 = vmatmul.f32.gmra.mxu0 %v150
  %v389 = vpop.f32.mrf.mxu0
  %v390 = vadd.f32 0.0, %v389
  %391 = vmatmul.f32.gmra.mxu0 %v153
  %v392 = vpop.f32.mrf.mxu0
  %v393 = vadd.f32 0.0, %v392
  %394 = vmatmul.f32.gmra.mxu0 %v156
  %v395 = vpop.f32.mrf.mxu0
  %v396 = vadd.f32 0.0, %v395
  %397 = vmatmul.f32.gmra.mxu0 %v159
  %v398 = vpop.f32.mrf.mxu0
  %v399 = vadd.f32 0.0, %v398
  %400 = vmatmul.f32.gmra.mxu0 %v162
  %v401 = vpop.f32.mrf.mxu0
  %v402 = vadd.f32 0.0, %v401
  %403 = vmatmul.f32.gmra.mxu0 %v165
  %v404 = vpop.f32.mrf.mxu0
  %v405 = vadd.f32 0.0, %v404
  %406 = vmatmul.f32.gmra.mxu0 %v168
  %v407 = vpop.f32.mrf.mxu0
  %v408 = vadd.f32 0.0, %v407
  %409 = vmatmul.f32.gmra.mxu0 %v171
  %v410 = vpop.f32.mrf.mxu0
  %v411 = vadd.f32 0.0, %v410
  %412 = vmatmul.f32.gmra.mxu0 %v174
  %v413 = vpop.f32.mrf.mxu0
  %v414 = vadd.f32 0.0, %v413
  %415 = vmatmul.f32.gmra.mxu0 %v177
  %v416 = vpop.f32.mrf.mxu0
  %v417 = vadd.f32 0.0, %v416
  %418 = vmatmul.f32.gmra.mxu0 %v180
  %v419 = vpop.f32.mrf.mxu0
  %v420 = vadd.f32 0.0, %v419
  %421 = vmatmul.f32.gmra.mxu0 %v183
  %v422 = vpop.f32.mrf.mxu0
  %v423 = vadd.f32 0.0, %v422
  %424 = vmatmul.f32.gmra.mxu0 %v186
  %v425 = vpop.f32.mrf.mxu0
  %v426 = vadd.f32 0.0, %v425
  %427 = vmatmul.f32.gmra.mxu0 %v189
  %v428 = vpop.f32.mrf.mxu0
  %v429 = vadd.f32 0.0, %v428
  %430 = vmatmul.f32.gmra.mxu0 %v192
  %v431 = vpop.f32.mrf.mxu0
  %v432 = vadd.f32 0.0, %v431
  %433 = vmatmul.f32.gmra.mxu0 %v195
  %v434 = vpop.f32.mrf.mxu0
  %v435 = vadd.f32 0.0, %v434
  %436 = vmatmul.f32.gmra.mxu0 %v198
  %v437 = vpop.f32.mrf.mxu0
  %v438 = vadd.f32 0.0, %v437
  %439 = vmatmul.f32.gmra.mxu0 %v201
  %v440 = vpop.f32.mrf.mxu0
  %v441 = vadd.f32 0.0, %v440
  %442 = vmatmul.f32.gmra.mxu0 %v204
  %v443 = vpop.f32.mrf.mxu0
  %v444 = vadd.f32 0.0, %v443
  %445 = vmatmul.f32.gmra.mxu0 %v207
  %v446 = vpop.f32.mrf.mxu0
  %v447 = vadd.f32 0.0, %v446
  %448 = vmatmul.f32.gmra.mxu0 %v210
  %v449 = vpop.f32.mrf.mxu0
  %v450 = vadd.f32 0.0, %v449
  %451 = vmatmul.f32.gmra.mxu0 %v213
  %v452 = vpop.f32.mrf.mxu0
  %v453 = vadd.f32 0.0, %v452
  %454 = vmatmul.f32.gmra.mxu0 %v216
  %v455 = vpop.f32.mrf.mxu0
  %v456 = vadd.f32 0.0, %v455
  %457 = vmatmul.f32.gmra.mxu0 %v219
  %v458 = vpop.f32.mrf.mxu0
  %v459 = vadd.f32 0.0, %v458
  %460 = vmatmul.f32.gmra.mxu0 %v222
  %v461 = vpop.f32.mrf.mxu0
  %v462 = vadd.f32 0.0, %v461
  %463 = vmatmul.f32.gmra.mxu0 %v225
  %v464 = vpop.f32.mrf.mxu0
  %v465 = vadd.f32 0.0, %v464
  %466 = vmatmul.f32.gmra.mxu0 %v228
  %v467 = vpop.f32.mrf.mxu0
  %v468 = vadd.f32 0.0, %v467
  %469 = vmatmul.f32.gmra.mxu0 %v231
  %v470 = vpop.f32.mrf.mxu0
  %v471 = vadd.f32 0.0, %v470
  %472 = vmatmul.f32.gmra.mxu0 %v234
  %v473 = vpop.f32.mrf.mxu0
  %v474 = vadd.f32 0.0, %v473
  %475 = vmatmul.f32.gmra.mxu0 %v237
  %v476 = vpop.f32.mrf.mxu0
  %v477 = vadd.f32 0.0, %v476
  %478 = vmatmul.f32.gmra.mxu0 %v240
  %v479 = vpop.f32.mrf.mxu0
  %v480 = vadd.f32 0.0, %v479
  %481 = vmatmul.f32.gmra.mxu0 %v243
  %v482 = vpop.f32.mrf.mxu0
  %v483 = vadd.f32 0.0, %v482
  %484 = vmatmul.f32.gmra.mxu0 %v246
  %v485 = vpop.f32.mrf.mxu0
  %v486 = vadd.f32 0.0, %v485
  %487 = vmatmul.f32.gmra.mxu0 %v249
  %v488 = vpop.f32.mrf.mxu0
  %v489 = vadd.f32 0.0, %v488
  %490 = vmatmul.f32.gmra.mxu0 %v252
  %v491 = vpop.f32.mrf.mxu0
  %v492 = vadd.f32 0.0, %v491
  %493 = vmatmul.f32.gmra.mxu0 %v255
  %v494 = vpop.f32.mrf.mxu0
  %v495 = vadd.f32 0.0, %v494
  %496 = vmatmul.f32.gmra.mxu0 %v258
  %v497 = vpop.f32.mrf.mxu0
  %v498 = vadd.f32 0.0, %v497
  %499 = vmatmul.f32.gmra.mxu0 %v261
  %v500 = vpop.f32.mrf.mxu0
  %v501 = vadd.f32 0.0, %v500
  %502 = vmatmul.f32.gmra.mxu0 %v264
  %v503 = vpop.f32.mrf.mxu0
  %v504 = vadd.f32 0.0, %v503
  %505 = vmatmul.f32.gmra.mxu0 %v267
  %v506 = vpop.f32.mrf.mxu0
  %v507 = vadd.f32 0.0, %v506
  %508 = vmatmul.f32.gmra.mxu0 %v270
  %v509 = vpop.f32.mrf.mxu0
  %v510 = vadd.f32 0.0, %v509
  %511 = vmatmul.f32.gmra.mxu0 %v273
  %v512 = vpop.f32.mrf.mxu0
  %v513 = vadd.f32 0.0, %v512
  %514 = vmatmul.f32.gmra.mxu0 %v276
  %v515 = vpop.f32.mrf.mxu0
  %v516 = vadd.f32 0.0, %v515
  %517 = vmatmul.f32.gmra.mxu0 %v279
  %v518 = vpop.f32.mrf.mxu0
  %v519 = vadd.f32 0.0, %v518
  %520 = vmatmul.f32.gmra.mxu0 %v282
  %v521 = vpop.f32.mrf.mxu0
  %v522 = vadd.f32 0.0, %v521
  %523 = vmatmul.f32.gmra.mxu0 %v285
  %v524 = vpop.f32.mrf.mxu0
  %v525 = vadd.f32 0.0, %v524
  %526 = vmatmul.f32.gmra.mxu0 %v288
  %v527 = vpop.f32.mrf.mxu0
  %v528 = vadd.f32 0.0, %v527
  %529 = vmatmul.f32.gmra.mxu0 %v291
  %v530 = vpop.f32.mrf.mxu0
  %v531 = vadd.f32 0.0, %v530
  %532 = vmatmul.f32.gmra.mxu0 %v294
  %v533 = vpop.f32.mrf.mxu0
  %v534 = vadd.f32 0.0, %v533
  %535 = vmatmul.f32.gmra.mxu0 %v297
  %v536 = vpop.f32.mrf.mxu0
  %v537 = vadd.f32 0.0, %v536
  %538 = vmatmul.f32.gmra.mxu0 %v300
  %v539 = vpop.f32.mrf.mxu0
  %v540 = vadd.f32 0.0, %v539
  %541 = vmatmul.f32.gmra.mxu0 %v303
  %v542 = vpop.f32.mrf.mxu0
  %v543 = vadd.f32 0.0, %v542
  %544 = vmatmul.f32.gmra.mxu0 %v306
  %v545 = vpop.f32.mrf.mxu0
  %v546 = vadd.f32 0.0, %v545
  %547 = vmatmul.f32.gmra.mxu0 %v309
  %v548 = vpop.f32.mrf.mxu0
  %v549 = vadd.f32 0.0, %v548
  %550 = vmatmul.f32.gmra.mxu0 %v312
  %v551 = vpop.f32.mrf.mxu0
  %v552 = vadd.f32 0.0, %v551
  %553 = vmatmul.f32.gmra.mxu0 %v315
  %v554 = vpop.f32.mrf.mxu0
  %v555 = vadd.f32 0.0, %v554
  %556 = vmatmul.f32.gmra.mxu0 %v318
  %v557 = vpop.f32.mrf.mxu0
  %v558 = vadd.f32 0.0, %v557
  %559 = vmatmul.f32.gmra.mxu0 %v321
  %v560 = vpop.f32.mrf.mxu0
  %v561 = vadd.f32 0.0, %v560
  %562 = vdwg.mxu0
  %vm563 = vcmask 31744
  %v564 = vsel %vm563, %v345, 0.0
  %v565 = vsel %vm563, %v348, 0.0
  %v566 = vadd.f32 %v564, %v565
  %v567 = vsel %vm563, %v351, 0.0
  %v568 = vadd.f32 %v566, %v567
  %v569 = vsel %vm563, %v354, 0.0
  %v570 = vadd.f32 %v568, %v569
  %v571 = vsel %vm563, %v357, 0.0
  %v572 = vadd.f32 %v570, %v571
  %v573 = vsel %vm563, %v360, 0.0
  %v574 = vadd.f32 %v572, %v573
  %v575 = vsel %vm563, %v363, 0.0
  %v576 = vadd.f32 %v574, %v575
  %v577 = vsel %vm563, %v366, 0.0
  %v578 = vadd.f32 %v576, %v577
  %v579 = vsel %vm563, %v369, 0.0
  %v580 = vadd.f32 %v578, %v579
  %v581 = vsel %vm563, %v372, 0.0
  %v582 = vadd.f32 %v580, %v581
  %v583 = vsel %vm563, %v375, 0.0
  %v584 = vadd.f32 %v582, %v583
  %v585 = vsel %vm563, %v378, 0.0
  %v586 = vadd.f32 %v584, %v585
  %v587 = vsel %vm563, %v381, 0.0
  %v588 = vadd.f32 %v586, %v587
  %v589 = vsel %vm563, %v384, 0.0
  %v590 = vadd.f32 %v588, %v589
  %v591 = vsel %vm563, %v387, 0.0
  %v592 = vadd.f32 %v590, %v591
  %v593 = vsel %vm563, %v390, 0.0
  %v594 = vadd.f32 %v592, %v593
  %v595 = vsel %vm563, %v393, 0.0
  %v596 = vadd.f32 %v594, %v595
  %v597 = vsel %vm563, %v396, 0.0
  %v598 = vadd.f32 %v596, %v597
  %v599 = vsel %vm563, %v399, 0.0
  %v600 = vadd.f32 %v598, %v599
  %v601 = vsel %vm563, %v402, 0.0
  %v602 = vadd.f32 %v600, %v601
  %v603 = vsel %vm563, %v405, 0.0
  %v604 = vadd.f32 %v602, %v603
  %v605 = vsel %vm563, %v408, 0.0
  %v606 = vadd.f32 %v604, %v605
  %v607 = vsel %vm563, %v411, 0.0
  %v608 = vadd.f32 %v606, %v607
  %v609 = vsel %vm563, %v414, 0.0
  %v610 = vadd.f32 %v608, %v609
  %v611 = vsel %vm563, %v417, 0.0
  %v612 = vadd.f32 %v610, %v611
  %v613 = vsel %vm563, %v420, 0.0
  %v614 = vadd.f32 %v612, %v613
  %v615 = vsel %vm563, %v423, 0.0
  %v616 = vadd.f32 %v614, %v615
  %v617 = vsel %vm563, %v426, 0.0
  %v618 = vadd.f32 %v616, %v617
  %v619 = vsel %vm563, %v429, 0.0
  %v620 = vadd.f32 %v618, %v619
  %v621 = vsel %vm563, %v432, 0.0
  %v622 = vadd.f32 %v620, %v621
  %v623 = vsel %vm563, %v435, 0.0
  %v624 = vadd.f32 %v622, %v623
  %v625 = vsel %vm563, %v438, 0.0
  %v626 = vadd.f32 %v624, %v625
  %v627 = vsel %vm563, %v441, 0.0
  %v628 = vadd.f32 %v626, %v627
  %v629 = vsel %vm563, %v444, 0.0
  %v630 = vadd.f32 %v628, %v629
  %v631 = vsel %vm563, %v447, 0.0
  %v632 = vadd.f32 %v630, %v631
  %v633 = vsel %vm563, %v450, 0.0
  %v634 = vadd.f32 %v632, %v633
  %v635 = vsel %vm563, %v453, 0.0
  %v636 = vadd.f32 %v634, %v635
  %v637 = vsel %vm563, %v456, 0.0
  %v638 = vadd.f32 %v636, %v637
  %v639 = vsel %vm563, %v459, 0.0
  %v640 = vadd.f32 %v638, %v639
  %v641 = vsel %vm563, %v462, 0.0
  %v642 = vadd.f32 %v640, %v641
  %v643 = vsel %vm563, %v465, 0.0
  %v644 = vadd.f32 %v642, %v643
  %v645 = vsel %vm563, %v468, 0.0
  %v646 = vadd.f32 %v644, %v645
  %v647 = vsel %vm563, %v471, 0.0
  %v648 = vadd.f32 %v646, %v647
  %v649 = vsel %vm563, %v474, 0.0
  %v650 = vadd.f32 %v648, %v649
  %v651 = vsel %vm563, %v477, 0.0
  %v652 = vadd.f32 %v650, %v651
  %v653 = vsel %vm563, %v480, 0.0
  %v654 = vadd.f32 %v652, %v653
  %v655 = vsel %vm563, %v483, 0.0
  %v656 = vadd.f32 %v654, %v655
  %v657 = vsel %vm563, %v486, 0.0
  %v658 = vadd.f32 %v656, %v657
  %v659 = vsel %vm563, %v489, 0.0
  %v660 = vadd.f32 %v658, %v659
  %v661 = vsel %vm563, %v492, 0.0
  %v662 = vadd.f32 %v660, %v661
  %v663 = vsel %vm563, %v495, 0.0
  %v664 = vadd.f32 %v662, %v663
  %v665 = vsel %vm563, %v498, 0.0
  %v666 = vadd.f32 %v664, %v665
  %v667 = vsel %vm563, %v501, 0.0
  %v668 = vadd.f32 %v666, %v667
  %v669 = vsel %vm563, %v504, 0.0
  %v670 = vadd.f32 %v668, %v669
  %v671 = vsel %vm563, %v507, 0.0
  %v672 = vadd.f32 %v670, %v671
  %v673 = vsel %vm563, %v510, 0.0
  %v674 = vadd.f32 %v672, %v673
  %v675 = vsel %vm563, %v513, 0.0
  %v676 = vadd.f32 %v674, %v675
  %v677 = vsel %vm563, %v516, 0.0
  %v678 = vadd.f32 %v676, %v677
  %v679 = vsel %vm563, %v519, 0.0
  %v680 = vadd.f32 %v678, %v679
  %v681 = vsel %vm563, %v522, 0.0
  %v682 = vadd.f32 %v680, %v681
  %v683 = vsel %vm563, %v525, 0.0
  %v684 = vadd.f32 %v682, %v683
  %v685 = vsel %vm563, %v528, 0.0
  %v686 = vadd.f32 %v684, %v685
  %v687 = vsel %vm563, %v531, 0.0
  %v688 = vadd.f32 %v686, %v687
  %v689 = vsel %vm563, %v534, 0.0
  %v690 = vadd.f32 %v688, %v689
  %v691 = vsel %vm563, %v537, 0.0
  %v692 = vadd.f32 %v690, %v691
  %v693 = vsel %vm563, %v540, 0.0
  %v694 = vadd.f32 %v692, %v693
  %v695 = vsel %vm563, %v543, 0.0
  %v696 = vadd.f32 %v694, %v695
  %v697 = vsel %vm563, %v546, 0.0
  %v698 = vadd.f32 %v696, %v697
  %v699 = vsel %vm563, %v549, 0.0
  %v700 = vadd.f32 %v698, %v699
  %v701 = vsel %vm563, %v552, 0.0
  %v702 = vadd.f32 %v700, %v701
  %v703 = vsel %vm563, %v555, 0.0
  %v704 = vadd.f32 %v702, %v703
  %v705 = vsel %vm563, %v558, 0.0
  %v706 = vadd.f32 %v704, %v705
  %vm707 = vcmask 25600
  %v708 = vsel %vm707, %v561, 0.0
  %v709 = vadd.f32 %v706, %v708
  %v710 = vrot.slane %v709, 4
  %v711 = vadd.f32 %v709, %v710
  %v712 = vrot.slane %v711, 2
  %v713 = vadd.f32 %v711, %v712
  %v714 = vrot.slane %v713, 1
  %v715 = vadd.f32 %v713, %v714
  %v716 = vmul.f32 %v345, %v345
  %v717 = vmul.f32 %v348, %v348
  %v718 = vmul.f32 %v351, %v351
  %v719 = vmul.f32 %v354, %v354
  %v720 = vmul.f32 %v357, %v357
  %v721 = vmul.f32 %v360, %v360
  %v722 = vmul.f32 %v363, %v363
  %v723 = vmul.f32 %v366, %v366
  %v724 = vmul.f32 %v369, %v369
  %v725 = vmul.f32 %v372, %v372
  %v726 = vmul.f32 %v375, %v375
  %v727 = vmul.f32 %v378, %v378
  %v728 = vmul.f32 %v381, %v381
  %v729 = vmul.f32 %v384, %v384
  %v730 = vmul.f32 %v387, %v387
  %v731 = vmul.f32 %v390, %v390
  %v732 = vmul.f32 %v393, %v393
  %v733 = vmul.f32 %v396, %v396
  %v734 = vmul.f32 %v399, %v399
  %v735 = vmul.f32 %v402, %v402
  %v736 = vmul.f32 %v405, %v405
  %v737 = vmul.f32 %v408, %v408
  %v738 = vmul.f32 %v411, %v411
  %v739 = vmul.f32 %v414, %v414
  %v740 = vmul.f32 %v417, %v417
  %v741 = vmul.f32 %v420, %v420
  %v742 = vmul.f32 %v423, %v423
  %v743 = vmul.f32 %v426, %v426
  %v744 = vmul.f32 %v429, %v429
  %v745 = vmul.f32 %v432, %v432
  %v746 = vmul.f32 %v435, %v435
  %v747 = vmul.f32 %v438, %v438
  %v748 = vmul.f32 %v441, %v441
  %v749 = vmul.f32 %v444, %v444
  %v750 = vmul.f32 %v447, %v447
  %v751 = vmul.f32 %v450, %v450
  %v752 = vmul.f32 %v453, %v453
  %v753 = vmul.f32 %v456, %v456
  %v754 = vmul.f32 %v459, %v459
  %v755 = vmul.f32 %v462, %v462
  %v756 = vmul.f32 %v465, %v465
  %v757 = vmul.f32 %v468, %v468
  %v758 = vmul.f32 %v471, %v471
  %v759 = vmul.f32 %v474, %v474
  %v760 = vmul.f32 %v477, %v477
  %v761 = vmul.f32 %v480, %v480
  %v762 = vmul.f32 %v483, %v483
  %v763 = vmul.f32 %v486, %v486
  %v764 = vmul.f32 %v489, %v489
  %v765 = vmul.f32 %v492, %v492
  %v766 = vmul.f32 %v495, %v495
  %v767 = vmul.f32 %v498, %v498
  %v768 = vmul.f32 %v501, %v501
  %v769 = vmul.f32 %v504, %v504
  %v770 = vmul.f32 %v507, %v507
  %v771 = vmul.f32 %v510, %v510
  %v772 = vmul.f32 %v513, %v513
  %v773 = vmul.f32 %v516, %v516
  %v774 = vmul.f32 %v519, %v519
  %v775 = vmul.f32 %v522, %v522
  %v776 = vmul.f32 %v525, %v525
  %v777 = vmul.f32 %v528, %v528
  %v778 = vmul.f32 %v531, %v531
  %v779 = vmul.f32 %v534, %v534
  %v780 = vmul.f32 %v537, %v537
  %v781 = vmul.f32 %v540, %v540
  %v782 = vmul.f32 %v543, %v543
  %v783 = vmul.f32 %v546, %v546
  %v784 = vmul.f32 %v549, %v549
  %v785 = vmul.f32 %v552, %v552
  %v786 = vmul.f32 %v555, %v555
  %v787 = vmul.f32 %v558, %v558
  %v788 = vmul.f32 %v561, %v561
  %v789 = vsel %vm563, %v716, 0.0
  %v790 = vsel %vm563, %v717, 0.0
  %v791 = vadd.f32 %v789, %v790
  %v792 = vsel %vm563, %v718, 0.0
  %v793 = vadd.f32 %v791, %v792
  %v794 = vsel %vm563, %v719, 0.0
  %v795 = vadd.f32 %v793, %v794
  %v796 = vsel %vm563, %v720, 0.0
  %v797 = vadd.f32 %v795, %v796
  %v798 = vsel %vm563, %v721, 0.0
  %v799 = vadd.f32 %v797, %v798
  %v800 = vsel %vm563, %v722, 0.0
  %v801 = vadd.f32 %v799, %v800
  %v802 = vsel %vm563, %v723, 0.0
  %v803 = vadd.f32 %v801, %v802
  %v804 = vsel %vm563, %v724, 0.0
  %v805 = vadd.f32 %v803, %v804
  %v806 = vsel %vm563, %v725, 0.0
  %v807 = vadd.f32 %v805, %v806
  %v808 = vsel %vm563, %v726, 0.0
  %v809 = vadd.f32 %v807, %v808
  %v810 = vsel %vm563, %v727, 0.0
  %v811 = vadd.f32 %v809, %v810
  %v812 = vsel %vm563, %v728, 0.0
  %v813 = vadd.f32 %v811, %v812
  %v814 = vsel %vm563, %v729, 0.0
  %v815 = vadd.f32 %v813, %v814
  %v816 = vsel %vm563, %v730, 0.0
  %v817 = vadd.f32 %v815, %v816
  %v818 = vsel %vm563, %v731, 0.0
  %v819 = vadd.f32 %v817, %v818
  %v820 = vsel %vm563, %v732, 0.0
  %v821 = vadd.f32 %v819, %v820
  %v822 = vsel %vm563, %v733, 0.0
  %v823 = vadd.f32 %v821, %v822
  %v824 = vsel %vm563, %v734, 0.0
  %v825 = vadd.f32 %v823, %v824
  %v826 = vsel %vm563, %v735, 0.0
  %v827 = vadd.f32 %v825, %v826
  %v828 = vsel %vm563, %v736, 0.0
  %v829 = vadd.f32 %v827, %v828
  %v830 = vsel %vm563, %v737, 0.0
  %v831 = vadd.f32 %v829, %v830
  %v832 = vsel %vm563, %v738, 0.0
  %v833 = vadd.f32 %v831, %v832
  %v834 = vsel %vm563, %v739, 0.0
  %v835 = vadd.f32 %v833, %v834
  %v836 = vsel %vm563, %v740, 0.0
  %v837 = vadd.f32 %v835, %v836
  %v838 = vsel %vm563, %v741, 0.0
  %v839 = vadd.f32 %v837, %v838
  %v840 = vsel %vm563, %v742, 0.0
  %v841 = vadd.f32 %v839, %v840
  %v842 = vsel %vm563, %v743, 0.0
  %v843 = vadd.f32 %v841, %v842
  %v844 = vsel %vm563, %v744, 0.0
  %v845 = vadd.f32 %v843, %v844
  %v846 = vsel %vm563, %v745, 0.0
  %v847 = vadd.f32 %v845, %v846
  %v848 = vsel %vm563, %v746, 0.0
  %v849 = vadd.f32 %v847, %v848
  %v850 = vsel %vm563, %v747, 0.0
  %v851 = vadd.f32 %v849, %v850
  %v852 = vsel %vm563, %v748, 0.0
  %v853 = vadd.f32 %v851, %v852
  %v854 = vsel %vm563, %v749, 0.0
  %v855 = vadd.f32 %v853, %v854
  %v856 = vsel %vm563, %v750, 0.0
  %v857 = vadd.f32 %v855, %v856
  %v858 = vsel %vm563, %v751, 0.0
  %v859 = vadd.f32 %v857, %v858
  %v860 = vsel %vm563, %v752, 0.0
  %v861 = vadd.f32 %v859, %v860
  %v862 = vsel %vm563, %v753, 0.0
  %v863 = vadd.f32 %v861, %v862
  %v864 = vsel %vm563, %v754, 0.0
  %v865 = vadd.f32 %v863, %v864
  %v866 = vsel %vm563, %v755, 0.0
  %v867 = vadd.f32 %v865, %v866
  %v868 = vsel %vm563, %v756, 0.0
  %v869 = vadd.f32 %v867, %v868
  %v870 = vsel %vm563, %v757, 0.0
  %v871 = vadd.f32 %v869, %v870
  %v872 = vsel %vm563, %v758, 0.0
  %v873 = vadd.f32 %v871, %v872
  %v874 = vsel %vm563, %v759, 0.0
  %v875 = vadd.f32 %v873, %v874
  %v876 = vsel %vm563, %v760, 0.0
  %v877 = vadd.f32 %v875, %v876
  %v878 = vsel %vm563, %v761, 0.0
  %v879 = vadd.f32 %v877, %v878
  %v880 = vsel %vm563, %v762, 0.0
  %v881 = vadd.f32 %v879, %v880
  %v882 = vsel %vm563, %v763, 0.0
  %v883 = vadd.f32 %v881, %v882
  %v884 = vsel %vm563, %v764, 0.0
  %v885 = vadd.f32 %v883, %v884
  %v886 = vsel %vm563, %v765, 0.0
  %v887 = vadd.f32 %v885, %v886
  %v888 = vsel %vm563, %v766, 0.0
  %v889 = vadd.f32 %v887, %v888
  %v890 = vsel %vm563, %v767, 0.0
  %v891 = vadd.f32 %v889, %v890
  %v892 = vsel %vm563, %v768, 0.0
  %v893 = vadd.f32 %v891, %v892
  %v894 = vsel %vm563, %v769, 0.0
  %v895 = vadd.f32 %v893, %v894
  %v896 = vsel %vm563, %v770, 0.0
  %v897 = vadd.f32 %v895, %v896
  %v898 = vsel %vm563, %v771, 0.0
  %v899 = vadd.f32 %v897, %v898
  %v900 = vsel %vm563, %v772, 0.0
  %v901 = vadd.f32 %v899, %v900
  %v902 = vsel %vm563, %v773, 0.0
  %v903 = vadd.f32 %v901, %v902
  %v904 = vsel %vm563, %v774, 0.0
  %v905 = vadd.f32 %v903, %v904
  %v906 = vsel %vm563, %v775, 0.0
  %v907 = vadd.f32 %v905, %v906
  %v908 = vsel %vm563, %v776, 0.0
  %v909 = vadd.f32 %v907, %v908
  %v910 = vsel %vm563, %v777, 0.0
  %v911 = vadd.f32 %v909, %v910
  %v912 = vsel %vm563, %v778, 0.0
  %v913 = vadd.f32 %v911, %v912
  %v914 = vsel %vm563, %v779, 0.0
  %v915 = vadd.f32 %v913, %v914
  %v916 = vsel %vm563, %v780, 0.0
  %v917 = vadd.f32 %v915, %v916
  %v918 = vsel %vm563, %v781, 0.0
  %v919 = vadd.f32 %v917, %v918
  %v920 = vsel %vm563, %v782, 0.0
  %v921 = vadd.f32 %v919, %v920
  %v922 = vsel %vm563, %v783, 0.0
  %v923 = vadd.f32 %v921, %v922
  %v924 = vsel %vm563, %v784, 0.0
  %v925 = vadd.f32 %v923, %v924
  %v926 = vsel %vm563, %v785, 0.0
  %v927 = vadd.f32 %v925, %v926
  %v928 = vsel %vm563, %v786, 0.0
  %v929 = vadd.f32 %v927, %v928
  %v930 = vsel %vm563, %v787, 0.0
  %v931 = vadd.f32 %v929, %v930
  %v932 = vsel %vm707, %v788, 0.0
  %v933 = vadd.f32 %v931, %v932
  %v934 = vrot.slane %v933, 4
  %v935 = vadd.f32 %v933, %v934
  %v936 = vrot.slane %v935, 2
  %v937 = vadd.f32 %v935, %v936
  %v938 = vrot.slane %v937, 1
  %v939 = vadd.f32 %v937, %v938
  %v940 = vmul.f32 %v715, 0.0017301039
  %v941 = vmul.f32 %v939, 0.0017301039
  %v942 = vmul.f32 %v940, %v940
  %v943 = vsub.f32 %v941, %v942
  %v944 = vmax.f32 %v943, 0.0
  %v945 = vadd.f32 %v944, 1e-05
  %v946 = vrsqrt.pop %v945
  %v947 = vmul.f32 %v946, %v945
  %v948 = vmul.f32 %v947, %v946
  %v949 = vmul.f32 0.5, %v948
  %v950 = vsub.f32 1.5, %v949
  %v951 = vmul.f32 %v946, %v950
  %vm952 = vweird.f32 %v945
  %vm953 = vweird.f32 %v946
  %vm954 = vmor %vm952, %vm953
  %v955 = vsel %vm954, %v946, %v951
  %v956 = vmul.f32 %v26, %v955
  %v957 = vmul.f32 %v940, %v956
  %v959 = vrot.slane %v957, 7
  %v961 = vsub.f32 %v26, %v959
  %v962 = vperm.slane %v956, 0
  %v963 = vmul.f32 %v345, %v962
  %v964 = vmul.f32 %v348, %v962
  %v965 = vmul.f32 %v351, %v962
  %v966 = vmul.f32 %v354, %v962
  %v967 = vmul.f32 %v357, %v962
  %v968 = vmul.f32 %v360, %v962
  %v969 = vmul.f32 %v363, %v962
  %v970 = vmul.f32 %v366, %v962
  %v971 = vmul.f32 %v369, %v962
  %v972 = vmul.f32 %v372, %v962
  %v973 = vmul.f32 %v375, %v962
  %v974 = vmul.f32 %v378, %v962
  %v975 = vmul.f32 %v381, %v962
  %v976 = vmul.f32 %v384, %v962
  %v977 = vmul.f32 %v387, %v962
  %v978 = vmul.f32 %v390, %v962
  %v979 = vmul.f32 %v393, %v962
  %v980 = vmul.f32 %v396, %v962
  %v981 = vmul.f32 %v399, %v962
  %v982 = vmul.f32 %v402, %v962
  %v983 = vmul.f32 %v405, %v962
  %v984 = vmul.f32 %v408, %v962
  %v985 = vmul.f32 %v411, %v962
  %v986 = vmul.f32 %v414, %v962
  %v987 = vmul.f32 %v417, %v962
  %v988 = vmul.f32 %v420, %v962
  %v989 = vmul.f32 %v423, %v962
  %v990 = vmul.f32 %v426, %v962
  %v991 = vmul.f32 %v429, %v962
  %v992 = vmul.f32 %v432, %v962
  %v993 = vmul.f32 %v435, %v962
  %v994 = vmul.f32 %v438, %v962
  %v995 = vmul.f32 %v441, %v962
  %v996 = vmul.f32 %v444, %v962
  %v997 = vmul.f32 %v447, %v962
  %v998 = vmul.f32 %v450, %v962
  %v999 = vmul.f32 %v453, %v962
  %v1000 = vmul.f32 %v456, %v962
  %v1001 = vmul.f32 %v459, %v962
  %v1002 = vmul.f32 %v462, %v962
  %v1003 = vmul.f32 %v465, %v962
  %v1004 = vmul.f32 %v468, %v962
  %v1005 = vmul.f32 %v471, %v962
  %v1006 = vmul.f32 %v474, %v962
  %v1007 = vmul.f32 %v477, %v962
  %v1008 = vmul.f32 %v480, %v962
  %v1009 = vmul.f32 %v483, %v962
  %v1010 = vmul.f32 %v486, %v962
  %v1011 = vmul.f32 %v489, %v962
  %v1012 = vmul.f32 %v492, %v962
  %v1013 = vmul.f32 %v495, %v962
  %v1014 = vmul.f32 %v498, %v962
  %v1015 = vmul.f32 %v501, %v962
  %v1016 = vmul.f32 %v504, %v962
  %v1017 = vmul.f32 %v507, %v962
  %v1018 = vmul.f32 %v510, %v962
  %v1019 = vmul.f32 %v513, %v962
  %v1020 = vmul.f32 %v516, %v962
  %v1021 = vmul.f32 %v519, %v962
  %v1022 = vmul.f32 %v522, %v962
  %v1023 = vmul.f32 %v525, %v962
  %v1024 = vmul.f32 %v528, %v962
  %v1025 = vmul.f32 %v531, %v962
  %v1026 = vmul.f32 %v534, %v962
  %v1027 = vmul.f32 %v537, %v962
  %v1028 = vmul.f32 %v540, %v962
  %v1029 = vmul.f32 %v543, %v962
  %v1030 = vmul.f32 %v546, %v962
  %v1031 = vmul.f32 %v549, %v962
  %v1032 = vmul.f32 %v552, %v962
  %v1033 = vmul.f32 %v555, %v962
  %v1034 = vmul.f32 %v558, %v962
  %v1035 = vmul.f32 %v561, %v962
  %v1036 = vperm.slane %v961, 1
  %v1037 = vadd.f32 %v963, %v1036
  %v1038 = vadd.f32 %v964, %v1036
  %v1039 = vadd.f32 %v965, %v1036
  %v1040 = vadd.f32 %v966, %v1036
  %v1041 = vadd.f32 %v967, %v1036
  %v1042 = vadd.f32 %v968, %v1036
  %v1043 = vadd.f32 %v969, %v1036
  %v1044 = vadd.f32 %v970, %v1036
  %v1045 = vadd.f32 %v971, %v1036
  %v1046 = vadd.f32 %v972, %v1036
  %v1047 = vadd.f32 %v973, %v1036
  %v1048 = vadd.f32 %v974, %v1036
  %v1049 = vadd.f32 %v975, %v1036
  %v1050 = vadd.f32 %v976, %v1036
  %v1051 = vadd.f32 %v977, %v1036
  %v1052 = vadd.f32 %v978, %v1036
  %v1053 = vadd.f32 %v979, %v1036
  %v1054 = vadd.f32 %v980, %v1036
  %v1055 = vadd.f32 %v981, %v1036
  %v1056 = vadd.f32 %v982, %v1036
  %v1057 = vadd.f32 %v983, %v1036
  %v1058 = vadd.f32 %v984, %v1036
  %v1059 = vadd.f32 %v985, %v1036
  %v1060 = vadd.f32 %v986, %v1036
  %v1061 = vadd.f32 %v987, %v1036
  %v1062 = vadd.f32 %v988, %v1036
  %v1063 = vadd.f32 %v989, %v1036
  %v1064 = vadd.f32 %v990, %v1036
  %v1065 = vadd.f32 %v991, %v1036
  %v1066 = vadd.f32 %v992, %v1036
  %v1067 = vadd.f32 %v993, %v1036
  %v1068 = vadd.f32 %v994, %v1036
  %v1069 = vadd.f32 %v995, %v1036
  %v1070 = vadd.f32 %v996, %v1036
  %v1071 = vadd.f32 %v997, %v1036
  %v1072 = vadd.f32 %v998, %v1036
  %v1073 = vadd.f32 %v999, %v1036
  %v1074 = vadd.f32 %v1000, %v1036
  %v1075 = vadd.f32 %v1001, %v1036
  %v1076 = vadd.f32 %v1002, %v1036
  %v1077 = vadd.f32 %v1003, %v1036
  %v1078 = vadd.f32 %v1004, %v1036
  %v1079 = vadd.f32 %v1005, %v1036
  %v1080 = vadd.f32 %v1006, %v1036
  %v1081 = vadd.f32 %v1007, %v1036
  %v1082 = vadd.f32 %v1008, %v1036
  %v1083 = vadd.f32 %v1009, %v1036
  %v1084 = vadd.f32 %v1010, %v1036
  %v1085 = vadd.f32 %v1011, %v1036
  %v1086 = vadd.f32 %v1012, %v1036
  %v1087 = vadd.f32 %v1013, %v1036
  %v1088 = vadd.f32 %v1014, %v1036
  %v1089 = vadd.f32 %v1015, %v1036
  %v1090 = vadd.f32 %v1016, %v1036
  %v1091 = vadd.f32 %v1017, %v1036
  %v1092 = vadd.f32 %v1018, %v1036
  %v1093 = vadd.f32 %v1019, %v1036
  %v1094 = vadd.f32 %v1020, %v1036
  %v1095 = vadd.f32 %v1021, %v1036
  %v1096 = vadd.f32 %v1022, %v1036
  %v1097 = vadd.f32 %v1023, %v1036
  %v1098 = vadd.f32 %v1024, %v1036
  %v1099 = vadd.f32 %v1025, %v1036
  %v1100 = vadd.f32 %v1026, %v1036
  %v1101 = vadd.f32 %v1027, %v1036
  %v1102 = vadd.f32 %v1028, %v1036
  %v1103 = vadd.f32 %v1029, %v1036
  %v1104 = vadd.f32 %v1030, %v1036
  %v1105 = vadd.f32 %v1031, %v1036
  %v1106 = vadd.f32 %v1032, %v1036
  %v1107 = vadd.f32 %v1033, %v1036
  %v1108 = vadd.f32 %v1034, %v1036
  %v1109 = vadd.f32 %v1035, %v1036
  %v1110 = vmul.f32 %v1037, 0.02
  %v1111 = vmul.f32 %v1038, 0.02
  %v1112 = vmul.f32 %v1039, 0.02
  %v1113 = vmul.f32 %v1040, 0.02
  %v1114 = vmul.f32 %v1041, 0.02
  %v1115 = vmul.f32 %v1042, 0.02
  %v1116 = vmul.f32 %v1043, 0.02
  %v1117 = vmul.f32 %v1044, 0.02
  %v1118 = vmul.f32 %v1045, 0.02
  %v1119 = vmul.f32 %v1046, 0.02
  %v1120 = vmul.f32 %v1047, 0.02
  %v1121 = vmul.f32 %v1048, 0.02
  %v1122 = vmul.f32 %v1049, 0.02
  %v1123 = vmul.f32 %v1050, 0.02
  %v1124 = vmul.f32 %v1051, 0.02
  %v1125 = vmul.f32 %v1052, 0.02
  %v1126 = vmul.f32 %v1053, 0.02
  %v1127 = vmul.f32 %v1054, 0.02
  %v1128 = vmul.f32 %v1055, 0.02
  %v1129 = vmul.f32 %v1056, 0.02
  %v1130 = vmul.f32 %v1057, 0.02
  %v1131 = vmul.f32 %v1058, 0.02
  %v1132 = vmul.f32 %v1059, 0.02
  %v1133 = vmul.f32 %v1060, 0.02
  %v1134 = vmul.f32 %v1061, 0.02
  %v1135 = vmul.f32 %v1062, 0.02
  %v1136 = vmul.f32 %v1063, 0.02
  %v1137 = vmul.f32 %v1064, 0.02
  %v1138 = vmul.f32 %v1065, 0.02
  %v1139 = vmul.f32 %v1066, 0.02
  %v1140 = vmul.f32 %v1067, 0.02
  %v1141 = vmul.f32 %v1068, 0.02
  %v1142 = vmul.f32 %v1069, 0.02
  %v1143 = vmul.f32 %v1070, 0.02
  %v1144 = vmul.f32 %v1071, 0.02
  %v1145 = vmul.f32 %v1072, 0.02
  %v1146 = vmul.f32 %v1073, 0.02
  %v1147 = vmul.f32 %v1074, 0.02
  %v1148 = vmul.f32 %v1075, 0.02
  %v1149 = vmul.f32 %v1076, 0.02
  %v1150 = vmul.f32 %v1077, 0.02
  %v1151 = vmul.f32 %v1078, 0.02
  %v1152 = vmul.f32 %v1079, 0.02
  %v1153 = vmul.f32 %v1080, 0.02
  %v1154 = vmul.f32 %v1081, 0.02
  %v1155 = vmul.f32 %v1082, 0.02
  %v1156 = vmul.f32 %v1083, 0.02
  %v1157 = vmul.f32 %v1084, 0.02
  %v1158 = vmul.f32 %v1085, 0.02
  %v1159 = vmul.f32 %v1086, 0.02
  %v1160 = vmul.f32 %v1087, 0.02
  %v1161 = vmul.f32 %v1088, 0.02
  %v1162 = vmul.f32 %v1089, 0.02
  %v1163 = vmul.f32 %v1090, 0.02
  %v1164 = vmul.f32 %v1091, 0.02
  %v1165 = vmul.f32 %v1092, 0.02
  %v1166 = vmul.f32 %v1093, 0.02
  %v1167 = vmul.f32 %v1094, 0.02
  %v1168 = vmul.f32 %v1095, 0.02
  %v1169 = vmul.f32 %v1096, 0.02
  %v1170 = vmul.f32 %v1097, 0.02
  %v1171 = vmul.f32 %v1098, 0.02
  %v1172 = vmul.f32 %v1099, 0.02
  %v1173 = vmul.f32 %v1100, 0.02
  %v1174 = vmul.f32 %v1101, 0.02
  %v1175 = vmul.f32 %v1102, 0.02
  %v1176 = vmul.f32 %v1103, 0.02
  %v1177 = vmul.f32 %v1104, 0.02
  %v1178 = vmul.f32 %v1105, 0.02
  %v1179 = vmul.f32 %v1106, 0.02
  %v1180 = vmul.f32 %v1107, 0.02
  %v1181 = vmul.f32 %v1108, 0.02
  %v1182 = vmul.f32 %v1109, 0.02
  %v1183 = vmax.f32 %v1037, %v1110
  %v1184 = vmax.f32 %v1038, %v1111
  %v1185 = vmax.f32 %v1039, %v1112
  %v1186 = vmax.f32 %v1040, %v1113
  %v1187 = vmax.f32 %v1041, %v1114
  %v1188 = vmax.f32 %v1042, %v1115
  %v1189 = vmax.f32 %v1043, %v1116
  %v1190 = vmax.f32 %v1044, %v1117
  %v1191 = vmax.f32 %v1045, %v1118
  %v1192 = vmax.f32 %v1046, %v1119
  %v1193 = vmax.f32 %v1047, %v1120
  %v1194 = vmax.f32 %v1048, %v1121
  %v1195 = vmax.f32 %v1049, %v1122
  %v1196 = vmax.f32 %v1050, %v1123
  %v1197 = vmax.f32 %v1051, %v1124
  %v1198 = vmax.f32 %v1052, %v1125
  %v1199 = vmax.f32 %v1053, %v1126
  %v1200 = vmax.f32 %v1054, %v1127
  %v1201 = vmax.f32 %v1055, %v1128
  %v1202 = vmax.f32 %v1056, %v1129
  %v1203 = vmax.f32 %v1057, %v1130
  %v1204 = vmax.f32 %v1058, %v1131
  %v1205 = vmax.f32 %v1059, %v1132
  %v1206 = vmax.f32 %v1060, %v1133
  %v1207 = vmax.f32 %v1061, %v1134
  %v1208 = vmax.f32 %v1062, %v1135
  %v1209 = vmax.f32 %v1063, %v1136
  %v1210 = vmax.f32 %v1064, %v1137
  %v1211 = vmax.f32 %v1065, %v1138
  %v1212 = vmax.f32 %v1066, %v1139
  %v1213 = vmax.f32 %v1067, %v1140
  %v1214 = vmax.f32 %v1068, %v1141
  %v1215 = vmax.f32 %v1069, %v1142
  %v1216 = vmax.f32 %v1070, %v1143
  %v1217 = vmax.f32 %v1071, %v1144
  %v1218 = vmax.f32 %v1072, %v1145
  %v1219 = vmax.f32 %v1073, %v1146
  %v1220 = vmax.f32 %v1074, %v1147
  %v1221 = vmax.f32 %v1075, %v1148
  %v1222 = vmax.f32 %v1076, %v1149
  %v1223 = vmax.f32 %v1077, %v1150
  %v1224 = vmax.f32 %v1078, %v1151
  %v1225 = vmax.f32 %v1079, %v1152
  %v1226 = vmax.f32 %v1080, %v1153
  %v1227 = vmax.f32 %v1081, %v1154
  %v1228 = vmax.f32 %v1082, %v1155
  %v1229 = vmax.f32 %v1083, %v1156
  %v1230 = vmax.f32 %v1084, %v1157
  %v1231 = vmax.f32 %v1085, %v1158
  %v1232 = vmax.f32 %v1086, %v1159
  %v1233 = vmax.f32 %v1087, %v1160
  %v1234 = vmax.f32 %v1088, %v1161
  %v1235 = vmax.f32 %v1089, %v1162
  %v1236 = vmax.f32 %v1090, %v1163
  %v1237 = vmax.f32 %v1091, %v1164
  %v1238 = vmax.f32 %v1092, %v1165
  %v1239 = vmax.f32 %v1093, %v1166
  %v1240 = vmax.f32 %v1094, %v1167
  %v1241 = vmax.f32 %v1095, %v1168
  %v1242 = vmax.f32 %v1096, %v1169
  %v1243 = vmax.f32 %v1097, %v1170
  %v1244 = vmax.f32 %v1098, %v1171
  %v1245 = vmax.f32 %v1099, %v1172
  %v1246 = vmax.f32 %v1100, %v1173
  %v1247 = vmax.f32 %v1101, %v1174
  %v1248 = vmax.f32 %v1102, %v1175
  %v1249 = vmax.f32 %v1103, %v1176
  %v1250 = vmax.f32 %v1104, %v1177
  %v1251 = vmax.f32 %v1105, %v1178
  %v1252 = vmax.f32 %v1106, %v1179
  %v1253 = vmax.f32 %v1107, %v1180
  %v1254 = vmax.f32 %v1108, %v1181
  %v1255 = vmax.f32 %v1109, %v1182
  %1256 = vst.msk [vmem:[#allocation2] sm:$0xff] %vm563, %v1183
  %1257 = vst.msk [vmem:[#allocation2 + $0x8] sm:$0xff] %vm563, %v1184
  %1258 = vst.msk [vmem:[#allocation2 + $0x10] sm:$0xff] %vm563, %v1185
  %1259 = vst.msk [vmem:[#allocation2 + $0x18] sm:$0xff] %vm563, %v1186
  %1260 = vst.msk [vmem:[#allocation2 + $0x20] sm:$0xff] %vm563, %v1187
  %1261 = vst.msk [vmem:[#allocation2 + $0x28] sm:$0xff] %vm563, %v1188
  %1262 = vst.msk [vmem:[#allocation2 + $0x30] sm:$0xff] %vm563, %v1189
  %1263 = vst.msk [vmem:[#allocation2 + $0x38] sm:$0xff] %vm563, %v1190
  %1264 = vst.msk [vmem:[#allocation2 + $0x40] sm:$0xff] %vm563, %v1191
  %1265 = vst.msk [vmem:[#allocation2 + $0x48] sm:$0xff] %vm563, %v1192
  %1266 = vst.msk [vmem:[#allocation2 + $0x50] sm:$0xff] %vm563, %v1193
  %1267 = vst.msk [vmem:[#allocation2 + $0x58] sm:$0xff] %vm563, %v1194
  %1268 = vst.msk [vmem:[#allocation2 + $0x60] sm:$0xff] %vm563, %v1195
  %1269 = vst.msk [vmem:[#allocation2 + $0x68] sm:$0xff] %vm563, %v1196
  %1270 = vst.msk [vmem:[#allocation2 + $0x70] sm:$0xff] %vm563, %v1197
  %1271 = vst.msk [vmem:[#allocation2 + $0x78] sm:$0xff] %vm563, %v1198
  %1272 = vst.msk [vmem:[#allocation2 + $0x80] sm:$0xff] %vm563, %v1199
  %1273 = vst.msk [vmem:[#allocation2 + $0x88] sm:$0xff] %vm563, %v1200
  %1274 = vst.msk [vmem:[#allocation2 + $0x90] sm:$0xff] %vm563, %v1201
  %1275 = vst.msk [vmem:[#allocation2 + $0x98] sm:$0xff] %vm563, %v1202
  %1276 = vst.msk [vmem:[#allocation2 + $0xa0] sm:$0xff] %vm563, %v1203
  %1277 = vst.msk [vmem:[#allocation2 + $0xa8] sm:$0xff] %vm563, %v1204
  %1278 = vst.msk [vmem:[#allocation2 + $0xb0] sm:$0xff] %vm563, %v1205
  %1279 = vst.msk [vmem:[#allocation2 + $0xb8] sm:$0xff] %vm563, %v1206
  %1280 = vst.msk [vmem:[#allocation2 + $0xc0] sm:$0xff] %vm563, %v1207
  %1281 = vst.msk [vmem:[#allocation2 + $0xc8] sm:$0xff] %vm563, %v1208
  %1282 = vst.msk [vmem:[#allocation2 + $0xd0] sm:$0xff] %vm563, %v1209
  %1283 = vst.msk [vmem:[#allocation2 + $0xd8] sm:$0xff] %vm563, %v1210
  %1284 = vst.msk [vmem:[#allocation2 + $0xe0] sm:$0xff] %vm563, %v1211
  %1285 = vst.msk [vmem:[#allocation2 + $0xe8] sm:$0xff] %vm563, %v1212
  %1286 = vst.msk [vmem:[#allocation2 + $0xf0] sm:$0xff] %vm563, %v1213
  %1287 = vst.msk [vmem:[#allocation2 + $0xf8] sm:$0xff] %vm563, %v1214
  %1288 = vst.msk [vmem:[#allocation2 + $0x100] sm:$0xff] %vm563, %v1215
  %1289 = vst.msk [vmem:[#allocation2 + $0x108] sm:$0xff] %vm563, %v1216
  %1290 = vst.msk [vmem:[#allocation2 + $0x110] sm:$0xff] %vm563, %v1217
  %1291 = vst.msk [vmem:[#allocation2 + $0x118] sm:$0xff] %vm563, %v1218
  %1292 = vst.msk [vmem:[#allocation2 + $0x120] sm:$0xff] %vm563, %v1219
  %1293 = vst.msk [vmem:[#allocation2 + $0x128] sm:$0xff] %vm563, %v1220
  %1294 = vst.msk [vmem:[#allocation2 + $0x130] sm:$0xff] %vm563, %v1221
  %1295 = vst.msk [vmem:[#allocation2 + $0x138] sm:$0xff] %vm563, %v1222
  %1296 = vst.msk [vmem:[#allocation2 + $0x140] sm:$0xff] %vm563, %v1223
  %1297 = vst.msk [vmem:[#allocation2 + $0x148] sm:$0xff] %vm563, %v1224
  %1298 = vst.msk [vmem:[#allocation2 + $0x150] sm:$0xff] %vm563, %v1225
  %1299 = vst.msk [vmem:[#allocation2 + $0x158] sm:$0xff] %vm563, %v1226
  %1300 = vst.msk [vmem:[#allocation2 + $0x160] sm:$0xff] %vm563, %v1227
  %1301 = vst.msk [vmem:[#allocation2 + $0x168] sm:$0xff] %vm563, %v1228
  %1302 = vst.msk [vmem:[#allocation2 + $0x170] sm:$0xff] %vm563, %v1229
  %1303 = vst.msk [vmem:[#allocation2 + $0x178] sm:$0xff] %vm563, %v1230
  %1304 = vst.msk [vmem:[#allocation2 + $0x180] sm:$0xff] %vm563, %v1231
  %1305 = vst.msk [vmem:[#allocation2 + $0x188] sm:$0xff] %vm563, %v1232
  %1306 = vst.msk [vmem:[#allocation2 + $0x190] sm:$0xff] %vm563, %v1233
  %1307 = vst.msk [vmem:[#allocation2 + $0x198] sm:$0xff] %vm563, %v1234
  %1308 = vst.msk [vmem:[#allocation2 + $0x1a0] sm:$0xff] %vm563, %v1235
  %1309 = vst.msk [vmem:[#allocation2 + $0x1a8] sm:$0xff] %vm563, %v1236
  %1310 = vst.msk [vmem:[#allocation2 + $0x1b0] sm:$0xff] %vm563, %v1237
  %1311 = vst.msk [vmem:[#allocation2 + $0x1b8] sm:$0xff] %vm563, %v1238
  %1312 = vst.msk [vmem:[#allocation2 + $0x1c0] sm:$0xff] %vm563, %v1239
  %1313 = vst.msk [vmem:[#allocation2 + $0x1c8] sm:$0xff] %vm563, %v1240
  %1314 = vst.msk [vmem:[#allocation2 + $0x1d0] sm:$0xff] %vm563, %v1241
  %1315 = vst.msk [vmem:[#allocation2 + $0x1d8] sm:$0xff] %vm563, %v1242
  %1316 = vst.msk [vmem:[#allocation2 + $0x1e0] sm:$0xff] %vm563, %v1243
  %1317 = vst.msk [vmem:[#allocation2 + $0x1e8] sm:$0xff] %vm563, %v1244
  %1318 = vst.msk [vmem:[#allocation2 + $0x1f0] sm:$0xff] %vm563, %v1245
  %1319 = vst.msk [vmem:[#allocation2 + $0x1f8] sm:$0xff] %vm563, %v1246
  %1320 = vst.msk [vmem:[#allocation2 + $0x200] sm:$0xff] %vm563, %v1247
  %1321 = vst.msk [vmem:[#allocation2 + $0x208] sm:$0xff] %vm563, %v1248
  %1322 = vst.msk [vmem:[#allocation2 + $0x210] sm:$0xff] %vm563, %v1249
  %1323 = vst.msk [vmem:[#allocation2 + $0x218] sm:$0xff] %vm563, %v1250
  %1324 = vst.msk [vmem:[#allocation2 + $0x220] sm:$0xff] %vm563, %v1251
  %1325 = vst.msk [vmem:[#allocation2 + $0x228] sm:$0xff] %vm563, %v1252
  %1326 = vst.msk [vmem:[#allocation2 + $0x230] sm:$0xff] %vm563, %v1253
  %1327 = vst.msk [vmem:[#allocation2 + $0x238] sm:$0xff] %vm563, %v1254
  %1328 = vst.msk [vmem:[#allocation2 + $0x240] sm:$0x3] %vm707, %v1255
  %v1329 = vld [vmem:[#allocation2] sm:$0xff]
  %v1330 = vld [vmem:[#allocation2 + $0x8] sm:$0xff]
  %1331 = vst.msk [vmem:[#allocation6] sm:$0xff] %vm563, %v1329
  %1332 = vst.msk [vmem:[#allocation6 + $0x8] sm:$0xff] %vm563, %v1330
  %v1333 = vld [vmem:[#allocation2 + $0xa2] sm:$0xff]
  %v1334 = vld [vmem:[#allocation2 + $0xaa] sm:$0xff]
  %1337 = vrot.lane.b32.xlu0 %v1333, 4
  %v1338 = vpop.permute.xlu0 %1337
  %1339 = vrot.lane.b32.xlu0 %v1334, 4
  %v1340 = vpop.permute.xlu0 %1339
  %vm1343 = vcmask 64544
  %1344 = vst.msk [vmem:[#allocation6] sm:$0xff] %vm1343, %v1338
  %1345 = vst.msk [vmem:[#allocation6 + $0x8] sm:$0xff] %vm1343, %v1340
  %v1346 = vld [vmem:[#allocation2 + $0x2] sm:$0xff]
  %v1347 = vld [vmem:[#allocation2 + $0xa] sm:$0xff]
  %1350 = vrot.lane.b32.xlu0 %v1346, 8
  %v1351 = vpop.permute.xlu0 %1350
  %1352 = vrot.lane.b32.xlu0 %v1347, 8
  %v1353 = vpop.permute.xlu0 %1352
  %vm1356 = vcmask 97344
  %1357 = vst.msk [vmem:[#allocation6] sm:$0xff] %vm1356, %v1351
  %1358 = vst.msk [vmem:[#allocation6 + $0x8] sm:$0xff] %vm1356, %v1353
  %v1359 = vld [vmem:[#allocation2 + $0x132] sm:$0xff]
  %v1360 = vld [vmem:[#allocation2 + $0x13a] sm:$0xff]
  %1363 = vrot.lane.b32.xlu0 %v1359, 12
  %v1364 = vpop.permute.xlu0 %1363
  %1365 = vrot.lane.b32.xlu0 %v1360, 12
  %v1366 = vpop.permute.xlu0 %1365
  %vm1369 = vcmask 130144
  %1370 = vst.msk [vmem:[#allocation6] sm:$0xff] %vm1369, %v1364
  %1371 = vst.msk [vmem:[#allocation6 + $0x8] sm:$0xff] %vm1369, %v1366
  %v1372 = vld [vmem:[#allocation2 + $0x1c2] sm:$0xff]
  %v1373 = vld [vmem:[#allocation2 + $0x1ca] sm:$0xff]
  %1376 = vrot.lane.b32.xlu0 %v1372, 16
  %v1377 = vpop.permute.xlu0 %1376
  %1378 = vrot.lane.b32.xlu0 %v1373, 16
  %v1379 = vpop.permute.xlu0 %1378
  %vm1382 = vcmask 162944
  %1383 = vst.msk [vmem:[#allocation6] sm:$0xff] %vm1382, %v1377
  %1384 = vst.msk [vmem:[#allocation6 + $0x8] sm:$0xff] %vm1382, %v1379
  %v1385 = vld [vmem:[#allocation2 + $0x134] sm:$0xff]
  %v1386 = vld [vmem:[#allocation2 + $0x13c] sm:$0xff]
  %1389 = vrot.lane.b32.xlu0 %v1385, 20
  %v1390 = vpop.permute.xlu0 %1389
  %1391 = vrot.lane.b32.xlu0 %v1386, 20
  %v1392 = vpop.permute.xlu0 %1391
  %vm1395 = vcmask 195744
  %1396 = vst.msk [vmem:[#allocation6] sm:$0xff] %vm1395, %v1390
  %1397 = vst.msk [vmem:[#allocation6 + $0x8] sm:$0xff] %vm1395, %v1392
  %v1398 = vld [vmem:[#allocation2 + $0x12] sm:$0xff]
  %v1399 = vld [vmem:[#allocation2 + $0x1a] sm:$0xff]
  %1402 = vrot.lane.b32.xlu0 %v1398, 24
  %v1403 = vpop.permute.xlu0 %1402
  %1404 = vrot.lane.b32.xlu0 %v1399, 24
  %v1405 = vpop.permute.xlu0 %1404
  %vm1408 = vcmask 228544
  %1409 = vst.msk [vmem:[#allocation6] sm:$0xff] %vm1408, %v1403
  %1410 = vst.msk [vmem:[#allocation6 + $0x8] sm:$0xff] %vm1408, %v1405
  %v1411 = vld [vmem:[#allocation2 + $0xb2] sm:$0xff]
  %v1412 = vld [vmem:[#allocation2 + $0xba] sm:$0xff]
  %1415 = vrot.lane.b32.xlu0 %v1411, 28
  %v1416 = vpop.permute.xlu0 %1415
  %1417 = vrot.lane.b32.xlu0 %v1412, 28
  %v1418 = vpop.permute.xlu0 %1417
  %vm1421 = vcmask 261344
  %1422 = vst.msk [vmem:[#allocation6] sm:$0xff] %vm1421, %v1416
  %1423 = vst.msk [vmem:[#allocation6 + $0x8] sm:$0xff] %vm1421, %v1418
  %v1424 = vld [vmem:[#allocation2 + $0x14] sm:$0xff]
  %v1425 = vld [vmem:[#allocation2 + $0x1c] sm:$0xff]
  %1428 = vrot.lane.b32.xlu0 %v1424, 32
  %v1429 = vpop.permute.xlu0 %1428
  %1430 = vrot.lane.b32.xlu0 %v1425, 32
  %v1431 = vpop.permute.xlu0 %1430
  %vm1434 = vcmask 294144
  %1435 = vst.msk [vmem:[#allocation6] sm:$0xff] %vm1434, %v1429
  %1436 = vst.msk [vmem:[#allocation6 + $0x8] sm:$0xff] %vm1434, %v1431
  %v1437 = vld [vmem:[#allocation2 + $0x12] sm:$0xff]
  %v1438 = vld [vmem:[#allocation2 + $0x1a] sm:$0xff]
  %1439 = vst.msk [vmem:[#allocation6 + $0x10] sm:$0xff] %vm563, %v1437
  %1440 = vst.msk [vmem:[#allocation6 + $0x18] sm:$0xff] %vm563, %v1438
  %v1441 = vld [vmem:[#allocation2 + $0xb2] sm:$0xff]
  %v1442 = vld [vmem:[#allocation2 + $0xba] sm:$0xff]
  %1445 = vrot.lane.b32.xlu0 %v1441, 4
  %v1446 = vpop.permute.xlu0 %1445
  %1447 = vrot.lane.b32.xlu0 %v1442, 4
  %v1448 = vpop.permute.xlu0 %1447
  %1451 = vst.msk [vmem:[#allocation6 + $0x10] sm:$0xff] %vm1343, %v1446
  %1452 = vst.msk [vmem:[#allocation6 + $0x18] sm:$0xff] %vm1343, %v1448
  %v1453 = vld [vmem:[#allocation2 + $0x14] sm:$0xff]
  %v1454 = vld [vmem:[#allocation2 + $0x1c] sm:$0xff]
  %1457 = vrot.lane.b32.xlu0 %v1453, 8
  %v1458 = vpop.permute.xlu0 %1457
  %1459 = vrot.lane.b32.xlu0 %v1454, 8
  %v1460 = vpop.permute.xlu0 %1459
  %1463 = vst.msk [vmem:[#allocation6 + $0x10] sm:$0xff] %vm1356, %v1458
  %1464 = vst.msk [vmem:[#allocation6 + $0x18] sm:$0xff] %vm1356, %v1460
  %v1465 = vld [vmem:[#allocation2 + $0x144] sm:$0xff]
  %v1466 = vld [vmem:[#allocation2 + $0x14c] sm:$0xff]
  %1469 = vrot.lane.b32.xlu0 %v1465, 12
  %v1470 = vpop.permute.xlu0 %1469
  %1471 = vrot.lane.b32.xlu0 %v1466, 12
  %v1472 = vpop.permute.xlu0 %1471
  %1475 = vst.msk [vmem:[#allocation6 + $0x10] sm:$0xff] %vm1369, %v1470
  %1476 = vst.msk [vmem:[#allocation6 + $0x18] sm:$0xff] %vm1369, %v1472
  %v1477 = vld [vmem:[#allocation2 + $0x1d2] sm:$0xff]
  %v1478 = vld [vmem:[#allocation2 + $0x1da] sm:$0xff]
  %1481 = vrot.lane.b32.xlu0 %v1477, 16
  %v1482 = vpop.permute.xlu0 %1481
  %1483 = vrot.lane.b32.xlu0 %v1478, 16
  %v1484 = vpop.permute.xlu0 %1483
  %1487 = vst.msk [vmem:[#allocation6 + $0x10] sm:$0xff] %vm1382, %v1482
  %1488 = vst.msk [vmem:[#allocation6 + $0x18] sm:$0xff] %vm1382, %v1484
  %v1489 = vld [vmem:[#allocation2 + $0x146] sm:$0xff]
  %v1490 = vld [vmem:[#allocation2 + $0x14e] sm:$0xff]
  %1493 = vrot.lane.b32.xlu0 %v1489, 20
  %v1494 = vpop.permute.xlu0 %1493
  %1495 = vrot.lane.b32.xlu0 %v1490, 20
  %v1496 = vpop.permute.xlu0 %1495
  %1499 = vst.msk [vmem:[#allocation6 + $0x10] sm:$0xff] %vm1395, %v1494
  %1500 = vst.msk [vmem:[#allocation6 + $0x18] sm:$0xff] %vm1395, %v1496
  %v1501 = vld [vmem:[#allocation2 + $0x24] sm:$0xff]
  %v1502 = vld [vmem:[#allocation2 + $0x2c] sm:$0xff]
  %1505 = vrot.lane.b32.xlu0 %v1501, 24
  %v1506 = vpop.permute.xlu0 %1505
  %1507 = vrot.lane.b32.xlu0 %v1502, 24
  %v1508 = vpop.permute.xlu0 %1507
  %1511 = vst.msk [vmem:[#allocation6 + $0x10] sm:$0xff] %vm1408, %v1506
  %1512 = vst.msk [vmem:[#allocation6 + $0x18] sm:$0xff] %vm1408, %v1508
  %v1513 = vld [vmem:[#allocation2 + $0xc2] sm:$0xff]
  %v1514 = vld [vmem:[#allocation2 + $0xca] sm:$0xff]
  %1517 = vrot.lane.b32.xlu0 %v1513, 28
  %v1518 = vpop.permute.xlu0 %1517
  %1519 = vrot.lane.b32.xlu0 %v1514, 28
  %v1520 = vpop.permute.xlu0 %1519
  %1523 = vst.msk [vmem:[#allocation6 + $0x10] sm:$0xff] %vm1421, %v1518
  %1524 = vst.msk [vmem:[#allocation6 + $0x18] sm:$0xff] %vm1421, %v1520
  %v1525 = vld [vmem:[#allocation2 + $0x26] sm:$0xff]
  %v1526 = vld [vmem:[#allocation2 + $0x2e] sm:$0xff]
  %1529 = vrot.lane.b32.xlu0 %v1525, 32
  %v1530 = vpop.permute.xlu0 %1529
  %1531 = vrot.lane.b32.xlu0 %v1526, 32
  %v1532 = vpop.permute.xlu0 %1531
  %1535 = vst.msk [vmem:[#allocation6 + $0x10] sm:$0xff] %vm1434, %v1530
  %1536 = vst.msk [vmem:[#allocation6 + $0x18] sm:$0xff] %vm1434, %v1532
  %v1537 = vld [vmem:[#allocation2 + $0x24] sm:$0xff]
  %v1538 = vld [vmem:[#allocation2 + $0x2c] sm:$0xff]
  %1539 = vst.msk [vmem:[#allocation6 + $0x20] sm:$0xff] %vm563, %v1537
  %1540 = vst.msk [vmem:[#allocation6 + $0x28] sm:$0xff] %vm563, %v1538
  %v1541 = vld [vmem:[#allocation2 + $0xc2] sm:$0xff]
  %v1542 = vld [vmem:[#allocation2 + $0xca] sm:$0xff]
  %1545 = vrot.lane.b32.xlu0 %v1541, 4
  %v1546 = vpop.permute.xlu0 %1545
  %1547 = vrot.lane.b32.xlu0 %v1542, 4
  %v1548 = vpop.permute.xlu0 %1547
  %1551 = vst.msk [vmem:[#allocation6 + $0x20] sm:$0xff] %vm1343, %v1546
  %1552 = vst.msk [vmem:[#allocation6 + $0x28] sm:$0xff] %vm1343, %v1548
  %v1553 = vld [vmem:[#allocation2 + $0x26] sm:$0xff]
  %v1554 = vld [vmem:[#allocation2 + $0x2e] sm:$0xff]
  %1557 = vrot.lane.b32.xlu0 %v1553, 8
  %v1558 = vpop.permute.xlu0 %1557
  %1559 = vrot.lane.b32.xlu0 %v1554, 8
  %v1560 = vpop.permute.xlu0 %1559
  %1563 = vst.msk [vmem:[#allocation6 + $0x20] sm:$0xff] %vm1356, %v1558
  %1564 = vst.msk [vmem:[#allocation6 + $0x28] sm:$0xff] %vm1356, %v1560
  %v1565 = vld [vmem:[#allocation2 + $0x156] sm:$0xff]
  %v1566 = vld [vmem:[#allocation2 + $0x15e] sm:$0xff]
  %1569 = vrot.lane.b32.xlu0 %v1565, 12
  %v1570 = vpop.permute.xlu0 %1569
  %1571 = vrot.lane.b32.xlu0 %v1566, 12
  %v1572 = vpop.permute.xlu0 %1571
  %1575 = vst.msk [vmem:[#allocation6 + $0x20] sm:$0xff] %vm1369, %v1570
  %1576 = vst.msk [vmem:[#allocation6 + $0x28] sm:$0xff] %vm1369, %v1572
  %v1577 = vld [vmem:[#allocation2 + $0x1e2] sm:$0xff]
  %v1578 = vld [vmem:[#allocation2 + $0x1ea] sm:$0xff]
  %1581 = vrot.lane.b32.xlu0 %v1577, 16
  %v1582 = vpop.permute.xlu0 %1581
  %1583 = vrot.lane.b32.xlu0 %v1578, 16
  %v1584 = vpop.permute.xlu0 %1583
  %1587 = vst.msk [vmem:[#allocation6 + $0x20] sm:$0xff] %vm1382, %v1582
  %1588 = vst.msk [vmem:[#allocation6 + $0x28] sm:$0xff] %vm1382, %v1584
  %v1589 = vld [vmem:[#allocation2 + $0x158] sm:$0xff]
  %v1590 = vld [vmem:[#allocation2 + $0x160] sm:$0xff]
  %1593 = vrot.lane.b32.xlu0 %v1589, 20
  %v1594 = vpop.permute.xlu0 %1593
  %1595 = vrot.lane.b32.xlu0 %v1590, 20
  %v1596 = vpop.permute.xlu0 %1595
  %1599 = vst.msk [vmem:[#allocation6 + $0x20] sm:$0xff] %vm1395, %v1594
  %1600 = vst.msk [vmem:[#allocation6 + $0x28] sm:$0xff] %vm1395, %v1596
  %v1601 = vld [vmem:[#allocation2 + $0x36] sm:$0xff]
  %v1602 = vld [vmem:[#allocation2 + $0x3e] sm:$0xff]
  %1605 = vrot.lane.b32.xlu0 %v1601, 24
  %v1606 = vpop.permute.xlu0 %1605
  %1607 = vrot.lane.b32.xlu0 %v1602, 24
  %v1608 = vpop.permute.xlu0 %1607
  %1611 = vst.msk [vmem:[#allocation6 + $0x20] sm:$0xff] %vm1408, %v1606
  %1612 = vst.msk [vmem:[#allocation6 + $0x28] sm:$0xff] %vm1408, %v1608
  %v1613 = vld [vmem:[#allocation2 + $0xd2] sm:$0xff]
  %v1614 = vld [vmem:[#allocation2 + $0xda] sm:$0xff]
  %1617 = vrot.lane.b32.xlu0 %v1613, 28
  %v1618 = vpop.permute.xlu0 %1617
  %1619 = vrot.lane.b32.xlu0 %v1614, 28
  %v1620 = vpop.permute.xlu0 %1619
  %1623 = vst.msk [vmem:[#allocation6 + $0x20] sm:$0xff] %vm1421, %v1618
  %1624 = vst.msk [vmem:[#allocation6 + $0x28] sm:$0xff] %vm1421, %v1620
  %v1625 = vld [vmem:[#allocation2 + $0x38] sm:$0xff]
  %v1626 = vld [vmem:[#allocation2 + $0x40] sm:$0xff]
  %1629 = vrot.lane.b32.xlu0 %v1625, 32
  %v1630 = vpop.permute.xlu0 %1629
  %1631 = vrot.lane.b32.xlu0 %v1626, 32
  %v1632 = vpop.permute.xlu0 %1631
  %1635 = vst.msk [vmem:[#allocation6 + $0x20] sm:$0xff] %vm1434, %v1630
  %1636 = vst.msk [vmem:[#allocation6 + $0x28] sm:$0xff] %vm1434, %v1632
  %v1637 = vld [vmem:[#allocation2 + $0x36] sm:$0xff]
  %v1638 = vld [vmem:[#allocation2 + $0x3e] sm:$0xff]
  %1639 = vst.msk [vmem:[#allocation6 + $0x30] sm:$0xff] %vm563, %v1637
  %1640 = vst.msk [vmem:[#allocation6 + $0x38] sm:$0xff] %vm563, %v1638
  %v1641 = vld [vmem:[#allocation2 + $0xd2] sm:$0xff]
  %v1642 = vld [vmem:[#allocation2 + $0xda] sm:$0xff]
  %1645 = vrot.lane.b32.xlu0 %v1641, 4
  %v1646 = vpop.permute.xlu0 %1645
  %1647 = vrot.lane.b32.xlu0 %v1642, 4
  %v1648 = vpop.permute.xlu0 %1647
  %1651 = vst.msk [vmem:[#allocation6 + $0x30] sm:$0xff] %vm1343, %v1646
  %1652 = vst.msk [vmem:[#allocation6 + $0x38] sm:$0xff] %vm1343, %v1648
  %v1653 = vld [vmem:[#allocation2 + $0x38] sm:$0xff]
  %v1654 = vld [vmem:[#allocation2 + $0x40] sm:$0xff]
  %1657 = vrot.lane.b32.xlu0 %v1653, 8
  %v1658 = vpop.permute.xlu0 %1657
  %1659 = vrot.lane.b32.xlu0 %v1654, 8
  %v1660 = vpop.permute.xlu0 %1659
  %1663 = vst.msk [vmem:[#allocation6 + $0x30] sm:$0xff] %vm1356, %v1658
  %1664 = vst.msk [vmem:[#allocation6 + $0x38] sm:$0xff] %vm1356, %v1660
  %v1665 = vld [vmem:[#allocation2 + $0x168] sm:$0xff]
  %v1666 = vld [vmem:[#allocation2 + $0x170] sm:$0xff]
  %1669 = vrot.lane.b32.xlu0 %v1665, 12
  %v1670 = vpop.permute.xlu0 %1669
  %1671 = vrot.lane.b32.xlu0 %v1666, 12
  %v1672 = vpop.permute.xlu0 %1671
  %1675 = vst.msk [vmem:[#allocation6 + $0x30] sm:$0xff] %vm1369, %v1670
  %1676 = vst.msk [vmem:[#allocation6 + $0x38] sm:$0xff] %vm1369, %v1672
  %v1677 = vld [vmem:[#allocation2 + $0x1f2] sm:$0xff]
  %v1678 = vld [vmem:[#allocation2 + $0x1fa] sm:$0xff]
  %1681 = vrot.lane.b32.xlu0 %v1677, 16
  %v1682 = vpop.permute.xlu0 %1681
  %1683 = vrot.lane.b32.xlu0 %v1678, 16
  %v1684 = vpop.permute.xlu0 %1683
  %1687 = vst.msk [vmem:[#allocation6 + $0x30] sm:$0xff] %vm1382, %v1682
  %1688 = vst.msk [vmem:[#allocation6 + $0x38] sm:$0xff] %vm1382, %v1684
  %v1689 = vld [vmem:[#allocation2 + $0x16a] sm:$0xff]
  %v1690 = vld [vmem:[#allocation2 + $0x172] sm:$0xff]
  %1693 = vrot.lane.b32.xlu0 %v1689, 20
  %v1694 = vpop.permute.xlu0 %1693
  %1695 = vrot.lane.b32.xlu0 %v1690, 20
  %v1696 = vpop.permute.xlu0 %1695
  %1699 = vst.msk [vmem:[#allocation6 + $0x30] sm:$0xff] %vm1395, %v1694
  %1700 = vst.msk [vmem:[#allocation6 + $0x38] sm:$0xff] %vm1395, %v1696
  %v1701 = vld [vmem:[#allocation2 + $0x48] sm:$0xff]
  %v1702 = vld [vmem:[#allocation2 + $0x50] sm:$0xff]
  %1705 = vrot.lane.b32.xlu0 %v1701, 24
  %v1706 = vpop.permute.xlu0 %1705
  %1707 = vrot.lane.b32.xlu0 %v1702, 24
  %v1708 = vpop.permute.xlu0 %1707
  %1711 = vst.msk [vmem:[#allocation6 + $0x30] sm:$0xff] %vm1408, %v1706
  %1712 = vst.msk [vmem:[#allocation6 + $0x38] sm:$0xff] %vm1408, %v1708
  %v1713 = vld [vmem:[#allocation2 + $0xe2] sm:$0xff]
  %v1714 = vld [vmem:[#allocation2 + $0xea] sm:$0xff]
  %1717 = vrot.lane.b32.xlu0 %v1713, 28
  %v1718 = vpop.permute.xlu0 %1717
  %1719 = vrot.lane.b32.xlu0 %v1714, 28
  %v1720 = vpop.permute.xlu0 %1719
  %1723 = vst.msk [vmem:[#allocation6 + $0x30] sm:$0xff] %vm1421, %v1718
  %1724 = vst.msk [vmem:[#allocation6 + $0x38] sm:$0xff] %vm1421, %v1720
  %v1725 = vld [vmem:[#allocation2 + $0x4a] sm:$0xff]
  %v1726 = vld [vmem:[#allocation2 + $0x52] sm:$0xff]
  %1729 = vrot.lane.b32.xlu0 %v1725, 32
  %v1730 = vpop.permute.xlu0 %1729
  %1731 = vrot.lane.b32.xlu0 %v1726, 32
  %v1732 = vpop.permute.xlu0 %1731
  %1735 = vst.msk [vmem:[#allocation6 + $0x30] sm:$0xff] %vm1434, %v1730
  %1736 = vst.msk [vmem:[#allocation6 + $0x38] sm:$0xff] %vm1434, %v1732
  %v1737 = vld [vmem:[#allocation2 + $0x48] sm:$0xff]
  %v1738 = vld [vmem:[#allocation2 + $0x50] sm:$0xff]
  %1739 = vst.msk [vmem:[#allocation6 + $0x40] sm:$0xff] %vm563, %v1737
  %1740 = vst.msk [vmem:[#allocation6 + $0x48] sm:$0xff] %vm563, %v1738
  %v1741 = vld [vmem:[#allocation2 + $0xe2] sm:$0xff]
  %v1742 = vld [vmem:[#allocation2 + $0xea] sm:$0xff]
  %1745 = vrot.lane.b32.xlu0 %v1741, 4
  %v1746 = vpop.permute.xlu0 %1745
  %1747 = vrot.lane.b32.xlu0 %v1742, 4
  %v1748 = vpop.permute.xlu0 %1747
  %1751 = vst.msk [vmem:[#allocation6 + $0x40] sm:$0xff] %vm1343, %v1746
  %1752 = vst.msk [vmem:[#allocation6 + $0x48] sm:$0xff] %vm1343, %v1748
  %v1753 = vld [vmem:[#allocation2 + $0x4a] sm:$0xff]
  %v1754 = vld [vmem:[#allocation2 + $0x52] sm:$0xff]
  %1757 = vrot.lane.b32.xlu0 %v1753, 8
  %v1758 = vpop.permute.xlu0 %1757
  %1759 = vrot.lane.b32.xlu0 %v1754, 8
  %v1760 = vpop.permute.xlu0 %1759
  %1763 = vst.msk [vmem:[#allocation6 + $0x40] sm:$0xff] %vm1356, %v1758
  %1764 = vst.msk [vmem:[#allocation6 + $0x48] sm:$0xff] %vm1356, %v1760
  %v1765 = vld [vmem:[#allocation2 + $0x17a] sm:$0xff]
  %v1766 = vld [vmem:[#allocation2 + $0x182] sm:$0xff]
  %1769 = vrot.lane.b32.xlu0 %v1765, 12
  %v1770 = vpop.permute.xlu0 %1769
  %1771 = vrot.lane.b32.xlu0 %v1766, 12
  %v1772 = vpop.permute.xlu0 %1771
  %1775 = vst.msk [vmem:[#allocation6 + $0x40] sm:$0xff] %vm1369, %v1770
  %1776 = vst.msk [vmem:[#allocation6 + $0x48] sm:$0xff] %vm1369, %v1772
  %v1777 = vld [vmem:[#allocation2 + $0x202] sm:$0xff]
  %v1778 = vld [vmem:[#allocation2 + $0x20a] sm:$0xff]
  %1781 = vrot.lane.b32.xlu0 %v1777, 16
  %v1782 = vpop.permute.xlu0 %1781
  %1783 = vrot.lane.b32.xlu0 %v1778, 16
  %v1784 = vpop.permute.xlu0 %1783
  %1787 = vst.msk [vmem:[#allocation6 + $0x40] sm:$0xff] %vm1382, %v1782
  %1788 = vst.msk [vmem:[#allocation6 + $0x48] sm:$0xff] %vm1382, %v1784
  %v1789 = vld [vmem:[#allocation2 + $0x17c] sm:$0xff]
  %v1790 = vld [vmem:[#allocation2 + $0x184] sm:$0xff]
  %1793 = vrot.lane.b32.xlu0 %v1789, 20
  %v1794 = vpop.permute.xlu0 %1793
  %1795 = vrot.lane.b32.xlu0 %v1790, 20
  %v1796 = vpop.permute.xlu0 %1795
  %1799 = vst.msk [vmem:[#allocation6 + $0x40] sm:$0xff] %vm1395, %v1794
  %1800 = vst.msk [vmem:[#allocation6 + $0x48] sm:$0xff] %vm1395, %v1796
  %v1801 = vld [vmem:[#allocation2 + $0x5a] sm:$0xff]
  %v1802 = vld [vmem:[#allocation2 + $0x62] sm:$0xff]
  %1805 = vrot.lane.b32.xlu0 %v1801, 24
  %v1806 = vpop.permute.xlu0 %1805
  %1807 = vrot.lane.b32.xlu0 %v1802, 24
  %v1808 = vpop.permute.xlu0 %1807
  %1811 = vst.msk [vmem:[#allocation6 + $0x40] sm:$0xff] %vm1408, %v1806
  %1812 = vst.msk [vmem:[#allocation6 + $0x48] sm:$0xff] %vm1408, %v1808
  %v1813 = vld [vmem:[#allocation2 + $0xf2] sm:$0xff]
  %v1814 = vld [vmem:[#allocation2 + $0xfa] sm:$0xff]
  %1817 = vrot.lane.b32.xlu0 %v1813, 28
  %v1818 = vpop.permute.xlu0 %1817
  %1819 = vrot.lane.b32.xlu0 %v1814, 28
  %v1820 = vpop.permute.xlu0 %1819
  %1823 = vst.msk [vmem:[#allocation6 + $0x40] sm:$0xff] %vm1421, %v1818
  %1824 = vst.msk [vmem:[#allocation6 + $0x48] sm:$0xff] %vm1421, %v1820
  %v1825 = vld [vmem:[#allocation2 + $0x5c] sm:$0xff]
  %v1826 = vld [vmem:[#allocation2 + $0x64] sm:$0xff]
  %1829 = vrot.lane.b32.xlu0 %v1825, 32
  %v1830 = vpop.permute.xlu0 %1829
  %1831 = vrot.lane.b32.xlu0 %v1826, 32
  %v1832 = vpop.permute.xlu0 %1831
  %1835 = vst.msk [vmem:[#allocation6 + $0x40] sm:$0xff] %vm1434, %v1830
  %1836 = vst.msk [vmem:[#allocation6 + $0x48] sm:$0xff] %vm1434, %v1832
  %v1837 = vld [vmem:[#allocation2 + $0x5a] sm:$0xff]
  %v1838 = vld [vmem:[#allocation2 + $0x62] sm:$0xff]
  %1839 = vst.msk [vmem:[#allocation6 + $0x50] sm:$0xff] %vm563, %v1837
  %1840 = vst.msk [vmem:[#allocation6 + $0x58] sm:$0xff] %vm563, %v1838
  %v1841 = vld [vmem:[#allocation2 + $0xf2] sm:$0xff]
  %v1842 = vld [vmem:[#allocation2 + $0xfa] sm:$0xff]
  %1845 = vrot.lane.b32.xlu0 %v1841, 4
  %v1846 = vpop.permute.xlu0 %1845
  %1847 = vrot.lane.b32.xlu0 %v1842, 4
  %v1848 = vpop.permute.xlu0 %1847
  %1851 = vst.msk [vmem:[#allocation6 + $0x50] sm:$0xff] %vm1343, %v1846
  %1852 = vst.msk [vmem:[#allocation6 + $0x58] sm:$0xff] %vm1343, %v1848
  %v1853 = vld [vmem:[#allocation2 + $0x5c] sm:$0xff]
  %v1854 = vld [vmem:[#allocation2 + $0x64] sm:$0xff]
  %1857 = vrot.lane.b32.xlu0 %v1853, 8
  %v1858 = vpop.permute.xlu0 %1857
  %1859 = vrot.lane.b32.xlu0 %v1854, 8
  %v1860 = vpop.permute.xlu0 %1859
  %1863 = vst.msk [vmem:[#allocation6 + $0x50] sm:$0xff] %vm1356, %v1858
  %1864 = vst.msk [vmem:[#allocation6 + $0x58] sm:$0xff] %vm1356, %v1860
  %v1865 = vld [vmem:[#allocation2 + $0x18c] sm:$0xff]
  %v1866 = vld [vmem:[#allocation2 + $0x194] sm:$0xff]
  %1869 = vrot.lane.b32.xlu0 %v1865, 12
  %v1870 = vpop.permute.xlu0 %1869
  %1871 = vrot.lane.b32.xlu0 %v1866, 12
  %v1872 = vpop.permute.xlu0 %1871
  %1875 = vst.msk [vmem:[#allocation6 + $0x50] sm:$0xff] %vm1369, %v1870
  %1876 = vst.msk [vmem:[#allocation6 + $0x58] sm:$0xff] %vm1369, %v1872
  %v1877 = vld [vmem:[#allocation2 + $0x212] sm:$0xff]
  %v1878 = vld [vmem:[#allocation2 + $0x21a] sm:$0xff]
  %1881 = vrot.lane.b32.xlu0 %v1877, 16
  %v1882 = vpop.permute.xlu0 %1881
  %1883 = vrot.lane.b32.xlu0 %v1878, 16
  %v1884 = vpop.permute.xlu0 %1883
  %1887 = vst.msk [vmem:[#allocation6 + $0x50] sm:$0xff] %vm1382, %v1882
  %1888 = vst.msk [vmem:[#allocation6 + $0x58] sm:$0xff] %vm1382, %v1884
  %v1889 = vld [vmem:[#allocation2 + $0x18e] sm:$0xff]
  %v1890 = vld [vmem:[#allocation2 + $0x196] sm:$0xff]
  %1893 = vrot.lane.b32.xlu0 %v1889, 20
  %v1894 = vpop.permute.xlu0 %1893
  %1895 = vrot.lane.b32.xlu0 %v1890, 20
  %v1896 = vpop.permute.xlu0 %1895
  %1899 = vst.msk [vmem:[#allocation6 + $0x50] sm:$0xff] %vm1395, %v1894
  %1900 = vst.msk [vmem:[#allocation6 + $0x58] sm:$0xff] %vm1395, %v1896
  %v1901 = vld [vmem:[#allocation2 + $0x6c] sm:$0xff]
  %v1902 = vld [vmem:[#allocation2 + $0x74] sm:$0xff]
  %1905 = vrot.lane.b32.xlu0 %v1901, 24
  %v1906 = vpop.permute.xlu0 %1905
  %1907 = vrot.lane.b32.xlu0 %v1902, 24
  %v1908 = vpop.permute.xlu0 %1907
  %1911 = vst.msk [vmem:[#allocation6 + $0x50] sm:$0xff] %vm1408, %v1906
  %1912 = vst.msk [vmem:[#allocation6 + $0x58] sm:$0xff] %vm1408, %v1908
  %v1913 = vld [vmem:[#allocation2 + $0x102] sm:$0xff]
  %v1914 = vld [vmem:[#allocation2 + $0x10a] sm:$0xff]
  %1917 = vrot.lane.b32.xlu0 %v1913, 28
  %v1918 = vpop.permute.xlu0 %1917
  %1919 = vrot.lane.b32.xlu0 %v1914, 28
  %v1920 = vpop.permute.xlu0 %1919
  %1923 = vst.msk [vmem:[#allocation6 + $0x50] sm:$0xff] %vm1421, %v1918
  %1924 = vst.msk [vmem:[#allocation6 + $0x58] sm:$0xff] %vm1421, %v1920
  %v1925 = vld [vmem:[#allocation2 + $0x6e] sm:$0xff]
  %v1926 = vld [vmem:[#allocation2 + $0x76] sm:$0xff]
  %1929 = vrot.lane.b32.xlu0 %v1925, 32
  %v1930 = vpop.permute.xlu0 %1929
  %1931 = vrot.lane.b32.xlu0 %v1926, 32
  %v1932 = vpop.permute.xlu0 %1931
  %1935 = vst.msk [vmem:[#allocation6 + $0x50] sm:$0xff] %vm1434, %v1930
  %1936 = vst.msk [vmem:[#allocation6 + $0x58] sm:$0xff] %vm1434, %v1932
  %v1937 = vld [vmem:[#allocation2 + $0x6c] sm:$0xff]
  %v1938 = vld [vmem:[#allocation2 + $0x74] sm:$0xff]
  %1939 = vst.msk [vmem:[#allocation6 + $0x60] sm:$0xff] %vm563, %v1937
  %1940 = vst.msk [vmem:[#allocation6 + $0x68] sm:$0xff] %vm563, %v1938
  %v1941 = vld [vmem:[#allocation2 + $0x102] sm:$0xff]
  %v1942 = vld [vmem:[#allocation2 + $0x10a] sm:$0xff]
  %1945 = vrot.lane.b32.xlu0 %v1941, 4
  %v1946 = vpop.permute.xlu0 %1945
  %1947 = vrot.lane.b32.xlu0 %v1942, 4
  %v1948 = vpop.permute.xlu0 %1947
  %1951 = vst.msk [vmem:[#allocation6 + $0x60] sm:$0xff] %vm1343, %v1946
  %1952 = vst.msk [vmem:[#allocation6 + $0x68] sm:$0xff] %vm1343, %v1948
  %v1953 = vld [vmem:[#allocation2 + $0x6e] sm:$0xff]
  %v1954 = vld [vmem:[#allocation2 + $0x76] sm:$0xff]
  %1957 = vrot.lane.b32.xlu0 %v1953, 8
  %v1958 = vpop.permute.xlu0 %1957
  %1959 = vrot.lane.b32.xlu0 %v1954, 8
  %v1960 = vpop.permute.xlu0 %1959
  %1963 = vst.msk [vmem:[#allocation6 + $0x60] sm:$0xff] %vm1356, %v1958
  %1964 = vst.msk [vmem:[#allocation6 + $0x68] sm:$0xff] %vm1356, %v1960
  %v1965 = vld [vmem:[#allocation2 + $0x19e] sm:$0xff]
  %v1966 = vld [vmem:[#allocation2 + $0x1a6] sm:$0xff]
  %1969 = vrot.lane.b32.xlu0 %v1965, 12
  %v1970 = vpop.permute.xlu0 %1969
  %1971 = vrot.lane.b32.xlu0 %v1966, 12
  %v1972 = vpop.permute.xlu0 %1971
  %1975 = vst.msk [vmem:[#allocation6 + $0x60] sm:$0xff] %vm1369, %v1970
  %1976 = vst.msk [vmem:[#allocation6 + $0x68] sm:$0xff] %vm1369, %v1972
  %v1977 = vld [vmem:[#allocation2 + $0x222] sm:$0xff]
  %v1978 = vld [vmem:[#allocation2 + $0x22a] sm:$0xff]
  %1981 = vrot.lane.b32.xlu0 %v1977, 16
  %v1982 = vpop.permute.xlu0 %1981
  %1983 = vrot.lane.b32.xlu0 %v1978, 16
  %v1984 = vpop.permute.xlu0 %1983
  %1987 = vst.msk [vmem:[#allocation6 + $0x60] sm:$0xff] %vm1382, %v1982
  %1988 = vst.msk [vmem:[#allocation6 + $0x68] sm:$0xff] %vm1382, %v1984
  %v1989 = vld [vmem:[#allocation2 + $0x1a0] sm:$0xff]
  %v1990 = vld [vmem:[#allocation2 + $0x1a8] sm:$0xff]
  %1993 = vrot.lane.b32.xlu0 %v1989, 20
  %v1994 = vpop.permute.xlu0 %1993
  %1995 = vrot.lane.b32.xlu0 %v1990, 20
  %v1996 = vpop.permute.xlu0 %1995
  %1999 = vst.msk [vmem:[#allocation6 + $0x60] sm:$0xff] %vm1395, %v1994
  %2000 = vst.msk [vmem:[#allocation6 + $0x68] sm:$0xff] %vm1395, %v1996
  %v2001 = vld [vmem:[#allocation2 + $0x7e] sm:$0xff]
  %v2002 = vld [vmem:[#allocation2 + $0x86] sm:$0xff]
  %2005 = vrot.lane.b32.xlu0 %v2001, 24
  %v2006 = vpop.permute.xlu0 %2005
  %2007 = vrot.lane.b32.xlu0 %v2002, 24
  %v2008 = vpop.permute.xlu0 %2007
  %2011 = vst.msk [vmem:[#allocation6 + $0x60] sm:$0xff] %vm1408, %v2006
  %2012 = vst.msk [vmem:[#allocation6 + $0x68] sm:$0xff] %vm1408, %v2008
  %v2013 = vld [vmem:[#allocation2 + $0x112] sm:$0xff]
  %v2014 = vld [vmem:[#allocation2 + $0x11a] sm:$0xff]
  %2017 = vrot.lane.b32.xlu0 %v2013, 28
  %v2018 = vpop.permute.xlu0 %2017
  %2019 = vrot.lane.b32.xlu0 %v2014, 28
  %v2020 = vpop.permute.xlu0 %2019
  %2023 = vst.msk [vmem:[#allocation6 + $0x60] sm:$0xff] %vm1421, %v2018
  %2024 = vst.msk [vmem:[#allocation6 + $0x68] sm:$0xff] %vm1421, %v2020
  %v2025 = vld [vmem:[#allocation2 + $0x80] sm:$0xff]
  %v2026 = vld [vmem:[#allocation2 + $0x88] sm:$0xff]
  %2029 = vrot.lane.b32.xlu0 %v2025, 32
  %v2030 = vpop.permute.xlu0 %2029
  %2031 = vrot.lane.b32.xlu0 %v2026, 32
  %v2032 = vpop.permute.xlu0 %2031
  %2035 = vst.msk [vmem:[#allocation6 + $0x60] sm:$0xff] %vm1434, %v2030
  %2036 = vst.msk [vmem:[#allocation6 + $0x68] sm:$0xff] %vm1434, %v2032
  %v2037 = vld [vmem:[#allocation2 + $0x7e] sm:$0xff]
  %v2038 = vld [vmem:[#allocation2 + $0x86] sm:$0xff]
  %2039 = vst.msk [vmem:[#allocation6 + $0x70] sm:$0xff] %vm563, %v2037
  %2040 = vst.msk [vmem:[#allocation6 + $0x78] sm:$0xff] %vm563, %v2038
  %v2041 = vld [vmem:[#allocation2 + $0x112] sm:$0xff]
  %v2042 = vld [vmem:[#allocation2 + $0x11a] sm:$0xff]
  %2045 = vrot.lane.b32.xlu0 %v2041, 4
  %v2046 = vpop.permute.xlu0 %2045
  %2047 = vrot.lane.b32.xlu0 %v2042, 4
  %v2048 = vpop.permute.xlu0 %2047
  %2051 = vst.msk [vmem:[#allocation6 + $0x70] sm:$0xff] %vm1343, %v2046
  %2052 = vst.msk [vmem:[#allocation6 + $0x78] sm:$0xff] %vm1343, %v2048
  %v2053 = vld [vmem:[#allocation2 + $0x80] sm:$0xff]
  %v2054 = vld [vmem:[#allocation2 + $0x88] sm:$0xff]
  %2057 = vrot.lane.b32.xlu0 %v2053, 8
  %v2058 = vpop.permute.xlu0 %2057
  %2059 = vrot.lane.b32.xlu0 %v2054, 8
  %v2060 = vpop.permute.xlu0 %2059
  %2063 = vst.msk [vmem:[#allocation6 + $0x70] sm:$0xff] %vm1356, %v2058
  %2064 = vst.msk [vmem:[#allocation6 + $0x78] sm:$0xff] %vm1356, %v2060
  %v2065 = vld [vmem:[#allocation2 + $0x1b0] sm:$0xff]
  %v2066 = vld [vmem:[#allocation2 + $0x1b8] sm:$0xff]
  %2069 = vrot.lane.b32.xlu0 %v2065, 12
  %v2070 = vpop.permute.xlu0 %2069
  %2071 = vrot.lane.b32.xlu0 %v2066, 12
  %v2072 = vpop.permute.xlu0 %2071
  %2075 = vst.msk [vmem:[#allocation6 + $0x70] sm:$0xff] %vm1369, %v2070
  %2076 = vst.msk [vmem:[#allocation6 + $0x78] sm:$0xff] %vm1369, %v2072
  %v2077 = vld [vmem:[#allocation2 + $0x232] sm:$0xff]
  %v2078 = vld [vmem:[#allocation2 + $0x23a] sm:$0xff]
  %2081 = vrot.lane.b32.xlu0 %v2077, 16
  %v2082 = vpop.permute.xlu0 %2081
  %2083 = vrot.lane.b32.xlu0 %v2078, 16
  %v2084 = vpop.permute.xlu0 %2083
  %2087 = vst.msk [vmem:[#allocation6 + $0x70] sm:$0xff] %vm1382, %v2082
  %2088 = vst.msk [vmem:[#allocation6 + $0x78] sm:$0xff] %vm1382, %v2084
  %v2089 = vld [vmem:[#allocation2 + $0x1b2] sm:$0xff]
  %v2090 = vld [vmem:[#allocation2 + $0x1ba] sm:$0xff]
  %2093 = vrot.lane.b32.xlu0 %v2089, 20
  %v2094 = vpop.permute.xlu0 %2093
  %2095 = vrot.lane.b32.xlu0 %v2090, 20
  %v2096 = vpop.permute.xlu0 %2095
  %2099 = vst.msk [vmem:[#allocation6 + $0x70] sm:$0xff] %vm1395, %v2094
  %2100 = vst.msk [vmem:[#allocation6 + $0x78] sm:$0xff] %vm1395, %v2096
  %v2101 = vld [vmem:[#allocation2 + $0x90] sm:$0xff]
  %v2102 = vld [vmem:[#allocation2 + $0x98] sm:$0xff]
  %2105 = vrot.lane.b32.xlu0 %v2101, 24
  %v2106 = vpop.permute.xlu0 %2105
  %2107 = vrot.lane.b32.xlu0 %v2102, 24
  %v2108 = vpop.permute.xlu0 %2107
  %2111 = vst.msk [vmem:[#allocation6 + $0x70] sm:$0xff] %vm1408, %v2106
  %2112 = vst.msk [vmem:[#allocation6 + $0x78] sm:$0xff] %vm1408, %v2108
  %v2113 = vld [vmem:[#allocation2 + $0x122] sm:$0xff]
  %v2114 = vld [vmem:[#allocation2 + $0x12a] sm:$0xff]
  %2117 = vrot.lane.b32.xlu0 %v2113, 28
  %v2118 = vpop.permute.xlu0 %2117
  %2119 = vrot.lane.b32.xlu0 %v2114, 28
  %v2120 = vpop.permute.xlu0 %2119
  %2123 = vst.msk [vmem:[#allocation6 + $0x70] sm:$0xff] %vm1421, %v2118
  %2124 = vst.msk [vmem:[#allocation6 + $0x78] sm:$0xff] %vm1421, %v2120
  %v2125 = vld [vmem:[#allocation2 + $0x92] sm:$0xff]
  %v2126 = vld [vmem:[#allocation2 + $0x9a] sm:$0xff]
  %2129 = vrot.lane.b32.xlu0 %v2125, 32
  %v2130 = vpop.permute.xlu0 %2129
  %2131 = vrot.lane.b32.xlu0 %v2126, 32
  %v2132 = vpop.permute.xlu0 %2131
  %2135 = vst.msk [vmem:[#allocation6 + $0x70] sm:$0xff] %vm1434, %v2130
  %2136 = vst.msk [vmem:[#allocation6 + $0x78] sm:$0xff] %vm1434, %v2132
  %v2137 = vld [vmem:[#allocation6] sm:$0xff]
  %v2138 = vld [vmem:[#allocation6 + $0x8] sm:$0xff]
  %v2139 = vld [vmem:[#allocation6 + $0x10] sm:$0xff]
  %v2140 = vld [vmem:[#allocation6 + $0x18] sm:$0xff]
  %v2141 = vld [vmem:[#allocation6 + $0x20] sm:$0xff]
  %v2142 = vld [vmem:[#allocation6 + $0x28] sm:$0xff]
  %v2143 = vld [vmem:[#allocation6 + $0x30] sm:$0xff]
  %v2144 = vld [vmem:[#allocation6 + $0x38] sm:$0xff]
  %v2145 = vld [vmem:[#allocation6 + $0x40] sm:$0xff]
  %v2146 = vld [vmem:[#allocation6 + $0x48] sm:$0xff]
  %v2147 = vld [vmem:[#allocation6 + $0x50] sm:$0xff]
  %v2148 = vld [vmem:[#allocation6 + $0x58] sm:$0xff]
  %v2149 = vld [vmem:[#allocation6 + $0x60] sm:$0xff]
  %v2150 = vld [vmem:[#allocation6 + $0x68] sm:$0xff]
  %v2151 = vld [vmem:[#allocation6 + $0x70] sm:$0xff]
  %v2152 = vld [vmem:[#allocation6 + $0x78] sm:$0xff]
  %v2153 = vld [vmem:[%s2] sm:$0xff]
  %v2154 = vld [vmem:[%s2 + $0x8] sm:$0xff]
  %v2155 = vld [vmem:[%s2 + $0x10] sm:$0xff]
  %v2156 = vld [vmem:[%s2 + $0x18] sm:$0xff]
  %v2157 = vld [vmem:[%s2 + $0x20] sm:$0xf]
  %vm2158 = vcmask 293888
  %v2160 = vsel %vm2158, %v2137, 0
  %v2163 = vsel %vm2158, %v2138, 0
  %v2166 = vsel %vm2158, %v2139, 0
  %v2169 = vsel %vm2158, %v2140, 0
  %v2172 = vsel %vm2158, %v2141, 0
  %v2175 = vsel %vm2158, %v2142, 0
  %v2178 = vsel %vm2158, %v2143, 0
  %v2181 = vsel %vm2158, %v2144, 0
  %v2184 = vsel %vm2158, %v2145, 0
  %v2187 = vsel %vm2158, %v2146, 0
  %v2190 = vsel %vm2158, %v2147, 0
  %v2193 = vsel %vm2158, %v2148, 0
  %v2196 = vsel %vm2158, %v2149, 0
  %v2199 = vsel %vm2158, %v2150, 0
  %v2202 = vsel %vm2158, %v2151, 0
  %v2205 = vsel %vm2158, %v2152, 0
  %vm2207 = vcmask 1043456
  %v2209 = vsel %vm2207, %v2157, 0
  %2211 = vmatpush.msra.mxu0 0.0
  %2212 = vmatpush.msra.mxu0 0.0
  %2213 = vmatpush.msra.mxu0 0.0
  %2214 = vmatpush.msra.mxu0 0.0
  %2215 = vmatpush.msra.mxu0 0.0
  %2216 = vmatpush.msra.mxu0 0.0
  %2217 = vmatpush.msra.mxu0 0.0
  %2218 = vmatpush.msra.mxu0 0.0
  %2219 = vmatpush.msra.mxu0 0.0
  %2220 = vmatpush.msra.mxu0 0.0
  %2221 = vmatpush.msra.mxu0 0.0
  %2222 = vmatpush.msra.mxu0 %v2209
  %2223 = vmatpush.msra.mxu0 %v2156
  %2224 = vmatpush.msra.mxu0 %v2155
  %2225 = vmatpush.msra.mxu0 %v2154
  %2226 = vmatpush.msra.mxu0 %v2153
  %2227 = vmatmul.f32.gmra.mxu0 %v2160
  %v2228 = vpop.f32.mrf.mxu0
  %v2229 = vadd.f32 0.0, %v2228
  %2230 = vmatmul.f32.gmra.mxu0 %v2163
  %v2231 = vpop.f32.mrf.mxu0
  %v2232 = vadd.f32 0.0, %v2231
  %2233 = vmatmul.f32.gmra.mxu0 %v2166
  %v2234 = vpop.f32.mrf.mxu0
  %v2235 = vadd.f32 0.0, %v2234
  %2236 = vmatmul.f32.gmra.mxu0 %v2169
  %v2237 = vpop.f32.mrf.mxu0
  %v2238 = vadd.f32 0.0, %v2237
  %2239 = vmatmul.f32.gmra.mxu0 %v2172
  %v2240 = vpop.f32.mrf.mxu0
  %v2241 = vadd.f32 0.0, %v2240
  %2242 = vmatmul.f32.gmra.mxu0 %v2175
  %v2243 = vpop.f32.mrf.mxu0
  %v2244 = vadd.f32 0.0, %v2243
  %2245 = vmatmul.f32.gmra.mxu0 %v2178
  %v2246 = vpop.f32.mrf.mxu0
  %v2247 = vadd.f32 0.0, %v2246
  %2248 = vmatmul.f32.gmra.mxu0 %v2181
  %v2249 = vpop.f32.mrf.mxu0
  %v2250 = vadd.f32 0.0, %v2249
  %2251 = vmatmul.f32.gmra.mxu0 %v2184
  %v2252 = vpop.f32.mrf.mxu0
  %v2253 = vadd.f32 0.0, %v2252
  %2254 = vmatmul.f32.gmra.mxu0 %v2187
  %v2255 = vpop.f32.mrf.mxu0
  %v2256 = vadd.f32 0.0, %v2255
  %2257 = vmatmul.f32.gmra.mxu0 %v2190
  %v2258 = vpop.f32.mrf.mxu0
  %v2259 = vadd.f32 0.0, %v2258
  %2260 = vmatmul.f32.gmra.mxu0 %v2193
  %v2261 = vpop.f32.mrf.mxu0
  %v2262 = vadd.f32 0.0, %v2261
  %2263 = vmatmul.f32.gmra.mxu0 %v2196
  %v2264 = vpop.f32.mrf.mxu0
  %v2265 = vadd.f32 0.0, %v2264
  %2266 = vmatmul.f32.gmra.mxu0 %v2199
  %v2267 = vpop.f32.mrf.mxu0
  %v2268 = vadd.f32 0.0, %v2267
  %2269 = vmatmul.f32.gmra.mxu0 %v2202
  %v2270 = vpop.f32.mrf.mxu0
  %v2271 = vadd.f32 0.0, %v2270
  %2272 = vmatmul.f32.gmra.mxu0 %v2205
  %v2273 = vpop.f32.mrf.mxu0
  %v2274 = vadd.f32 0.0, %v2273
  %2275 = vdwg.mxu0
  %vm2276 = vcmask 64512
  %v2277 = vsel %vm2276, %v2229, 0.0
  %v2278 = vsel %vm2276, %v2232, 0.0
  %v2279 = vadd.f32 %v2277, %v2278
  %v2280 = vsel %vm2276, %v2235, 0.0
  %v2281 = vadd.f32 %v2279, %v2280
  %v2282 = vsel %vm2276, %v2238, 0.0
  %v2283 = vadd.f32 %v2281, %v2282
  %v2284 = vsel %vm2276, %v2241, 0.0
  %v2285 = vadd.f32 %v2283, %v2284
  %v2286 = vsel %vm2276, %v2244, 0.0
  %v2287 = vadd.f32 %v2285, %v2286
  %v2288 = vsel %vm2276, %v2247, 0.0
  %v2289 = vadd.f32 %v2287, %v2288
  %v2290 = vsel %vm2276, %v2250, 0.0
  %v2291 = vadd.f32 %v2289, %v2290
  %v2292 = vsel %vm2276, %v2253, 0.0
  %v2293 = vadd.f32 %v2291, %v2292
  %v2294 = vsel %vm2276, %v2256, 0.0
  %v2295 = vadd.f32 %v2293, %v2294
  %v2296 = vsel %vm2276, %v2259, 0.0
  %v2297 = vadd.f32 %v2295, %v2296
  %v2298 = vsel %vm2276, %v2262, 0.0
  %v2299 = vadd.f32 %v2297, %v2298
  %v2300 = vsel %vm2276, %v2265, 0.0
  %v2301 = vadd.f32 %v2299, %v2300
  %v2302 = vsel %vm2276, %v2268, 0.0
  %v2303 = vadd.f32 %v2301, %v2302
  %v2304 = vsel %vm2276, %v2271, 0.0
  %v2305 = vadd.f32 %v2303, %v2304
  %v2306 = vsel %vm2276, %v2274, 0.0
  %v2307 = vadd.f32 %v2305, %v2306
  %v2308 = vrot.slane %v2307, 4
  %v2309 = vadd.f32 %v2307, %v2308
  %v2310 = vrot.slane %v2309, 2
  %v2311 = vadd.f32 %v2309, %v2310
  %v2312 = vrot.slane %v2311, 1
  %v2313 = vadd.f32 %v2311, %v2312
  %v2314 = vmul.f32 %v2229, %v2229
  %v2315 = vmul.f32 %v2232, %v2232
  %v2316 = vmul.f32 %v2235, %v2235
  %v2317 = vmul.f32 %v2238, %v2238
  %v2318 = vmul.f32 %v2241, %v2241
  %v2319 = vmul.f32 %v2244, %v2244
  %v2320 = vmul.f32 %v2247, %v2247
  %v2321 = vmul.f32 %v2250, %v2250
  %v2322 = vmul.f32 %v2253, %v2253
  %v2323 = vmul.f32 %v2256, %v2256
  %v2324 = vmul.f32 %v2259, %v2259
  %v2325 = vmul.f32 %v2262, %v2262
  %v2326 = vmul.f32 %v2265, %v2265
  %v2327 = vmul.f32 %v2268, %v2268
  %v2328 = vmul.f32 %v2271, %v2271
  %v2329 = vmul.f32 %v2274, %v2274
  %v2330 = vsel %vm2276, %v2314, 0.0
  %v2331 = vsel %vm2276, %v2315, 0.0
  %v2332 = vadd.f32 %v2330, %v2331
  %v2333 = vsel %vm2276, %v2316, 0.0
  %v2334 = vadd.f32 %v2332, %v2333
  %v2335 = vsel %vm2276, %v2317, 0.0
  %v2336 = vadd.f32 %v2334, %v2335
  %v2337 = vsel %vm2276, %v2318, 0.0
  %v2338 = vadd.f32 %v2336, %v2337
  %v2339 = vsel %vm2276, %v2319, 0.0
  %v2340 = vadd.f32 %v2338, %v2339
  %v2341 = vsel %vm2276, %v2320, 0.0
  %v2342 = vadd.f32 %v2340, %v2341
  %v2343 = vsel %vm2276, %v2321, 0.0
  %v2344 = vadd.f32 %v2342, %v2343
  %v2345 = vsel %vm2276, %v2322, 0.0
  %v2346 = vadd.f32 %v2344, %v2345
  %v2347 = vsel %vm2276, %v2323, 0.0
  %v2348 = vadd.f32 %v2346, %v2347
  %v2349 = vsel %vm2276, %v2324, 0.0
  %v2350 = vadd.f32 %v2348, %v2349
  %v2351 = vsel %vm2276, %v2325, 0.0
  %v2352 = vadd.f32 %v2350, %v2351
  %v2353 = vsel %vm2276, %v2326, 0.0
  %v2354 = vadd.f32 %v2352, %v2353
  %v2355 = vsel %vm2276, %v2327, 0.0
  %v2356 = vadd.f32 %v2354, %v2355
  %v2357 = vsel %vm2276, %v2328, 0.0
  %v2358 = vadd.f32 %v2356, %v2357
  %v2359 = vsel %vm2276, %v2329, 0.0
  %v2360 = vadd.f32 %v2358, %v2359
  %v2361 = vrot.slane %v2360, 4
  %v2362 = vadd.f32 %v2360, %v2361
  %v2363 = vrot.slane %v2362, 2
  %v2364 = vadd.f32 %v2362, %v2363
  %v2365 = vrot.slane %v2364, 1
  %v2366 = vadd.f32 %v2364, %v2365
  %v2367 = vmul.f32 %v2313, 0.0078125
  %v2368 = vmul.f32 %v2366, 0.0078125
  %v2369 = vmul.f32 %v2367, %v2367
  %v2370 = vsub.f32 %v2368, %v2369
  %v2371 = vmax.f32 %v2370, 0.0
  %v2372 = vadd.f32 %v2371, 1e-05
  %v2373 = vrsqrt.pop %v2372
  %v2374 = vmul.f32 %v2373, %v2372
  %v2375 = vmul.f32 %v2374, %v2373
  %v2376 = vmul.f32 0.5, %v2375
  %v2377 = vsub.f32 1.5, %v2376
  %v2378 = vmul.f32 %v2373, %v2377
  %vm2379 = vweird.f32 %v2372
  %vm2380 = vweird.f32 %v2373
  %vm2381 = vmor %vm2379, %vm2380
  %v2382 = vsel %vm2381, %v2373, %v2378
  %v2383 = vmul.f32 %v26, %v2382
  %v2384 = vmul.f32 %v2367, %v2383
  %v2386 = vrot.slane %v2384, 7
  %v2388 = vsub.f32 %v26, %v2386
  %v2389 = vperm.slane %v2383, 2
  %v2390 = vmul.f32 %v2229, %v2389
  %v2391 = vmul.f32 %v2232, %v2389
  %v2392 = vmul.f32 %v2235, %v2389
  %v2393 = vmul.f32 %v2238, %v2389
  %v2394 = vmul.f32 %v2241, %v2389
  %v2395 = vmul.f32 %v2244, %v2389
  %v2396 = vmul.f32 %v2247, %v2389
  %v2397 = vmul.f32 %v2250, %v2389
  %v2398 = vmul.f32 %v2253, %v2389
  %v2399 = vmul.f32 %v2256, %v2389
  %v2400 = vmul.f32 %v2259, %v2389
  %v2401 = vmul.f32 %v2262, %v2389
  %v2402 = vmul.f32 %v2265, %v2389
  %v2403 = vmul.f32 %v2268, %v2389
  %v2404 = vmul.f32 %v2271, %v2389
  %v2405 = vmul.f32 %v2274, %v2389
  %v2406 = vperm.slane %v2388, 3
  %v2407 = vadd.f32 %v2390, %v2406
  %v2408 = vadd.f32 %v2391, %v2406
  %v2409 = vadd.f32 %v2392, %v2406
  %v2410 = vadd.f32 %v2393, %v2406
  %v2411 = vadd.f32 %v2394, %v2406
  %v2412 = vadd.f32 %v2395, %v2406
  %v2413 = vadd.f32 %v2396, %v2406
  %v2414 = vadd.f32 %v2397, %v2406
  %v2415 = vadd.f32 %v2398, %v2406
  %v2416 = vadd.f32 %v2399, %v2406
  %v2417 = vadd.f32 %v2400, %v2406
  %v2418 = vadd.f32 %v2401, %v2406
  %v2419 = vadd.f32 %v2402, %v2406
  %v2420 = vadd.f32 %v2403, %v2406
  %v2421 = vadd.f32 %v2404, %v2406
  %v2422 = vadd.f32 %v2405, %v2406
  %v2423 = vmul.f32 %v2407, 0.02
  %v2424 = vmul.f32 %v2408, 0.02
  %v2425 = vmul.f32 %v2409, 0.02
  %v2426 = vmul.f32 %v2410, 0.02
  %v2427 = vmul.f32 %v2411, 0.02
  %v2428 = vmul.f32 %v2412, 0.02
  %v2429 = vmul.f32 %v2413, 0.02
  %v2430 = vmul.f32 %v2414, 0.02
  %v2431 = vmul.f32 %v2415, 0.02
  %v2432 = vmul.f32 %v2416, 0.02
  %v2433 = vmul.f32 %v2417, 0.02
  %v2434 = vmul.f32 %v2418, 0.02
  %v2435 = vmul.f32 %v2419, 0.02
  %v2436 = vmul.f32 %v2420, 0.02
  %v2437 = vmul.f32 %v2421, 0.02
  %v2438 = vmul.f32 %v2422, 0.02
  %v2439 = vmax.f32 %v2407, %v2423
  %v2440 = vmax.f32 %v2408, %v2424
  %v2441 = vmax.f32 %v2409, %v2425
  %v2442 = vmax.f32 %v2410, %v2426
  %v2443 = vmax.f32 %v2411, %v2427
  %v2444 = vmax.f32 %v2412, %v2428
  %v2445 = vmax.f32 %v2413, %v2429
  %v2446 = vmax.f32 %v2414, %v2430
  %v2447 = vmax.f32 %v2415, %v2431
  %v2448 = vmax.f32 %v2416, %v2432
  %v2449 = vmax.f32 %v2417, %v2433
  %v2450 = vmax.f32 %v2418, %v2434
  %v2451 = vmax.f32 %v2419, %v2435
  %v2452 = vmax.f32 %v2420, %v2436
  %v2453 = vmax.f32 %v2421, %v2437
  %v2454 = vmax.f32 %v2422, %v2438
  %2455 = vst.msk [vmem:[#allocation3] sm:$0xff] %vm2276, %v2439
  %2456 = vst.msk [vmem:[#allocation3 + $0x8] sm:$0xff] %vm2276, %v2440
  %2457 = vst.msk [vmem:[#allocation3 + $0x10] sm:$0xff] %vm2276, %v2441
  %2458 = vst.msk [vmem:[#allocation3 + $0x18] sm:$0xff] %vm2276, %v2442
  %2459 = vst.msk [vmem:[#allocation3 + $0x20] sm:$0xff] %vm2276, %v2443
  %2460 = vst.msk [vmem:[#allocation3 + $0x28] sm:$0xff] %vm2276, %v2444
  %2461 = vst.msk [vmem:[#allocation3 + $0x30] sm:$0xff] %vm2276, %v2445
  %2462 = vst.msk [vmem:[#allocation3 + $0x38] sm:$0xff] %vm2276, %v2446
  %2463 = vst.msk [vmem:[#allocation3 + $0x40] sm:$0xff] %vm2276, %v2447
  %2464 = vst.msk [vmem:[#allocation3 + $0x48] sm:$0xff] %vm2276, %v2448
  %2465 = vst.msk [vmem:[#allocation3 + $0x50] sm:$0xff] %vm2276, %v2449
  %2466 = vst.msk [vmem:[#allocation3 + $0x58] sm:$0xff] %vm2276, %v2450
  %2467 = vst.msk [vmem:[#allocation3 + $0x60] sm:$0xff] %vm2276, %v2451
  %2468 = vst.msk [vmem:[#allocation3 + $0x68] sm:$0xff] %vm2276, %v2452
  %2469 = vst.msk [vmem:[#allocation3 + $0x70] sm:$0xff] %vm2276, %v2453
  %2470 = vst.msk [vmem:[#allocation3 + $0x78] sm:$0xff] %vm2276, %v2454
  %v2471 = vld [vmem:[#allocation3] sm:$0xff]
  %v2472 = vld [vmem:[#allocation3 + $0x8] sm:$0xff]
  %2473 = vst.msk [vmem:[#allocation7] sm:$0xff] %vm2276, %v2471
  %vm2474 = vcmask 60416
  %2475 = vst.msk [vmem:[#allocation7 + $0x8] sm:$0xf] %vm2474, %v2472
  %2478 = vrot.lane.b32.xlu0 %v2471, 8
  %v2479 = vpop.permute.xlu0 %2478
  %2480 = vrot.lane.b32.xlu0 %v2472, 8
  %v2481 = vpop.permute.xlu0 %2480
  %vm2484 = vcmask 130114
  %2485 = vst.msk [vmem:[#allocation7 - $0x2] sm:$0xfc] %vm2484, %v2479
  %vm2486 = vcmask 128064
  %2487 = vst.msk [vmem:[#allocation7 + $0x6] sm:$0x3f] %vm2486, %v2481
  %2488 = vrot.lane.b32.xlu0 %v2471, 16
  %v2489 = vpop.permute.xlu0 %2488
  %2490 = vrot.lane.b32.xlu0 %v2472, 16
  %v2491 = vpop.permute.xlu0 %2490
  %vm2494 = vcmask 195716
  %2495 = vst.msk [vmem:[#allocation7 - $0x4] sm:$0xf0] %vm2494, %v2489
  %vm2496 = vcmask 195712
  %2497 = vst.msk [vmem:[#allocation7 + $0x4] sm:$0xff] %vm2496, %v2491
  %v2498 = vld [vmem:[#allocation3 + $0x10] sm:$0xff]
  %v2499 = vld [vmem:[#allocation3 + $0x18] sm:$0xff]
  %2502 = vrot.lane.b32.xlu0 %v2498, 24
  %v2503 = vpop.permute.xlu0 %2502
  %2504 = vrot.lane.b32.xlu0 %v2499, 24
  %v2505 = vpop.permute.xlu0 %2504
  %vm2508 = vcmask 261312
  %2509 = vst.msk [vmem:[#allocation7] sm:$0xff] %vm2508, %v2503
  %vm2510 = vcmask 257216
  %2511 = vst.msk [vmem:[#allocation7 + $0x8] sm:$0xf] %vm2510, %v2505
  %2512 = vrot.lane.b32.xlu0 %v2498, 32
  %v2513 = vpop.permute.xlu0 %2512
  %2514 = vrot.lane.b32.xlu0 %v2499, 32
  %v2515 = vpop.permute.xlu0 %2514
  %vm2518 = vcmask 326914
  %2519 = vst.msk [vmem:[#allocation7 - $0x2] sm:$0xfc] %vm2518, %v2513
  %vm2520 = vcmask 324864
  %2521 = vst.msk [vmem:[#allocation7 + $0x6] sm:$0x3f] %vm2520, %v2515
  %2522 = vrot.lane.b32.xlu0 %v2498, 40
  %v2523 = vpop.permute.xlu0 %2522
  %2524 = vrot.lane.b32.xlu0 %v2499, 40
  %v2525 = vpop.permute.xlu0 %2524
  %vm2528 = vcmask 392516
  %2529 = vst.msk [vmem:[#allocation7 - $0x4] sm:$0xf0] %vm2528, %v2523
  %vm2530 = vcmask 392512
  %2531 = vst.msk [vmem:[#allocation7 + $0x4] sm:$0xff] %vm2530, %v2525
  %v2532 = vld [vmem:[#allocation3 + $0x20] sm:$0xff]
  %v2533 = vld [vmem:[#allocation3 + $0x28] sm:$0xff]
  %2536 = vrot.lane.b32.xlu0 %v2532, 48
  %v2537 = vpop.permute.xlu0 %2536
  %2538 = vrot.lane.b32.xlu0 %v2533, 48
  %v2539 = vpop.permute.xlu0 %2538
  %vm2542 = vcmask 458112
  %2543 = vst.msk [vmem:[#allocation7] sm:$0xff] %vm2542, %v2537
  %vm2544 = vcmask 454016
  %2545 = vst.msk [vmem:[#allocation7 + $0x8] sm:$0xf] %vm2544, %v2539
  %2546 = vrot.lane.b32.xlu0 %v2532, 56
  %v2547 = vpop.permute.xlu0 %2546
  %2548 = vrot.lane.b32.xlu0 %v2533, 56
  %v2549 = vpop.permute.xlu0 %2548
  %vm2552 = vcmask 523714
  %2553 = vst.msk [vmem:[#allocation7 - $0x2] sm:$0xfc] %vm2552, %v2547
  %vm2554 = vcmask 521664
  %2555 = vst.msk [vmem:[#allocation7 + $0x6] sm:$0x3f] %vm2554, %v2549
  %2556 = vrot.lane.b32.xlu0 %v2532, 64
  %v2557 = vpop.permute.xlu0 %2556
  %2558 = vrot.lane.b32.xlu0 %v2533, 64
  %v2559 = vpop.permute.xlu0 %2558
  %vm2562 = vcmask 589316
  %2563 = vst.msk [vmem:[#allocation7 - $0x4] sm:$0xf0] %vm2562, %v2557
  %vm2564 = vcmask 589312
  %2565 = vst.msk [vmem:[#allocation7 + $0x4] sm:$0xff] %vm2564, %v2559
  %v2566 = vld [vmem:[#allocation3 + $0x10] sm:$0xff]
  %v2567 = vld [vmem:[#allocation3 + $0x18] sm:$0xff]
  %2568 = vst.msk [vmem:[#allocation7 + $0xc] sm:$0xff] %vm2276, %v2566
  %2569 = vst.msk [vmem:[#allocation7 + $0x14] sm:$0xf] %vm2474, %v2567
  %2572 = vrot.lane.b32.xlu0 %v2566, 8
  %v2573 = vpop.permute.xlu0 %2572
  %2574 = vrot.lane.b32.xlu0 %v2567, 8
  %v2575 = vpop.permute.xlu0 %2574
  %2578 = vst.msk [vmem:[#allocation7 + $0xa] sm:$0xfc] %vm2484, %v2573
  %2579 = vst.msk [vmem:[#allocation7 + $0x12] sm:$0x3f] %vm2486, %v2575
  %2580 = vrot.lane.b32.xlu0 %v2566, 16
  %v2581 = vpop.permute.xlu0 %2580
  %2582 = vrot.lane.b32.xlu0 %v2567, 16
  %v2583 = vpop.permute.xlu0 %2582
  %2586 = vst.msk [vmem:[#allocation7 + $0x8] sm:$0xf0] %vm2494, %v2581
  %2587 = vst.msk [vmem:[#allocation7 + $0x10] sm:$0xff] %vm2496, %v2583
  %v2588 = vld [vmem:[#allocation3 + $0x20] sm:$0xff]
  %v2589 = vld [vmem:[#allocation3 + $0x28] sm:$0xff]
  %2592 = vrot.lane.b32.xlu0 %v2588, 24
  %v2593 = vpop.permute.xlu0 %2592
  %2594 = vrot.lane.b32.xlu0 %v2589, 24
  %v2595 = vpop.permute.xlu0 %2594
  %2598 = vst.msk [vmem:[#allocation7 + $0xc] sm:$0xff] %vm2508, %v2593
  %2599 = vst.msk [vmem:[#allocation7 + $0x14] sm:$0xf] %vm2510, %v2595
  %2600 = vrot.lane.b32.xlu0 %v2588, 32
  %v2601 = vpop.permute.xlu0 %2600
  %2602 = vrot.lane.b32.xlu0 %v2589, 32
  %v2603 = vpop.permute.xlu0 %2602
  %2606 = vst.msk [vmem:[#allocation7 + $0xa] sm:$0xfc] %vm2518, %v2601
  %2607 = vst.msk [vmem:[#allocation7 + $0x12] sm:$0x3f] %vm2520, %v2603
  %2608 = vrot.lane.b32.xlu0 %v2588, 40
  %v2609 = vpop.permute.xlu0 %2608
  %2610 = vrot.lane.b32.xlu0 %v2589, 40
  %v2611 = vpop.permute.xlu0 %2610
  %2614 = vst.msk [vmem:[#allocation7 + $0x8] sm:$0xf0] %vm2528, %v2609
  %2615 = vst.msk [vmem:[#allocation7 + $0x10] sm:$0xff] %vm2530, %v2611
  %v2616 = vld [vmem:[#allocation3 + $0x30] sm:$0xff]
  %v2617 = vld [vmem:[#allocation3 + $0x38] sm:$0xff]
  %2620 = vrot.lane.b32.xlu0 %v2616, 48
  %v2621 = vpop.permute.xlu0 %2620
  %2622 = vrot.lane.b32.xlu0 %v2617, 48
  %v2623 = vpop.permute.xlu0 %2622
  %2626 = vst.msk [vmem:[#allocation7 + $0xc] sm:$0xff] %vm2542, %v2621
  %2627 = vst.msk [vmem:[#allocation7 + $0x14] sm:$0xf] %vm2544, %v2623
  %2628 = vrot.lane.b32.xlu0 %v2616, 56
  %v2629 = vpop.permute.xlu0 %2628
  %2630 = vrot.lane.b32.xlu0 %v2617, 56
  %v2631 = vpop.permute.xlu0 %2630
  %2634 = vst.msk [vmem:[#allocation7 + $0xa] sm:$0xfc] %vm2552, %v2629
  %2635 = vst.msk [vmem:[#allocation7 + $0x12] sm:$0x3f] %vm2554, %v2631
  %2636 = vrot.lane.b32.xlu0 %v2616, 64
  %v2637 = vpop.permute.xlu0 %2636
  %2638 = vrot.lane.b32.xlu0 %v2617, 64
  %v2639 = vpop.permute.xlu0 %2638
  %2642 = vst.msk [vmem:[#allocation7 + $0x8] sm:$0xf0] %vm2562, %v2637
  %2643 = vst.msk [vmem:[#allocation7 + $0x10] sm:$0xff] %vm2564, %v2639
  %v2644 = vld [vmem:[#allocation3 + $0x20] sm:$0xff]
  %v2645 = vld [vmem:[#allocation3 + $0x28] sm:$0xff]
  %2646 = vst.msk [vmem:[#allocation7 + $0x18] sm:$0xff] %vm2276, %v2644
  %2647 = vst.msk [vmem:[#allocation7 + $0x20] sm:$0xf] %vm2474, %v2645
  %2650 = vrot.lane.b32.xlu0 %v2644, 8
  %v2651 = vpop.permute.xlu0 %2650
  %2652 = vrot.lane.b32.xlu0 %v2645, 8
  %v2653 = vpop.permute.xlu0 %2652
  %2656 = vst.msk [vmem:[#allocation7 + $0x16] sm:$0xfc] %vm2484, %v2651
  %2657 = vst.msk [vmem:[#allocation7 + $0x1e] sm:$0x3f] %vm2486, %v2653
  %2658 = vrot.lane.b32.xlu0 %v2644, 16
  %v2659 = vpop.permute.xlu0 %2658
  %2660 = vrot.lane.b32.xlu0 %v2645, 16
  %v2661 = vpop.permute.xlu0 %2660
  %2664 = vst.msk [vmem:[#allocation7 + $0x14] sm:$0xf0] %vm2494, %v2659
  %2665 = vst.msk [vmem:[#allocation7 + $0x1c] sm:$0xff] %vm2496, %v2661
  %v2666 = vld [vmem:[#allocation3 + $0x30] sm:$0xff]
  %v2667 = vld [vmem:[#allocation3 + $0x38] sm:$0xff]
  %2670 = vrot.lane.b32.xlu0 %v2666, 24
  %v2671 = vpop.permute.xlu0 %2670
  %2672 = vrot.lane.b32.xlu0 %v2667, 24
  %v2673 = vpop.permute.xlu0 %2672
  %2676 = vst.msk [vmem:[#allocation7 + $0x18] sm:$0xff] %vm2508, %v2671
  %2677 = vst.msk [vmem:[#allocation7 + $0x20] sm:$0xf] %vm2510, %v2673
  %2678 = vrot.lane.b32.xlu0 %v2666, 32
  %v2679 = vpop.permute.xlu0 %2678
  %2680 = vrot.lane.b32.xlu0 %v2667, 32
  %v2681 = vpop.permute.xlu0 %2680
  %2684 = vst.msk [vmem:[#allocation7 + $0x16] sm:$0xfc] %vm2518, %v2679
  %2685 = vst.msk [vmem:[#allocation7 + $0x1e] sm:$0x3f] %vm2520, %v2681
  %2686 = vrot.lane.b32.xlu0 %v2666, 40
  %v2687 = vpop.permute.xlu0 %2686
  %2688 = vrot.lane.b32.xlu0 %v2667, 40
  %v2689 = vpop.permute.xlu0 %2688
  %2692 = vst.msk [vmem:[#allocation7 + $0x14] sm:$0xf0] %vm2528, %v2687
  %2693 = vst.msk [vmem:[#allocation7 + $0x1c] sm:$0xff] %vm2530, %v2689
  %v2694 = vld [vmem:[#allocation3 + $0x40] sm:$0xff]
  %v2695 = vld [vmem:[#allocation3 + $0x48] sm:$0xff]
  %2698 = vrot.lane.b32.xlu0 %v2694, 48
  %v2699 = vpop.permute.xlu0 %2698
  %2700 = vrot.lane.b32.xlu0 %v2695, 48
  %v2701 = vpop.permute.xlu0 %2700
  %2704 = vst.msk [vmem:[#allocation7 + $0x18] sm:$0xff] %vm2542, %v2699
  %2705 = vst.msk [vmem:[#allocation7 + $0x20] sm:$0xf] %vm2544, %v2701
  %2706 = vrot.lane.b32.xlu0 %v2694, 56
  %v2707 = vpop.permute.xlu0 %2706
  %2708 = vrot.lane.b32.xlu0 %v2695, 56
  %v2709 = vpop.permute.xlu0 %2708
  %2712 = vst.msk [vmem:[#allocation7 + $0x16] sm:$0xfc] %vm2552, %v2707
  %2713 = vst.msk [vmem:[#allocation7 + $0x1e] sm:$0x3f] %vm2554, %v2709
  %2714 = vrot.lane.b32.xlu0 %v2694, 64
  %v2715 = vpop.permute.xlu0 %2714
  %2716 = vrot.lane.b32.xlu0 %v2695, 64
  %v2717 = vpop.permute.xlu0 %2716
  %2720 = vst.msk [vmem:[#allocation7 + $0x14] sm:$0xf0] %vm2562, %v2715
  %2721 = vst.msk [vmem:[#allocation7 + $0x1c] sm:$0xff] %vm2564, %v2717
  %v2722 = vld [vmem:[#allocation3 + $0x30] sm:$0xff]
  %v2723 = vld [vmem:[#allocation3 + $0x38] sm:$0xff]
  %2724 = vst.msk [vmem:[#allocation7 + $0x24] sm:$0xff] %vm2276, %v2722
  %2725 = vst.msk [vmem:[#allocation7 + $0x2c] sm:$0xf] %vm2474, %v2723
  %2728 = vrot.lane.b32.xlu0 %v2722, 8
  %v2729 = vpop.permute.xlu0 %2728
  %2730 = vrot.lane.b32.xlu0 %v2723, 8
  %v2731 = vpop.permute.xlu0 %2730
  %2734 = vst.msk [vmem:[#allocation7 + $0x22] sm:$0xfc] %vm2484, %v2729
  %2735 = vst.msk [vmem:[#allocation7 + $0x2a] sm:$0x3f] %vm2486, %v2731
  %2736 = vrot.lane.b32.xlu0 %v2722, 16
  %v2737 = vpop.permute.xlu0 %2736
  %2738 = vrot.lane.b32.xlu0 %v2723, 16
  %v2739 = vpop.permute.xlu0 %2738
  %2742 = vst.msk [vmem:[#allocation7 + $0x20] sm:$0xf0] %vm2494, %v2737
  %2743 = vst.msk [vmem:[#allocation7 + $0x28] sm:$0xff] %vm2496, %v2739
  %v2744 = vld [vmem:[#allocation3 + $0x40] sm:$0xff]
  %v2745 = vld [vmem:[#allocation3 + $0x48] sm:$0xff]
  %2748 = vrot.lane.b32.xlu0 %v2744, 24
  %v2749 = vpop.permute.xlu0 %2748
  %2750 = vrot.lane.b32.xlu0 %v2745, 24
  %v2751 = vpop.permute.xlu0 %2750
  %2754 = vst.msk [vmem:[#allocation7 + $0x24] sm:$0xff] %vm2508, %v2749
  %2755 = vst.msk [vmem:[#allocation7 + $0x2c] sm:$0xf] %vm2510, %v2751
  %2756 = vrot.lane.b32.xlu0 %v2744, 32
  %v2757 = vpop.permute.xlu0 %2756
  %2758 = vrot.lane.b32.xlu0 %v2745, 32
  %v2759 = vpop.permute.xlu0 %2758
  %2762 = vst.msk [vmem:[#allocation7 + $0x22] sm:$0xfc] %vm2518, %v2757
  %2763 = vst.msk [vmem:[#allocation7 + $0x2a] sm:$0x3f] %vm2520, %v2759
  %2764 = vrot.lane.b32.xlu0 %v2744, 40
  %v2765 = vpop.permute.xlu0 %2764
  %2766 = vrot.lane.b32.xlu0 %v2745, 40
  %v2767 = vpop.permute.xlu0 %2766
  %2770 = vst.msk [vmem:[#allocation7 + $0x20] sm:$0xf0] %vm2528, %v2765
  %2771 = vst.msk [vmem:[#allocation7 + $0x28] sm:$0xff] %vm2530, %v2767
  %v2772 = vld [vmem:[#allocation3 + $0x50] sm:$0xff]
  %v2773 = vld [vmem:[#allocation3 + $0x58] sm:$0xff]
  %2776 = vrot.lane.b32.xlu0 %v2772, 48
  %v2777 = vpop.permute.xlu0 %2776
  %2778 = vrot.lane.b32.xlu0 %v2773, 48
  %v2779 = vpop.permute.xlu0 %2778
  %2782 = vst.msk [vmem:[#allocation7 + $0x24] sm:$0xff] %vm2542, %v2777
  %2783 = vst.msk [vmem:[#allocation7 + $0x2c] sm:$0xf] %vm2544, %v2779
  %2784 = vrot.lane.b32.xlu0 %v2772, 56
  %v2785 = vpop.permute.xlu0 %2784
  %2786 = vrot.lane.b32.xlu0 %v2773, 56
  %v2787 = vpop.permute.xlu0 %2786
  %2790 = vst.msk [vmem:[#allocation7 + $0x22] sm:$0xfc] %vm2552, %v2785
  %2791 = vst.msk [vmem:[#allocation7 + $0x2a] sm:$0x3f] %vm2554, %v2787
  %2792 = vrot.lane.b32.xlu0 %v2772, 64
  %v2793 = vpop.permute.xlu0 %2792
  %2794 = vrot.lane.b32.xlu0 %v2773, 64
  %v2795 = vpop.permute.xlu0 %2794
  %2798 = vst.msk [vmem:[#allocation7 + $0x20] sm:$0xf0] %vm2562, %v2793
  %2799 = vst.msk [vmem:[#allocation7 + $0x28] sm:$0xff] %vm2564, %v2795
  %v2800 = vld [vmem:[#allocation3 + $0x40] sm:$0xff]
  %v2801 = vld [vmem:[#allocation3 + $0x48] sm:$0xff]
  %2802 = vst.msk [vmem:[#allocation7 + $0x30] sm:$0xff] %vm2276, %v2800
  %2803 = vst.msk [vmem:[#allocation7 + $0x38] sm:$0xf] %vm2474, %v2801
  %2806 = vrot.lane.b32.xlu0 %v2800, 8
  %v2807 = vpop.permute.xlu0 %2806
  %2808 = vrot.lane.b32.xlu0 %v2801, 8
  %v2809 = vpop.permute.xlu0 %2808
  %2812 = vst.msk [vmem:[#allocation7 + $0x2e] sm:$0xfc] %vm2484, %v2807
  %2813 = vst.msk [vmem:[#allocation7 + $0x36] sm:$0x3f] %vm2486, %v2809
  %2814 = vrot.lane.b32.xlu0 %v2800, 16
  %v2815 = vpop.permute.xlu0 %2814
  %2816 = vrot.lane.b32.xlu0 %v2801, 16
  %v2817 = vpop.permute.xlu0 %2816
  %2820 = vst.msk [vmem:[#allocation7 + $0x2c] sm:$0xf0] %vm2494, %v2815
  %2821 = vst.msk [vmem:[#allocation7 + $0x34] sm:$0xff] %vm2496, %v2817
  %v2822 = vld [vmem:[#allocation3 + $0x50] sm:$0xff]
  %v2823 = vld [vmem:[#allocation3 + $0x58] sm:$0xff]
  %2826 = vrot.lane.b32.xlu0 %v2822, 24
  %v2827 = vpop.permute.xlu0 %2826
  %2828 = vrot.lane.b32.xlu0 %v2823, 24
  %v2829 = vpop.permute.xlu0 %2828
  %2832 = vst.msk [vmem:[#allocation7 + $0x30] sm:$0xff] %vm2508, %v2827
  %2833 = vst.msk [vmem:[#allocation7 + $0x38] sm:$0xf] %vm2510, %v2829
  %2834 = vrot.lane.b32.xlu0 %v2822, 32
  %v2835 = vpop.permute.xlu0 %2834
  %2836 = vrot.lane.b32.xlu0 %v2823, 32
  %v2837 = vpop.permute.xlu0 %2836
  %2840 = vst.msk [vmem:[#allocation7 + $0x2e] sm:$0xfc] %vm2518, %v2835
  %2841 = vst.msk [vmem:[#allocation7 + $0x36] sm:$0x3f] %vm2520, %v2837
  %2842 = vrot.lane.b32.xlu0 %v2822, 40
  %v2843 = vpop.permute.xlu0 %2842
  %2844 = vrot.lane.b32.xlu0 %v2823, 40
  %v2845 = vpop.permute.xlu0 %2844
  %2848 = vst.msk [vmem:[#allocation7 + $0x2c] sm:$0xf0] %vm2528, %v2843
  %2849 = vst.msk [vmem:[#allocation7 + $0x34] sm:$0xff] %vm2530, %v2845
  %v2850 = vld [vmem:[#allocation3 + $0x60] sm:$0xff]
  %v2851 = vld [vmem:[#allocation3 + $0x68] sm:$0xff]
  %2854 = vrot.lane.b32.xlu0 %v2850, 48
  %v2855 = vpop.permute.xlu0 %2854
  %2856 = vrot.lane.b32.xlu0 %v2851, 48
  %v2857 = vpop.permute.xlu0 %2856
  %2860 = vst.msk [vmem:[#allocation7 + $0x30] sm:$0xff] %vm2542, %v2855
  %2861 = vst.msk [vmem:[#allocation7 + $0x38] sm:$0xf] %vm2544, %v2857
  %2862 = vrot.lane.b32.xlu0 %v2850, 56
  %v2863 = vpop.permute.xlu0 %2862
  %2864 = vrot.lane.b32.xlu0 %v2851, 56
  %v2865 = vpop.permute.xlu0 %2864
  %2868 = vst.msk [vmem:[#allocation7 + $0x2e] sm:$0xfc] %vm2552, %v2863
  %2869 = vst.msk [vmem:[#allocation7 + $0x36] sm:$0x3f] %vm2554, %v2865
  %2870 = vrot.lane.b32.xlu0 %v2850, 64
  %v2871 = vpop.permute.xlu0 %2870
  %2872 = vrot.lane.b32.xlu0 %v2851, 64
  %v2873 = vpop.permute.xlu0 %2872
  %2876 = vst.msk [vmem:[#allocation7 + $0x2c] sm:$0xf0] %vm2562, %v2871
  %2877 = vst.msk [vmem:[#allocation7 + $0x34] sm:$0xff] %vm2564, %v2873
  %v2878 = vld [vmem:[#allocation3 + $0x50] sm:$0xff]
  %v2879 = vld [vmem:[#allocation3 + $0x58] sm:$0xff]
  %2880 = vst.msk [vmem:[#allocation7 + $0x3c] sm:$0xff] %vm2276, %v2878
  %2881 = vst.msk [vmem:[#allocation7 + $0x44] sm:$0xf] %vm2474, %v2879
  %2884 = vrot.lane.b32.xlu0 %v2878, 8
  %v2885 = vpop.permute.xlu0 %2884
  %2886 = vrot.lane.b32.xlu0 %v2879, 8
  %v2887 = vpop.permute.xlu0 %2886
  %2890 = vst.msk [vmem:[#allocation7 + $0x3a] sm:$0xfc] %vm2484, %v2885
  %2891 = vst.msk [vmem:[#allocation7 + $0x42] sm:$0x3f] %vm2486, %v2887
  %2892 = vrot.lane.b32.xlu0 %v2878, 16
  %v2893 = vpop.permute.xlu0 %2892
  %2894 = vrot.lane.b32.xlu0 %v2879, 16
  %v2895 = vpop.permute.xlu0 %2894
  %2898 = vst.msk [vmem:[#allocation7 + $0x38] sm:$0xf0] %vm2494, %v2893
  %2899 = vst.msk [vmem:[#allocation7 + $0x40] sm:$0xff] %vm2496, %v2895
  %v2900 = vld [vmem:[#allocation3 + $0x60] sm:$0xff]
  %v2901 = vld [vmem:[#allocation3 + $0x68] sm:$0xff]
  %2904 = vrot.lane.b32.xlu0 %v2900, 24
  %v2905 = vpop.permute.xlu0 %2904
  %2906 = vrot.lane.b32.xlu0 %v2901, 24
  %v2907 = vpop.permute.xlu0 %2906
  %2910 = vst.msk [vmem:[#allocation7 + $0x3c] sm:$0xff] %vm2508, %v2905
  %2911 = vst.msk [vmem:[#allocation7 + $0x44] sm:$0xf] %vm2510, %v2907
  %2912 = vrot.lane.b32.xlu0 %v2900, 32
  %v2913 = vpop.permute.xlu0 %2912
  %2914 = vrot.lane.b32.xlu0 %v2901, 32
  %v2915 = vpop.permute.xlu0 %2914
  %2918 = vst.msk [vmem:[#allocation7 + $0x3a] sm:$0xfc] %vm2518, %v2913
  %2919 = vst.msk [vmem:[#allocation7 + $0x42] sm:$0x3f] %vm2520, %v2915
  %2920 = vrot.lane.b32.xlu0 %v2900, 40
  %v2921 = vpop.permute.xlu0 %2920
  %2922 = vrot.lane.b32.xlu0 %v2901, 40
  %v2923 = vpop.permute.xlu0 %2922
  %2926 = vst.msk [vmem:[#allocation7 + $0x38] sm:$0xf0] %vm2528, %v2921
  %2927 = vst.msk [vmem:[#allocation7 + $0x40] sm:$0xff] %vm2530, %v2923
  %v2928 = vld [vmem:[#allocation3 + $0x70] sm:$0xff]
  %v2929 = vld [vmem:[#allocation3 + $0x78] sm:$0xff]
  %2932 = vrot.lane.b32.xlu0 %v2928, 48
  %v2933 = vpop.permute.xlu0 %2932
  %2934 = vrot.lane.b32.xlu0 %v2929, 48
  %v2935 = vpop.permute.xlu0 %2934
  %2938 = vst.msk [vmem:[#allocation7 + $0x3c] sm:$0xff] %vm2542, %v2933
  %2939 = vst.msk [vmem:[#allocation7 + $0x44] sm:$0xf] %vm2544, %v2935
  %2940 = vrot.lane.b32.xlu0 %v2928, 56
  %v2941 = vpop.permute.xlu0 %2940
  %2942 = vrot.lane.b32.xlu0 %v2929, 56
  %v2943 = vpop.permute.xlu0 %2942
  %2946 = vst.msk [vmem:[#allocation7 + $0x3a] sm:$0xfc] %vm2552, %v2941
  %2947 = vst.msk [vmem:[#allocation7 + $0x42] sm:$0x3f] %vm2554, %v2943
  %2948 = vrot.lane.b32.xlu0 %v2928, 64
  %v2949 = vpop.permute.xlu0 %2948
  %2950 = vrot.lane.b32.xlu0 %v2929, 64
  %v2951 = vpop.permute.xlu0 %2950
  %2954 = vst.msk [vmem:[#allocation7 + $0x38] sm:$0xf0] %vm2562, %v2949
  %2955 = vst.msk [vmem:[#allocation7 + $0x40] sm:$0xff] %vm2564, %v2951
  %v2956 = vld [vmem:[#allocation7] sm:$0xff]
  %v2957 = vld [vmem:[#allocation7 + $0x8] sm:$0xff]
  %v2958 = vld [vmem:[#allocation7 + $0x10] sm:$0xff]
  %v2959 = vld [vmem:[#allocation7 + $0x18] sm:$0xff]
  %v2960 = vld [vmem:[#allocation7 + $0x20] sm:$0xff]
  %v2961 = vld [vmem:[#allocation7 + $0x28] sm:$0xff]
  %v2962 = vld [vmem:[#allocation7 + $0x30] sm:$0xff]
  %v2963 = vld [vmem:[#allocation7 + $0x38] sm:$0xff]
  %v2964 = vld [vmem:[#allocation7 + $0x40] sm:$0xff]
  %v2965 = vld [vmem:[%s3] sm:$0xff]
  %v2966 = vld [vmem:[%s3 + $0x8] sm:$0xff]
  %v2967 = vld [vmem:[%s3 + $0x10] sm:$0xff]
  %v2968 = vld [vmem:[%s3 + $0x18] sm:$0xff]
  %v2969 = vld [vmem:[%s3 + $0x20] sm:$0xff]
  %v2970 = vld [vmem:[%s3 + $0x28] sm:$0xff]
  %v2971 = vld [vmem:[%s3 + $0x30] sm:$0xff]
  %v2972 = vld [vmem:[%s3 + $0x38] sm:$0xff]
  %v2973 = vld [vmem:[%s3 + $0x40] sm:$0xff]
  %vm2974 = vcmask 588800
  %v2976 = vsel %vm2974, %v2956, 0
  %v2979 = vsel %vm2974, %v2957, 0
  %v2982 = vsel %vm2974, %v2958, 0
  %v2985 = vsel %vm2974, %v2959, 0
  %v2988 = vsel %vm2974, %v2960, 0
  %v2991 = vsel %vm2974, %v2961, 0
  %v2994 = vsel %vm2974, %v2962, 0
  %v2997 = vsel %vm2974, %v2963, 0
  %v3000 = vsel %vm2974, %v2964, 0
  %3002 = vmatpush.msra.mxu0 0.0
  %3003 = vmatpush.msra.mxu0 0.0
  %3004 = vmatpush.msra.mxu0 0.0
  %3005 = vmatpush.msra.mxu0 0.0
  %3006 = vmatpush.msra.mxu0 0.0
  %3007 = vmatpush.msra.mxu0 0.0
  %3008 = vmatpush.msra.mxu0 0.0
  %3009 = vmatpush.msra.mxu0 %v2973
  %3010 = vmatpush.msra.mxu0 %v2972
  %3011 = vmatpush.msra.mxu0 %v2971
  %3012 = vmatpush.msra.mxu0 %v2970
  %3013 = vmatpush.msra.mxu0 %v2969
  %3014 = vmatpush.msra.mxu0 %v2968
  %3015 = vmatpush.msra.mxu0 %v2967
  %3016 = vmatpush.msra.mxu0 %v2966
  %3017 = vmatpush.msra.mxu0 %v2965
  %3018 = vmatmul.f32.gmra.mxu0 %v2976
  %v3019 = vpop.f32.mrf.mxu0
  %v3020 = vadd.f32 0.0, %v3019
  %3021 = vmatmul.f32.gmra.mxu0 %v2979
  %v3022 = vpop.f32.mrf.mxu0
  %v3023 = vadd.f32 0.0, %v3022
  %3024 = vmatmul.f32.gmra.mxu0 %v2982
  %v3025 = vpop.f32.mrf.mxu0
  %v3026 = vadd.f32 0.0, %v3025
  %3027 = vmatmul.f32.gmra.mxu0 %v2985
  %v3028 = vpop.f32.mrf.mxu0
  %v3029 = vadd.f32 0.0, %v3028
  %3030 = vmatmul.f32.gmra.mxu0 %v2988
  %v3031 = vpop.f32.mrf.mxu0
  %v3032 = vadd.f32 0.0, %v3031
  %3033 = vmatmul.f32.gmra.mxu0 %v2991
  %v3034 = vpop.f32.mrf.mxu0
  %v3035 = vadd.f32 0.0, %v3034
  %3036 = vmatmul.f32.gmra.mxu0 %v2994
  %v3037 = vpop.f32.mrf.mxu0
  %v3038 = vadd.f32 0.0, %v3037
  %3039 = vmatmul.f32.gmra.mxu0 %v2997
  %v3040 = vpop.f32.mrf.mxu0
  %v3041 = vadd.f32 0.0, %v3040
  %3042 = vmatmul.f32.gmra.mxu0 %v3000
  %v3043 = vpop.f32.mrf.mxu0
  %v3044 = vadd.f32 0.0, %v3043
  %3045 = vdwg.mxu0
  %vm3046 = vcmask 130048
  %v3047 = vsel %vm3046, %v3020, 0.0
  %v3048 = vsel %vm3046, %v3023, 0.0
  %v3049 = vadd.f32 %v3047, %v3048
  %v3050 = vsel %vm3046, %v3026, 0.0
  %v3051 = vadd.f32 %v3049, %v3050
  %v3052 = vsel %vm3046, %v3029, 0.0
  %v3053 = vadd.f32 %v3051, %v3052
  %v3054 = vsel %vm3046, %v3032, 0.0
  %v3055 = vadd.f32 %v3053, %v3054
  %v3056 = vsel %vm3046, %v3035, 0.0
  %v3057 = vadd.f32 %v3055, %v3056
  %v3058 = vsel %vm3046, %v3038, 0.0
  %v3059 = vadd.f32 %v3057, %v3058
  %v3060 = vsel %vm3046, %v3041, 0.0
  %v3061 = vadd.f32 %v3059, %v3060
  %v3062 = vsel %vm3046, %v3044, 0.0
  %v3063 = vadd.f32 %v3061, %v3062
  %v3064 = vrot.slane %v3063, 4
  %v3065 = vadd.f32 %v3063, %v3064
  %v3066 = vrot.slane %v3065, 2
  %v3067 = vadd.f32 %v3065, %v3066
  %v3068 = vrot.slane %v3067, 1
  %v3069 = vadd.f32 %v3067, %v3068
  %v3070 = vmul.f32 %v3020, %v3020
  %v3071 = vmul.f32 %v3023, %v3023
  %v3072 = vmul.f32 %v3026, %v3026
  %v3073 = vmul.f32 %v3029, %v3029
  %v3074 = vmul.f32 %v3032, %v3032
  %v3075 = vmul.f32 %v3035, %v3035
  %v3076 = vmul.f32 %v3038, %v3038
  %v3077 = vmul.f32 %v3041, %v3041
  %v3078 = vmul.f32 %v3044, %v3044
  %v3079 = vsel %vm3046, %v3070, 0.0
  %v3080 = vsel %vm3046, %v3071, 0.0
  %v3081 = vadd.f32 %v3079, %v3080
  %v3082 = vsel %vm3046, %v3072, 0.0
  %v3083 = vadd.f32 %v3081, %v3082
  %v3084 = vsel %vm3046, %v3073, 0.0
  %v3085 = vadd.f32 %v3083, %v3084
  %v3086 = vsel %vm3046, %v3074, 0.0
  %v3087 = vadd.f32 %v3085, %v3086
  %v3088 = vsel %vm3046, %v3075, 0.0
  %v3089 = vadd.f32 %v3087, %v3088
  %v3090 = vsel %vm3046, %v3076, 0.0
  %v3091 = vadd.f32 %v3089, %v3090
  %v3092 = vsel %vm3046, %v3077, 0.0
  %v3093 = vadd.f32 %v3091, %v3092
  %v3094 = vsel %vm3046, %v3078, 0.0
  %v3095 = vadd.f32 %v3093, %v3094
  %v3096 = vrot.slane %v3095, 4
  %v3097 = vadd.f32 %v3095, %v3096
  %v3098 = vrot.slane %v3097, 2
  %v3099 = vadd.f32 %v3097, %v3098
  %v3100 = vrot.slane %v3099, 1
  %v3101 = vadd.f32 %v3099, %v3100
  %v3102 = vmul.f32 %v3069, 0.013888889
  %v3103 = vmul.f32 %v3101, 0.013888889
  %v3104 = vmul.f32 %v3102, %v3102
  %v3105 = vsub.f32 %v3103, %v3104
  %v3106 = vmax.f32 %v3105, 0.0
  %v3107 = vadd.f32 %v3106, 1e-05
  %v3108 = vrsqrt.pop %v3107
  %v3109 = vmul.f32 %v3108, %v3107
  %v3110 = vmul.f32 %v3109, %v3108
  %v3111 = vmul.f32 0.5, %v3110
  %v3112 = vsub.f32 1.5, %v3111
  %v3113 = vmul.f32 %v3108, %v3112
  %vm3114 = vweird.f32 %v3107
  %vm3115 = vweird.f32 %v3108
  %vm3116 = vmor %vm3114, %vm3115
  %v3117 = vsel %vm3116, %v3108, %v3113
  %v3118 = vmul.f32 %v26, %v3117
  %v3119 = vmul.f32 %v3102, %v3118
  %v3121 = vrot.slane %v3119, 7
  %v3123 = vsub.f32 %v26, %v3121
  %v3124 = vperm.slane %v3118, 4
  %v3125 = vmul.f32 %v3020, %v3124
  %v3126 = vmul.f32 %v3023, %v3124
  %v3127 = vmul.f32 %v3026, %v3124
  %v3128 = vmul.f32 %v3029, %v3124
  %v3129 = vmul.f32 %v3032, %v3124
  %v3130 = vmul.f32 %v3035, %v3124
  %v3131 = vmul.f32 %v3038, %v3124
  %v3132 = vmul.f32 %v3041, %v3124
  %v3133 = vmul.f32 %v3044, %v3124
  %v3134 = vperm.slane %v3123, 5
  %v3135 = vadd.f32 %v3125, %v3134
  %v3136 = vadd.f32 %v3126, %v3134
  %v3137 = vadd.f32 %v3127, %v3134
  %v3138 = vadd.f32 %v3128, %v3134
  %v3139 = vadd.f32 %v3129, %v3134
  %v3140 = vadd.f32 %v3130, %v3134
  %v3141 = vadd.f32 %v3131, %v3134
  %v3142 = vadd.f32 %v3132, %v3134
  %v3143 = vadd.f32 %v3133, %v3134
  %v3144 = vmul.f32 %v3135, 0.02
  %v3145 = vmul.f32 %v3136, 0.02
  %v3146 = vmul.f32 %v3137, 0.02
  %v3147 = vmul.f32 %v3138, 0.02
  %v3148 = vmul.f32 %v3139, 0.02
  %v3149 = vmul.f32 %v3140, 0.02
  %v3150 = vmul.f32 %v3141, 0.02
  %v3151 = vmul.f32 %v3142, 0.02
  %v3152 = vmul.f32 %v3143, 0.02
  %v3153 = vmax.f32 %v3135, %v3144
  %v3154 = vmax.f32 %v3136, %v3145
  %v3155 = vmax.f32 %v3137, %v3146
  %v3156 = vmax.f32 %v3138, %v3147
  %v3157 = vmax.f32 %v3139, %v3148
  %v3158 = vmax.f32 %v3140, %v3149
  %v3159 = vmax.f32 %v3141, %v3150
  %v3160 = vmax.f32 %v3142, %v3151
  %v3161 = vmax.f32 %v3143, %v3152
  %3162 = vst.msk [vmem:[#allocation4] sm:$0xff] %vm3046, %v3153
  %3163 = vst.msk [vmem:[#allocation4 + $0x8] sm:$0xff] %vm3046, %v3154
  %3164 = vst.msk [vmem:[#allocation4 + $0x10] sm:$0xff] %vm3046, %v3155
  %3165 = vst.msk [vmem:[#allocation4 + $0x18] sm:$0xff] %vm3046, %v3156
  %3166 = vst.msk [vmem:[#allocation4 + $0x20] sm:$0xff] %vm3046, %v3157
  %3167 = vst.msk [vmem:[#allocation4 + $0x28] sm:$0xff] %vm3046, %v3158
  %3168 = vst.msk [vmem:[#allocation4 + $0x30] sm:$0xff] %vm3046, %v3159
  %3169 = vst.msk [vmem:[#allocation4 + $0x38] sm:$0xff] %vm3046, %v3160
  %3170 = vst.msk [vmem:[#allocation4 + $0x40] sm:$0xff] %vm3046, %v3161
  %v3171 = vld [vmem:[#allocation4] sm:$0xff]
  %v3172 = vld [vmem:[#allocation4 + $0x8] sm:$0xf]
  %3173 = vst.msk [vmem:[#allocation8] sm:$0xff] %vm3046, %v3171
  %vm3176 = vcmask 1045504
  %v3177 = vrot.slane %v3171, 2
  %v3178 = vrot.slane %v3172, 2
  %v3179 = vsel %vm3176, %v3177, %v3178
  %3180 = vrot.lane.b32.xlu0 %v3179, 16
  %v3181 = vpop.permute.xlu0 %3180
  %vm3183 = vcmask 261248
  %3184 = vst.msk [vmem:[#allocation8] sm:$0xff] %vm3183, %v3181
  %v3185 = vrot.slane %v3171, 4
  %v3186 = vrot.slane %v3172, 4
  %v3187 = vsel %vm2207, %v3185, %v3186
  %3188 = vrot.lane.b32.xlu0 %v3187, 32
  %v3189 = vpop.permute.xlu0 %3188
  %vm3191 = vcmask 392448
  %3192 = vst.msk [vmem:[#allocation8] sm:$0xff] %vm3191, %v3189
  %v3193 = vld [vmem:[#allocation4 + $0xc] sm:$0xff]
  %v3194 = vld [vmem:[#allocation4 + $0x14] sm:$0xf]
  %3196 = vrot.lane.b32.xlu0 %v3193, 48
  %v3197 = vpop.permute.xlu0 %3196
  %vm3199 = vcmask 523648
  %3200 = vst.msk [vmem:[#allocation8] sm:$0xff] %vm3199, %v3197
  %v3202 = vrot.slane %v3193, 2
  %v3203 = vrot.slane %v3194, 2
  %v3204 = vsel %vm3176, %v3202, %v3203
  %3205 = vrot.lane.b32.xlu0 %v3204, 64
  %v3206 = vpop.permute.xlu0 %3205
  %vm3208 = vcmask 654848
  %3209 = vst.msk [vmem:[#allocation8] sm:$0xff] %vm3208, %v3206
  %v3210 = vrot.slane %v3193, 4
  %v3211 = vrot.slane %v3194, 4
  %v3212 = vsel %vm2207, %v3210, %v3211
  %3213 = vrot.lane.b32.xlu0 %v3212, 80
  %v3214 = vpop.permute.xlu0 %3213
  %vm3216 = vcmask 786048
  %3217 = vst.msk [vmem:[#allocation8] sm:$0xff] %vm3216, %v3214
  %v3218 = vld [vmem:[#allocation4 + $0x18] sm:$0xff]
  %v3219 = vld [vmem:[#allocation4 + $0x20] sm:$0xf]
  %3221 = vrot.lane.b32.xlu0 %v3218, 96
  %v3222 = vpop.permute.xlu0 %3221
  %vm3224 = vcmask 917248
  %3225 = vst.msk [vmem:[#allocation8] sm:$0xff] %vm3224, %v3222
  %v3227 = vrot.slane %v3218, 2
  %v3228 = vrot.slane %v3219, 2
  %v3229 = vsel %vm3176, %v3227, %v3228
  %3230 = vrot.lane.b32.xlu0 %v3229, 112
  %v3231 = vpop.permute.xlu0 %3230
  %vm3233 = vcmask 1048448
  %3234 = vst.msk [vmem:[#allocation8] sm:$0xff] %vm3233, %v3231
  %v3235 = vrot.slane %v3218, 4
  %v3236 = vrot.slane %v3219, 4
  %v3237 = vsel %vm2207, %v3235, %v3236
  %3239 = vst.msk [vmem:[#allocation8 + $0x8] sm:$0xff] %vm3046, %v3237
  %v3240 = vld [vmem:[#allocation4 + $0xc] sm:$0xff]
  %v3241 = vld [vmem:[#allocation4 + $0x14] sm:$0xf]
  %3242 = vst.msk [vmem:[#allocation8 + $0x10] sm:$0xff] %vm3046, %v3240
  %v3245 = vrot.slane %v3240, 2
  %v3246 = vrot.slane %v3241, 2
  %v3247 = vsel %vm3176, %v3245, %v3246
  %3248 = vrot.lane.b32.xlu0 %v3247, 16
  %v3249 = vpop.permute.xlu0 %3248
  %3251 = vst.msk [vmem:[#allocation8 + $0x10] sm:$0xff] %vm3183, %v3249
  %v3252 = vrot.slane %v3240, 4
  %v3253 = vrot.slane %v3241, 4
  %v3254 = vsel %vm2207, %v3252, %v3253
  %3255 = vrot.lane.b32.xlu0 %v3254, 32
  %v3256 = vpop.permute.xlu0 %3255
  %3258 = vst.msk [vmem:[#allocation8 + $0x10] sm:$0xff] %vm3191, %v3256
  %v3259 = vld [vmem:[#allocation4 + $0x18] sm:$0xff]
  %v3260 = vld [vmem:[#allocation4 + $0x20] sm:$0xf]
  %3262 = vrot.lane.b32.xlu0 %v3259, 48
  %v3263 = vpop.permute.xlu0 %3262
  %3265 = vst.msk [vmem:[#allocation8 + $0x10] sm:$0xff] %vm3199, %v3263
  %v3267 = vrot.slane %v3259, 2
  %v3268 = vrot.slane %v3260, 2
  %v3269 = vsel %vm3176, %v3267, %v3268
  %3270 = vrot.lane.b32.xlu0 %v3269, 64
  %v3271 = vpop.permute.xlu0 %3270
  %3273 = vst.msk [vmem:[#allocation8 + $0x10] sm:$0xff] %vm3208, %v3271
  %v3274 = vrot.slane %v3259, 4
  %v3275 = vrot.slane %v3260, 4
  %v3276 = vsel %vm2207, %v3274, %v3275
  %3277 = vrot.lane.b32.xlu0 %v3276, 80
  %v3278 = vpop.permute.xlu0 %3277
  %3280 = vst.msk [vmem:[#allocation8 + $0x10] sm:$0xff] %vm3216, %v3278
  %v3281 = vld [vmem:[#allocation4 + $0x24] sm:$0xff]
  %v3282 = vld [vmem:[#allocation4 + $0x2c] sm:$0xf]
  %3284 = vrot.lane.b32.xlu0 %v3281, 96
  %v3285 = vpop.permute.xlu0 %3284
  %3287 = vst.msk [vmem:[#allocation8 + $0x10] sm:$0xff] %vm3224, %v3285
  %v3289 = vrot.slane %v3281, 2
  %v3290 = vrot.slane %v3282, 2
  %v3291 = vsel %vm3176, %v3289, %v3290
  %3292 = vrot.lane.b32.xlu0 %v3291, 112
  %v3293 = vpop.permute.xlu0 %3292
  %3295 = vst.msk [vmem:[#allocation8 + $0x10] sm:$0xff] %vm3233, %v3293
  %v3296 = vrot.slane %v3281, 4
  %v3297 = vrot.slane %v3282, 4
  %v3298 = vsel %vm2207, %v3296, %v3297
  %3300 = vst.msk [vmem:[#allocation8 + $0x18] sm:$0xff] %vm3046, %v3298
  %v3301 = vld [vmem:[#allocation4 + $0x18] sm:$0xff]
  %v3302 = vld [vmem:[#allocation4 + $0x20] sm:$0xf]
  %3303 = vst.msk [vmem:[#allocation8 + $0x20] sm:$0xff] %vm3046, %v3301
  %v3306 = vrot.slane %v3301, 2
  %v3307 = vrot.slane %v3302, 2
  %v3308 = vsel %vm3176, %v3306, %v3307
  %3309 = vrot.lane.b32.xlu0 %v3308, 16
  %v3310 = vpop.permute.xlu0 %3309
  %3312 = vst.msk [vmem:[#allocation8 + $0x20] sm:$0xff] %vm3183, %v3310
  %v3313 = vrot.slane %v3301, 4
  %v3314 = vrot.slane %v3302, 4
  %v3315 = vsel %vm2207, %v3313, %v3314
  %3316 = vrot.lane.b32.xlu0 %v3315, 32
  %v3317 = vpop.permute.xlu0 %3316
  %3319 = vst.msk [vmem:[#allocation8 + $0x20] sm:$0xff] %vm3191, %v3317
  %v3320 = vld [vmem:[#allocation4 + $0x24] sm:$0xff]
  %v3321 = vld [vmem:[#allocation4 + $0x2c] sm:$0xf]
  %3323 = vrot.lane.b32.xlu0 %v3320, 48
  %v3324 = vpop.permute.xlu0 %3323
  %3326 = vst.msk [vmem:[#allocation8 + $0x20] sm:$0xff] %vm3199, %v3324
  %v3328 = vrot.slane %v3320, 2
  %v3329 = vrot.slane %v3321, 2
  %v3330 = vsel %vm3176, %v3328, %v3329
  %3331 = vrot.lane.b32.xlu0 %v3330, 64
  %v3332 = vpop.permute.xlu0 %3331
  %3334 = vst.msk [vmem:[#allocation8 + $0x20] sm:$0xff] %vm3208, %v3332
  %v3335 = vrot.slane %v3320, 4
  %v3336 = vrot.slane %v3321, 4
  %v3337 = vsel %vm2207, %v3335, %v3336
  %3338 = vrot.lane.b32.xlu0 %v3337, 80
  %v3339 = vpop.permute.xlu0 %3338
  %3341 = vst.msk [vmem:[#allocation8 + $0x20] sm:$0xff] %vm3216, %v3339
  %v3342 = vld [vmem:[#allocation4 + $0x30] sm:$0xff]
  %v3343 = vld [vmem:[#allocation4 + $0x38] sm:$0xf]
  %3345 = vrot.lane.b32.xlu0 %v3342, 96
  %v3346 = vpop.permute.xlu0 %3345
  %3348 = vst.msk [vmem:[#allocation8 + $0x20] sm:$0xff] %vm3224, %v3346
  %v3350 = vrot.slane %v3342, 2
  %v3351 = vrot.slane %v3343, 2
  %v3352 = vsel %vm3176, %v3350, %v3351
  %3353 = vrot.lane.b32.xlu0 %v3352, 112
  %v3354 = vpop.permute.xlu0 %3353
  %3356 = vst.msk [vmem:[#allocation8 + $0x20] sm:$0xff] %vm3233, %v3354
  %v3357 = vrot.slane %v3342, 4
  %v3358 = vrot.slane %v3343, 4
  %v3359 = vsel %vm2207, %v3357, %v3358
  %3361 = vst.msk [vmem:[#allocation8 + $0x28] sm:$0xff] %vm3046, %v3359
  %v3362 = vld [vmem:[#allocation4 + $0x24] sm:$0xff]
  %v3363 = vld [vmem:[#allocation4 + $0x2c] sm:$0xf]
  %3364 = vst.msk [vmem:[#allocation8 + $0x30] sm:$0xff] %vm3046, %v3362
  %v3367 = vrot.slane %v3362, 2
  %v3368 = vrot.slane %v3363, 2
  %v3369 = vsel %vm3176, %v3367, %v3368
  %3370 = vrot.lane.b32.xlu0 %v3369, 16
  %v3371 = vpop.permute.xlu0 %3370
  %3373 = vst.msk [vmem:[#allocation8 + $0x30] sm:$0xff] %vm3183, %v3371
  %v3374 = vrot.slane %v3362, 4
  %v3375 = vrot.slane %v3363, 4
  %v3376 = vsel %vm2207, %v3374, %v3375
  %3377 = vrot.lane.b32.xlu0 %v3376, 32
  %v3378 = vpop.permute.xlu0 %3377
  %3380 = vst.msk [vmem:[#allocation8 + $0x30] sm:$0xff] %vm3191, %v3378
  %v3381 = vld [vmem:[#allocation4 + $0x30] sm:$0xff]
  %v3382 = vld [vmem:[#allocation4 + $0x38] sm:$0xf]
  %3384 = vrot.lane.b32.xlu0 %v3381, 48
  %v3385 = vpop.permute.xlu0 %3384
  %3387 = vst.msk [vmem:[#allocation8 + $0x30] sm:$0xff] %vm3199, %v3385
  %v3389 = vrot.slane %v3381, 2
  %v3390 = vrot.slane %v3382, 2
  %v3391 = vsel %vm3176, %v3389, %v3390
  %3392 = vrot.lane.b32.xlu0 %v3391, 64
  %v3393 = vpop.permute.xlu0 %3392
  %3395 = vst.msk [vmem:[#allocation8 + $0x30] sm:$0xff] %vm3208, %v3393
  %v3396 = vrot.slane %v3381, 4
  %v3397 = vrot.slane %v3382, 4
  %v3398 = vsel %vm2207, %v3396, %v3397
  %3399 = vrot.lane.b32.xlu0 %v3398, 80
  %v3400 = vpop.permute.xlu0 %3399
  %3402 = vst.msk [vmem:[#allocation8 + $0x30] sm:$0xff] %vm3216, %v3400
  %v3403 = vld [vmem:[#allocation4 + $0x3c] sm:$0xff]
  %v3404 = vld [vmem:[#allocation4 + $0x44] sm:$0xf]
  %3406 = vrot.lane.b32.xlu0 %v3403, 96
  %v3407 = vpop.permute.xlu0 %3406
  %3409 = vst.msk [vmem:[#allocation8 + $0x30] sm:$0xff] %vm3224, %v3407
  %v3411 = vrot.slane %v3403, 2
  %v3412 = vrot.slane %v3404, 2
  %v3413 = vsel %vm3176, %v3411, %v3412
  %3414 = vrot.lane.b32.xlu0 %v3413, 112
  %v3415 = vpop.permute.xlu0 %3414
  %3417 = vst.msk [vmem:[#allocation8 + $0x30] sm:$0xff] %vm3233, %v3415
  %v3418 = vrot.slane %v3403, 4
  %v3419 = vrot.slane %v3404, 4
  %v3420 = vsel %vm2207, %v3418, %v3419
  %3422 = vst.msk [vmem:[#allocation8 + $0x38] sm:$0xff] %vm3046, %v3420
  %v3423 = vld [vmem:[#allocation8] sm:$0xff]
  %v3424 = vld [vmem:[#allocation8 + $0x8] sm:$0xff]
  %v3425 = vld [vmem:[#allocation8 + $0x10] sm:$0xff]
  %v3426 = vld [vmem:[#allocation8 + $0x18] sm:$0xff]
  %v3427 = vld [vmem:[#allocation8 + $0x20] sm:$0xff]
  %v3428 = vld [vmem:[#allocation8 + $0x28] sm:$0xff]
  %v3429 = vld [vmem:[#allocation8 + $0x30] sm:$0xff]
  %v3430 = vld [vmem:[#allocation8 + $0x38] sm:$0xff]
  %v3431 = vld [vmem:[%s4] sm:$0xff]
  %v3432 = vld [vmem:[%s4 + $0x8] sm:$0xff]
  %v3433 = vld [vmem:[%s4 + $0x10] sm:$0xff]
  %v3434 = vld [vmem:[%s4 + $0x18] sm:$0xff]
  %v3435 = vld [vmem:[%s4 + $0x20] sm:$0xff]
  %v3436 = vld [vmem:[%s4 + $0x28] sm:$0xff]
  %v3437 = vld [vmem:[%s4 + $0x30] sm:$0xff]
  %v3438 = vld [vmem:[%s4 + $0x38] sm:$0xff]
  %v3439 = vld [vmem:[%s4 + $0x40] sm:$0xff]
  %v3440 = vld [vmem:[%s4 + $0x48] sm:$0xff]
  %v3441 = vld [vmem:[%s4 + $0x50] sm:$0xff]
  %v3442 = vld [vmem:[%s4 + $0x58] sm:$0xff]
  %v3443 = vld [vmem:[%s4 + $0x60] sm:$0xff]
  %v3444 = vld [vmem:[%s4 + $0x68] sm:$0xff]
  %v3445 = vld [vmem:[%s4 + $0x70] sm:$0xff]
  %v3446 = vld [vmem:[%s4 + $0x78] sm:$0xff]
  %v3447 = vld [vmem:[%s4 + $0x80] sm:$0xff]
  %v3448 = vld [vmem:[%s4 + $0x88] sm:$0xff]
  %v3450 = vsel %vm3046, %v3424, 0
  %v3453 = vsel %vm3046, %v3426, 0
  %v3456 = vsel %vm3046, %v3428, 0
  %v3459 = vsel %vm3046, %v3430, 0
  %3461 = vmatpush.msra.mxu0 %v3446
  %3462 = vmatpush.msra.mxu0 %v3445
  %3463 = vmatpush.msra.mxu0 %v3444
  %3464 = vmatpush.msra.mxu0 %v3443
  %3465 = vmatpush.msra.mxu0 %v3442
  %3466 = vmatpush.msra.mxu0 %v3441
  %3467 = vmatpush.msra.mxu0 %v3440
  %3468 = vmatpush.msra.mxu0 %v3439
  %3469 = vmatpush.msra.mxu0 %v3438
  %3470 = vmatpush.msra.mxu0 %v3437
  %3471 = vmatpush.msra.mxu0 %v3436
  %3472 = vmatpush.msra.mxu0 %v3435
  %3473 = vmatpush.msra.mxu0 %v3434
  %3474 = vmatpush.msra.mxu0 %v3433
  %3475 = vmatpush.msra.mxu0 %v3432
  %3476 = vmatpush.msra.mxu0 %v3431
  %3477 = vmatmul.f32.gmra.mxu0 %v3423
  %v3478 = vpop.f32.mrf.mxu0
  %v3479 = vadd.f32 0.0, %v3478
  %3480 = vmatmul.f32.gmra.mxu0 %v3425
  %v3481 = vpop.f32.mrf.mxu0
  %v3482 = vadd.f32 0.0, %v3481
  %3483 = vmatmul.f32.gmra.mxu0 %v3427
  %v3484 = vpop.f32.mrf.mxu0
  %v3485 = vadd.f32 0.0, %v3484
  %3486 = vmatmul.f32.gmra.mxu0 %v3429
  %v3487 = vpop.f32.mrf.mxu0
  %v3488 = vadd.f32 0.0, %v3487
  %3489 = vdwg.mxu0
  %3490 = vmatpush.msra.mxu0 0.0
  %3491 = vmatpush.msra.mxu0 0.0
  %3492 = vmatpush.msra.mxu0 0.0
  %3493 = vmatpush.msra.mxu0 0.0
  %3494 = vmatpush.msra.mxu0 0.0
  %3495 = vmatpush.msra.mxu0 0.0
  %3496 = vmatpush.msra.mxu0 0.0
  %3497 = vmatpush.msra.mxu0 0.0
  %3498 = vmatpush.msra.mxu0 0.0
  %3499 = vmatpush.msra.mxu0 0.0
  %3500 = vmatpush.msra.mxu0 0.0
  %3501 = vmatpush.msra.mxu0 0.0
  %3502 = vmatpush.msra.mxu0 0.0
  %3503 = vmatpush.msra.mxu0 0.0
  %3504 = vmatpush.msra.mxu0 %v3448
  %3505 = vmatpush.msra.mxu0 %v3447
  %3506 = vmatmul.f32.gmra.mxu0 %v3450
  %v3507 = vpop.f32.mrf.mxu0
  %v3508 = vadd.f32 %v3479, %v3507
  %3509 = vmatmul.f32.gmra.mxu0 %v3453
  %v3510 = vpop.f32.mrf.mxu0
  %v3511 = vadd.f32 %v3482, %v3510
  %3512 = vmatmul.f32.gmra.mxu0 %v3456
  %v3513 = vpop.f32.mrf.mxu0
  %v3514 = vadd.f32 %v3485, %v3513
  %3515 = vmatmul.f32.gmra.mxu0 %v3459
  %v3516 = vpop.f32.mrf.mxu0
  %v3517 = vadd.f32 %v3488, %v3516
  %3518 = vdwg.mxu0
  %vm3519 = vcmask 261120
  %v3520 = vsel %vm3519, %v3508, 0.0
  %v3521 = vsel %vm3519, %v3511, 0.0
  %v3522 = vadd.f32 %v3520, %v3521
  %v3523 = vsel %vm3519, %v3514, 0.0
  %v3524 = vadd.f32 %v3522, %v3523
  %v3525 = vsel %vm3519, %v3517, 0.0
  %v3526 = vadd.f32 %v3524, %v3525
  %v3527 = vrot.slane %v3526, 4
  %v3528 = vadd.f32 %v3526, %v3527
  %v3529 = vrot.slane %v3528, 2
  %v3530 = vadd.f32 %v3528, %v3529
  %v3531 = vrot.slane %v3530, 1
  %v3532 = vadd.f32 %v3530, %v3531
  %v3533 = vmul.f32 %v3508, %v3508
  %v3534 = vmul.f32 %v3511, %v3511
  %v3535 = vmul.f32 %v3514, %v3514
  %v3536 = vmul.f32 %v3517, %v3517
  %v3537 = vsel %vm3519, %v3533, 0.0
  %v3538 = vsel %vm3519, %v3534, 0.0
  %v3539 = vadd.f32 %v3537, %v3538
  %v3540 = vsel %vm3519, %v3535, 0.0
  %v3541 = vadd.f32 %v3539, %v3540
  %v3542 = vsel %vm3519, %v3536, 0.0
  %v3543 = vadd.f32 %v3541, %v3542
  %v3544 = vrot.slane %v3543, 4
  %v3545 = vadd.f32 %v3543, %v3544
  %v3546 = vrot.slane %v3545, 2
  %v3547 = vadd.f32 %v3545, %v3546
  %v3548 = vrot.slane %v3547, 1
  %v3549 = vadd.f32 %v3547, %v3548
  %v3550 = vmul.f32 %v3532, 0.03125
  %v3551 = vmul.f32 %v3549, 0.03125
  %v3552 = vmul.f32 %v3550, %v3550
  %v3553 = vsub.f32 %v3551, %v3552
  %v3554 = vmax.f32 %v3553, 0.0
  %v3555 = vadd.f32 %v3554, 1e-05
  %v3556 = vrsqrt.pop %v3555
  %v3557 = vmul.f32 %v3556, %v3555
  %v3558 = vmul.f32 %v3557, %v3556
  %v3559 = vmul.f32 0.5, %v3558
  %v3560 = vsub.f32 1.5, %v3559
  %v3561 = vmul.f32 %v3556, %v3560
  %vm3562 = vweird.f32 %v3555
  %vm3563 = vweird.f32 %v3556
  %vm3564 = vmor %vm3562, %vm3563
  %v3565 = vsel %vm3564, %v3556, %v3561
  %v3566 = vmul.f32 %v26, %v3565
  %v3567 = vmul.f32 %v3550, %v3566
  %v3569 = vrot.slane %v3567, 7
  %v3571 = vsub.f32 %v26, %v3569
  %v3572 = vperm.slane %v3566, 6
  %v3573 = vmul.f32 %v3508, %v3572
  %v3574 = vmul.f32 %v3511, %v3572
  %v3575 = vmul.f32 %v3514, %v3572
  %v3576 = vmul.f32 %v3517, %v3572
  %v3577 = vperm.slane %v3571, 7
  %v3578 = vadd.f32 %v3573, %v3577
  %v3579 = vadd.f32 %v3574, %v3577
  %v3580 = vadd.f32 %v3575, %v3577
  %v3581 = vadd.f32 %v3576, %v3577
  %v3582 = vmul.f32 %v3578, 0.02
  %v3583 = vmul.f32 %v3579, 0.02
  %v3584 = vmul.f32 %v3580, 0.02
  %v3585 = vmul.f32 %v3581, 0.02
  %v3586 = vmax.f32 %v3578, %v3582
  %v3587 = vmax.f32 %v3579, %v3583
  %v3588 = vmax.f32 %v3580, %v3584
  %v3589 = vmax.f32 %v3581, %v3585
  %3590 = vst.msk [vmem:[#allocation5] sm:$0xff] %vm3519, %v3586
  %3591 = vst.msk [vmem:[#allocation5 + $0x8] sm:$0xff] %vm3519, %v3587
  %3592 = vst.msk [vmem:[#allocation5 + $0x10] sm:$0xff] %vm3519, %v3588
  %3593 = vst.msk [vmem:[#allocation5 + $0x18] sm:$0xff] %vm3519, %v3589
  %v3594 = vld [vmem:[#allocation5] sm:$0xff]
  %vm3595 = vcmask 257024
  %3596 = vst.msk [vmem:[#allocation9] sm:$0xf] %vm3595, %v3594
  %v3598 = vrot.slane %v3594, 2
  %3599 = vrot.lane.b32.xlu0 %v3598, 32
  %v3600 = vpop.permute.xlu0 %3599
  %vm3602 = vcmask 519424
  %3603 = vst.msk [vmem:[#allocation9] sm:$0xf] %vm3602, %v3600
  %v3604 = vrot.slane %v3594, 4
  %3605 = vrot.lane.b32.xlu0 %v3604, 64
  %v3606 = vpop.permute.xlu0 %3605
  %vm3608 = vcmask 781824
  %3609 = vst.msk [vmem:[#allocation9] sm:$0xf] %vm3608, %v3606
  %v3610 = vld [vmem:[#allocation5 + $0x8] sm:$0xff]
  %3612 = vrot.lane.b32.xlu0 %v3610, 96
  %v3613 = vpop.permute.xlu0 %3612
  %vm3615 = vcmask 1044224
  %3616 = vst.msk [vmem:[#allocation9] sm:$0xf] %vm3615, %v3613
  %v3617 = vrot.slane %v3610, 2
  %3619 = vst.msk [vmem:[#allocation9 + $0x8] sm:$0xf] %vm3595, %v3617
  %v3620 = vrot.slane %v3610, 4
  %3621 = vrot.lane.b32.xlu0 %v3620, 32
  %v3622 = vpop.permute.xlu0 %3621
  %3624 = vst.msk [vmem:[#allocation9 + $0x8] sm:$0xf] %vm3602, %v3622
  %v3625 = vld [vmem:[#allocation5 + $0x10] sm:$0xff]
  %3627 = vrot.lane.b32.xlu0 %v3625, 64
  %v3628 = vpop.permute.xlu0 %3627
  %3630 = vst.msk [vmem:[#allocation9 + $0x8] sm:$0xf] %vm3608, %v3628
  %v3631 = vrot.slane %v3625, 2
  %3632 = vrot.lane.b32.xlu0 %v3631, 96
  %v3633 = vpop.permute.xlu0 %3632
  %3635 = vst.msk [vmem:[#allocation9 + $0x8] sm:$0xf] %vm3615, %v3633
  %v3636 = vrot.slane %v3625, 4
  %3638 = vst.msk [vmem:[#allocation9 + $0x10] sm:$0xf] %vm3595, %v3636
  %v3639 = vld [vmem:[#allocation5 + $0x8] sm:$0xff]
  %v3641 = vrot.slane %v3639, 4
  %vm3643 = vcmask 261124
  %3644 = vst.msk [vmem:[#allocation9] sm:$0xf0] %vm3643, %v3641
  %v3645 = vrot.slane %v3639, 6
  %3646 = vrot.lane.b32.xlu0 %v3645, 32
  %v3647 = vpop.permute.xlu0 %3646
  %vm3649 = vcmask 523524
  %3650 = vst.msk [vmem:[#allocation9] sm:$0xf0] %vm3649, %v3647
  %3651 = vrot.lane.b32.xlu0 %v3639, 64
  %v3652 = vpop.permute.xlu0 %3651
  %vm3654 = vcmask 785924
  %3655 = vst.msk [vmem:[#allocation9] sm:$0xf0] %vm3654, %v3652
  %v3656 = vld [vmem:[#allocation5 + $0x10] sm:$0xff]
  %v3658 = vrot.slane %v3656, 4
  %3659 = vrot.lane.b32.xlu0 %v3658, 96
  %v3660 = vpop.permute.xlu0 %3659
  %vm3662 = vcmask 1048324
  %3663 = vst.msk [vmem:[#allocation9] sm:$0xf0] %vm3662, %v3660
  %v3664 = vrot.slane %v3656, 6
  %3666 = vst.msk [vmem:[#allocation9 + $0x8] sm:$0xf0] %vm3643, %v3664
  %3667 = vrot.lane.b32.xlu0 %v3656, 32
  %v3668 = vpop.permute.xlu0 %3667
  %3670 = vst.msk [vmem:[#allocation9 + $0x8] sm:$0xf0] %vm3649, %v3668
  %v3671 = vld [vmem:[#allocation5 + $0x18] sm:$0xff]
  %v3673 = vrot.slane %v3671, 4
  %3674 = vrot.lane.b32.xlu0 %v3673, 64
  %v3675 = vpop.permute.xlu0 %3674
  %3677 = vst.msk [vmem:[#allocation9 + $0x8] sm:$0xf0] %vm3654, %v3675
  %v3678 = vrot.slane %v3671, 6
  %3679 = vrot.lane.b32.xlu0 %v3678, 96
  %v3680 = vpop.permute.xlu0 %3679
  %3682 = vst.msk [vmem:[#allocation9 + $0x8] sm:$0xf0] %vm3662, %v3680
  %3683 = vst.msk [vmem:[#allocation9 + $0x10] sm:$0xf0] %vm3643, %v3671
  %v3684 = vld [vmem:[#allocation9] sm:$0xff]
  %v3685 = vld [vmem:[#allocation9 + $0x8] sm:$0xff]
  %v3686 = vld [vmem:[#allocation9 + $0x10] sm:$0xff]
  %v3687 = vld [vmem:[%s5] sm:$0xff]
  %v3688 = vld [vmem:[%s5 + $0x8] sm:$0xff]
  %v3689 = vld [vmem:[%s5 + $0x10] sm:$0xff]
  %v3690 = vld [vmem:[%s5 + $0x18] sm:$0xff]
  %v3691 = vld [vmem:[%s5 + $0x20] sm:$0xff]
  %v3692 = vld [vmem:[%s5 + $0x28] sm:$0xff]
  %v3693 = vld [vmem:[%s5 + $0x30] sm:$0xff]
  %v3694 = vld [vmem:[%s5 + $0x38] sm:$0xff]
  %v3695 = vld [vmem:[%s5 + $0x40] sm:$0xff]
  %v3696 = vld [vmem:[%s5 + $0x48] sm:$0xff]
  %v3697 = vld [vmem:[%s5 + $0x50] sm:$0xff]
  %v3698 = vld [vmem:[%s5 + $0x58] sm:$0xff]
  %v3699 = vld [vmem:[%s5 + $0x60] sm:$0xff]
  %v3700 = vld [vmem:[%s5 + $0x68] sm:$0xff]
  %v3701 = vld [vmem:[%s5 + $0x70] sm:$0xff]
  %v3702 = vld [vmem:[%s5 + $0x78] sm:$0xff]
  %v3703 = vld [vmem:[%s5 + $0x80] sm:$0xff]
  %v3704 = vld [vmem:[%s5 + $0x88] sm:$0xff]
  %v3705 = vld [vmem:[%s5 + $0x90] sm:$0xff]
  %v3706 = vld [vmem:[%s5 + $0x98] sm:$0xff]
  %v3707 = vld [vmem:[%s5 + $0xa0] sm:$0xff]
  %v3708 = vld [vmem:[%s5 + $0xa8] sm:$0xff]
  %v3709 = vld [vmem:[%s5 + $0xb0] sm:$0xff]
  %v3710 = vld [vmem:[%s5 + $0xb8] sm:$0xff]
  %v3711 = vld [vmem:[%s5 + $0xc0] sm:$0xff]
  %v3712 = vld [vmem:[%s5 + $0xc8] sm:$0xff]
  %v3713 = vld [vmem:[%s5 + $0xd0] sm:$0xff]
  %v3714 = vld [vmem:[%s5 + $0xd8] sm:$0xff]
  %v3715 = vld [vmem:[%s5 + $0xe0] sm:$0xff]
  %v3716 = vld [vmem:[%s5 + $0xe8] sm:$0xff]
  %v3717 = vld [vmem:[%s5 + $0xf0] sm:$0xff]
  %v3718 = vld [vmem:[%s5 + $0xf8] sm:$0xff]
  %v3719 = vld [vmem:[%s5 + $0x100] sm:$0xff]
  %v3720 = vld [vmem:[%s5 + $0x108] sm:$0xff]
  %v3721 = vld [vmem:[%s5 + $0x110] sm:$0xff]
  %v3722 = vld [vmem:[%s5 + $0x118] sm:$0xff]
  %v3723 = vperm.slane %v27, 0
  %v3725 = vsel %vm3519, %v3686, 0
  %3727 = vmatpush.msra.mxu0 %v3702
  %3728 = vmatpush.msra.mxu0 %v3701
  %3729 = vmatpush.msra.mxu0 %v3700
  %3730 = vmatpush.msra.mxu0 %v3699
  %3731 = vmatpush.msra.mxu0 %v3698
  %3732 = vmatpush.msra.mxu0 %v3697
  %3733 = vmatpush.msra.mxu0 %v3696
  %3734 = vmatpush.msra.mxu0 %v3695
  %3735 = vmatpush.msra.mxu0 %v3694
  %3736 = vmatpush.msra.mxu0 %v3693
  %3737 = vmatpush.msra.mxu0 %v3692
  %3738 = vmatpush.msra.mxu0 %v3691
  %3739 = vmatpush.msra.mxu0 %v3690
  %3740 = vmatpush.msra.mxu0 %v3689
  %3741 = vmatpush.msra.mxu0 %v3688
  %3742 = vmatpush.msra.mxu0 %v3687
  %3743 = vmatmul.f32.gmra.mxu0 %v3684
  %v3744 = vpop.f32.mrf.mxu0
  %v3745 = vadd.f32 %v3723, %v3744
  %3746 = vdwg.mxu0
  %3747 = vmatpush.msra.mxu0 %v3718
  %3748 = vmatpush.msra.mxu0 %v3717
  %3749 = vmatpush.msra.mxu0 %v3716
  %3750 = vmatpush.msra.mxu0 %v3715
  %3751 = vmatpush.msra.mxu0 %v3714
  %3752 = vmatpush.msra.mxu0 %v3713
  %3753 = vmatpush.msra.mxu0 %v3712
  %3754 = vmatpush.msra.mxu0 %v3711
  %3755 = vmatpush.msra.mxu0 %v3710
  %3756 = vmatpush.msra.mxu0 %v3709
  %3757 = vmatpush.msra.mxu0 %v3708
  %3758 = vmatpush.msra.mxu0 %v3707
  %3759 = vmatpush.msra.mxu0 %v3706
  %3760 = vmatpush.msra.mxu0 %v3705
  %3761 = vmatpush.msra.mxu0 %v3704
  %3762 = vmatpush.msra.mxu0 %v3703
  %3763 = vmatmul.f32.gmra.mxu0 %v3685
  %v3764 = vpop.f32.mrf.mxu0
  %v3765 = vadd.f32 %v3745, %v3764
  %3766 = vdwg.mxu0
  %3767 = vmatpush.msra.mxu0 0.0
  %3768 = vmatpush.msra.mxu0 0.0
  %3769 = vmatpush.msra.mxu0 0.0
  %3770 = vmatpush.msra.mxu0 0.0
  %3771 = vmatpush.msra.mxu0 0.0
  %3772 = vmatpush.msra.mxu0 0.0
  %3773 = vmatpush.msra.mxu0 0.0
  %3774 = vmatpush.msra.mxu0 0.0
  %3775 = vmatpush.msra.mxu0 0.0
  %3776 = vmatpush.msra.mxu0 0.0
  %3777 = vmatpush.msra.mxu0 0.0
  %3778 = vmatpush.msra.mxu0 0.0
  %3779 = vmatpush.msra.mxu0 %v3722
  %3780 = vmatpush.msra.mxu0 %v3721
  %3781 = vmatpush.msra.mxu0 %v3720
  %3782 = vmatpush.msra.mxu0 %v3719
  %3783 = vmatmul.f32.gmra.mxu0 %v3725
  %v3784 = vpop.f32.mrf.mxu0
  %v3785 = vadd.f32 %v3765, %v3784
  %3786 = vdwg.mxu0
  %vm3787 = vcmask 523264
  %3788 = vst.msk [vmem:[%s7] sm:$0xff] %vm3787, %v3785
  // Predicated region
  $region30: #{_generator_z_forward_impl.1} parent=0 // pred_check
    _
  $region31: #{_generator_z_forward_impl.1} parent=0 // pred_check_branch
    %3790 = sbr.rel (0) target = $region33
  $region32: #{_generator_z_forward_impl.1} parent=0 // pred_region
    _
  $region33: #{_generator_z_forward_impl.1} parent=0 // pred_fallthru
    _
  // Predicated region
  $region34: #{_generator_z_forward_impl.1} parent=0 // pred_check
    _
  $region35: #{_generator_z_forward_impl.1} parent=0 // pred_check_branch
    %3792 = sbr.rel (0) target = $region37
  $region36: #{_generator_z_forward_impl.1} parent=0 // pred_region
    _
  $region37: #{_generator_z_forward_impl.1} parent=0 // pred_fallthru
    _

</llo_original>
